<compile_context>
chip_gen: v6e
topology: v6e:2x2x1
jax: 0.10.0
libtpu: 0.0.40
codegen_flags: <defaults>
</compile_context>

<pallas_src>
import functools
import math

import jax
import jax.numpy as jnp
from jax.experimental import pallas as pl
from jax.experimental.pallas import tpu as pltpu


# ----------------------------------------------------------------------------
# tiling helpers
# ----------------------------------------------------------------------------
_TM, _TN, _TK = 512, 512, 1024            # matmul tiles (<= ~12 MiB double-buffered)
_VMEM_LIMIT = 32 * 1024 * 1024            # safe on v5e/v6e/v7x; >> actual footprint
_ATTN_SCORE_BUDGET = 4 * 1024 * 1024      # per-head score bytes before KV tiling
_KV_BLOCK = 256                           # KV tile for the flash-style path


def _pick_tile(dim, max_tile, aligns):
    """Full extent if it fits; else the largest divisor of `dim` in
    (max_tile/2, max_tile] that is a multiple of one of `aligns` (tried in
    order, 256 preferred for MXU-friendly lane tiles); else max_tile (pad)."""
    if dim <= max_tile:
        return dim
    for align in aligns:
        hi = max_tile - (max_tile % align)
        for cand in range(hi, max(hi // 2, align - 1), -align):
            if dim % cand == 0:
                return cand
    return max_tile


def _pad_to(a, tiles):
    """Zero-pad each axis of `a` up to a multiple of the matching tile (no-op
    when already aligned, so no XLA copy is emitted in that case)."""
    pads = []
    need = False
    for size, t in zip(a.shape, tiles):
        p = (-size) % t
        pads.append((0, p))
        need = need or p > 0
    return jnp.pad(a, pads) if need else a


# ----------------------------------------------------------------------------
# Pallas kernels
# ----------------------------------------------------------------------------
def _linear_kernel(*refs, act, has_res):
    if has_res:
        x_ref, w_ref, b_ref, r_ref, o_ref, acc_ref = refs
    else:
        x_ref, w_ref, b_ref, o_ref, acc_ref = refs
        r_ref = None
    k = pl.program_id(2)

    @pl.when(k == 0)
    def _():
        acc_ref[...] = jnp.zeros_like(acc_ref)

    acc_ref[...] += jnp.dot(x_ref[...].astype(jnp.bfloat16),
                            w_ref[...].astype(jnp.bfloat16),
                            preferred_element_type=jnp.float32)

    @pl.when(k == pl.num_programs(2) - 1)
    def _():
        y = acc_ref[...] + b_ref[...]
        if act == "quick_gelu":
            y = y * jax.nn.sigmoid(1.702 * y)      # elementwise kept in f32 (v5e-safe)
        if has_res:
            y = y + r_ref[...].astype(jnp.float32)
        o_ref[...] = y.astype(o_ref.dtype)


def pallas_linear(x, w, b, act=None, residual=None, out_dtype=jnp.float32):
    """x:(M,K), w:(K,N) bf16, b:(1,N) f32, optional residual:(M,N) -> (M,N).

    Tiled matmul with bf16 MXU operands (x cast in-kernel), f32 accumulation,
    optional fused QuickGELU and fused residual add, selectable output dtype.
    """
    M, K = x.shape
    Kw, N = w.shape
    assert K == Kw and b.shape == (1, N)
    tm = _pick_tile(M, _TM, (8,))
    tn = _pick_tile(N, _TN, (256, 128))
    tk = _pick_tile(K, _TK, (256, 128))

    xp = _pad_to(x, (tm, tk))
    wp = _pad_to(w, (tk, tn))
    bp = _pad_to(b, (1, tn))
    Mp, Kp = xp.shape
    Np = wp.shape[1]
    grid = (Mp // tm, Np // tn, Kp // tk)

    in_specs = [
        pl.BlockSpec((tm, tk), lambda i, j, k: (i, k)),
        pl.BlockSpec((tk, tn), lambda i, j, k: (k, j)),
        pl.BlockSpec((1, tn), lambda i, j, k: (0, j)),
    ]
    args = [xp, wp, bp]
    has_res = residual is not None
    if has_res:
        rp = _pad_to(residual, (tm, tn))
        in_specs.append(pl.BlockSpec((tm, tn), lambda i, j, k: (i, j)))
        args.append(rp)

    out = pl.pallas_call(
        functools.partial(_linear_kernel, act=act, has_res=has_res),
        grid=grid,
        in_specs=in_specs,
        out_specs=pl.BlockSpec((tm, tn), lambda i, j, k: (i, j)),
        out_shape=jax.ShapeDtypeStruct((Mp, Np), out_dtype),
        scratch_shapes=[pltpu.VMEM((tm, tn), jnp.float32)],
        compiler_params=pltpu.CompilerParams(
            dimension_semantics=("parallel", "parallel", "arbitrary"),
            vmem_limit_bytes=_VMEM_LIMIT),
    )(*args)
    if (Mp, Np) != (M, N):
        out = out[:M, :N]
    return out


def _ln_linear_kernel(x_ref, g_ref, bln_ref, w_ref, b_ref, o_ref, *, act, eps):
    x = x_ref[...].astype(jnp.float32)
    mu = jnp.mean(x, axis=-1, keepdims=True)
    xc = x - mu
    var = jnp.mean(xc * xc, axis=-1, keepdims=True)
    xn = xc * jax.lax.rsqrt(var + eps) * g_ref[...] + bln_ref[...]
    y = jnp.dot(xn.astype(jnp.bfloat16), w_ref[...].astype(jnp.bfloat16),
                preferred_element_type=jnp.float32) + b_ref[...]
    if act == "quick_gelu":
        y = y * jax.nn.sigmoid(1.702 * y)
    o_ref[...] = y.astype(o_ref.dtype)


def pallas_ln_linear(x, gamma, beta, w, b, act=None, out_dtype=jnp.float32,
                     eps=1e-5):
    """Fused LayerNorm(x) @ w + b.  K (= feature dim) is a single block, so the
    normalized activation never round-trips through HBM."""
    M, K = x.shape
    Kw, N = w.shape
    assert K == Kw and gamma.shape == (1, K) and beta.shape == (1, K)
    assert b.shape == (1, N)
    tm = _pick_tile(M, _TM, (8,))
    tn = _pick_tile(N, _TN, (256, 128))

    xp = _pad_to(x, (tm, K))
    wp = _pad_to(w, (K, tn))
    bp = _pad_to(b, (1, tn))
    Mp = xp.shape[0]
    Np = wp.shape[1]
    grid = (Mp // tm, Np // tn)

    out = pl.pallas_call(
        functools.partial(_ln_linear_kernel, act=act, eps=eps),
        grid=grid,
        in_specs=[
            pl.BlockSpec((tm, K), lambda i, j: (i, 0)),
            pl.BlockSpec((1, K), lambda i, j: (0, 0)),
            pl.BlockSpec((1, K), lambda i, j: (0, 0)),
            pl.BlockSpec((K, tn), lambda i, j: (0, j)),
            pl.BlockSpec((1, tn), lambda i, j: (0, j)),
        ],
        out_specs=pl.BlockSpec((tm, tn), lambda i, j: (i, j)),
        out_shape=jax.ShapeDtypeStruct((Mp, Np), out_dtype),
        compiler_params=pltpu.CompilerParams(
            dimension_semantics=("parallel", "parallel"),
            vmem_limit_bytes=_VMEM_LIMIT),
    )(xp, gamma, beta, wp, bp)
    if (Mp, Np) != (M, N):
        out = out[:M, :N]
    return out


def _attn_kernel(q_ref, kv_ref, o_ref, m_sc, l_sc, acc_sc, *, H, D, L_real, masked):
    """Per-(batch, kv-block) online-softmax attention.

    q_ref : (1, Lq, 3C) bf16 block (resident across kv steps; only the first C
            columns are used as Q).
    kv_ref: (1, tkv, 3C) bf16 block (columns [C:2C] = K, [2C:3C] = V).
    o_ref : (1, Lq, C)   lane-dense output, written on the last kv step.
    Scratch: m/l (H, Lq, 1) f32, acc (H, Lq, D) f32.
    """
    C = H * D
    kv_i = pl.program_id(1)
    tkv = kv_ref.shape[1]

    @pl.when(kv_i == 0)
    def _():
        m_sc[...] = jnp.full_like(m_sc, -1e30)
        l_sc[...] = jnp.zeros_like(l_sc)
        acc_sc[...] = jnp.zeros_like(acc_sc)

    if masked:
        col = jax.lax.broadcasted_iota(jnp.int32, (1, tkv), 1) + kv_i * tkv
        kv_valid = col < L_real                      # (1, tkv)

    dn = (((1,), (1,)), ((), ()))                    # q @ k^T (contract last dims)
    for h in range(H):
        q_h = q_ref[0, :, h * D:(h + 1) * D]                 # (Lq, D) bf16
        k_h = kv_ref[0, :, C + h * D:C + (h + 1) * D]        # (tkv, D) bf16
        v_h = kv_ref[0, :, 2 * C + h * D:2 * C + (h + 1) * D]

        s = jax.lax.dot_general(q_h, k_h, dn,
                                preferred_element_type=jnp.float32)   # (Lq, tkv)
        if masked:
            s = jnp.where(kv_valid, s, -1e30)

        m_prev = m_sc[h]                                      # (Lq, 1)
        m_new = jnp.maximum(m_prev, jnp.max(s, axis=-1, keepdims=True))
        alpha = jnp.exp(m_prev - m_new)
        p = jnp.exp(s - m_new)
        l_sc[h] = alpha * l_sc[h] + jnp.sum(p, axis=-1, keepdims=True)
        pv = jnp.dot(p.astype(v_h.dtype), v_h,
                     preferred_element_type=jnp.float32)      # (Lq, D)
        acc_sc[h] = alpha * acc_sc[h] + pv
        m_sc[h] = m_new

    @pl.when(kv_i == pl.num_programs(1) - 1)
    def _():
        inv = pl.reciprocal(l_sc[...], approx=True)           # (H, Lq, 1) EUP
        parts = [acc_sc[h] * inv[h] for h in range(H)]        # each (Lq, D)
        o_ref[0] = jnp.concatenate(parts, axis=-1).astype(o_ref.dtype)


def pallas_attention(qkv, num_heads, kv_block=None):
    """qkv: (B, L, 3C) bf16 fused projection -> (B, L, C) bf16.

    Per-head softmax(Q K^T) V; the 1/sqrt(D) scale is pre-folded into the Q
    projection weights.  Uses one KV block when the score tensor is small,
    otherwise a KV-tiled online-softmax pass with masking of padded keys.
    """
    B, L, C3 = qkv.shape
    C = C3 // 3
    H = num_heads
    assert C % H == 0
    D = C // H

    if kv_block is None:
        kv_block = L if H * L * L * 4 <= _ATTN_SCORE_BUDGET else _KV_BLOCK
    if kv_block >= L:
        kv_block = L
    Lp = ((L + kv_block - 1) // kv_block) * kv_block
    masked = Lp != L
    xq = jnp.pad(qkv, ((0, 0), (0, Lp - L), (0, 0))) if masked else qkv
    num_kv = Lp // kv_block

    out = pl.pallas_call(
        functools.partial(_attn_kernel, H=H, D=D, L_real=L, masked=masked),
        grid=(B, num_kv),
        in_specs=[
            pl.BlockSpec((1, Lp, C3), lambda b, j: (b, 0, 0)),
            pl.BlockSpec((1, kv_block, C3), lambda b, j: (b, j, 0)),
        ],
        out_specs=pl.BlockSpec((1, Lp, C), lambda b, j: (b, 0, 0)),
        out_shape=jax.ShapeDtypeStruct((B, Lp, C), jnp.bfloat16),
        scratch_shapes=[
            pltpu.VMEM((H, Lp, 1), jnp.float32),     # running max
            pltpu.VMEM((H, Lp, 1), jnp.float32),     # running denom
            pltpu.VMEM((H, Lp, D), jnp.float32),     # output accumulator
        ],
        compiler_params=pltpu.CompilerParams(
            dimension_semantics=("parallel", "arbitrary"),
            vmem_limit_bytes=_VMEM_LIMIT),
    )(xq, xq)
    if masked:
        out = out[:, :L, :]
    return out


# ----------------------------------------------------------------------------
# Model pieces (glue in plain JAX, compute via the Pallas kernels above)
# ----------------------------------------------------------------------------
def apply_temporal(x, p):
    """MyTempModule applied to the spatial tokens of x:(N,T,L,C); L = 1 + H*W.

    Works entirely in (N, T, HW, C) row layout -> no NCTHW transposes.
    BN(eval) -> 1x1x1 conv C->rC -> depthwise-T conv (k=3, pad=1) -> 1x1x1 conv rC->C,
    with the `t + module(t)` residual fused into the final (zero-init) linear.
    """
    N_, T_, L_, C_ = x.shape
    HW = L_ - 1
    spat = x[:, :, 1:, :]                                  # (N, T, HW, C)
    rows = spat.reshape(-1, C_)

    eps = 1e-5
    # BatchNorm3d, eval semantics (running_mean=0, running_var=1).
    # TODO(synk): PyTorch default training-mode batch statistics not reproduced;
    # output is multiplied by the zero-initialized final conv anyway.
    inv = jax.lax.rsqrt(p["bn_var"] + eps)
    xb = (rows - p["bn_mean"][None, :]) * inv[None, :] * p["bn_g"][None, :] \
        + p["bn_b"][None, :]

    rCp = p["a_w"].shape[1]                                # lane-padded hidden channels
    xa = pallas_linear(xb, p["a_w"], p["a_b"], out_dtype=jnp.bfloat16)
    xa = xa.reshape(N_, T_, HW, rCp)

    # depthwise conv over T, kernel 3, zero padding 1 (tiny; shifted adds, f32 math)
    w = p["dw_w"]                                          # (rCp, 3) f32
    xpad = jnp.pad(xa, ((0, 0), (1, 1), (0, 0), (0, 0)))
    y = (xpad[:, 0:T_] * w[:, 0][None, None, None, :]
         + xpad[:, 1:T_ + 1] * w[:, 1][None, None, None, :]
         + xpad[:, 2:T_ + 2] * w[:, 2][None, None, None, :]
         + p["dw_b"][None, None, None, :])

    # final 1x1x1 conv rC -> C (zero-init, as in PyTorch) with fused residual add
    yb = pallas_linear(y.reshape(-1, rCp), p["b_w"], p["b_b"],
                       residual=rows, out_dtype=jnp.float32)
    new_spat = yb.reshape(N_, T_, HW, C_)
    return jnp.concatenate([x[:, :, 0:1, :], new_spat], axis=2)


def multihead_attention(x, p, num_heads):
    """x: (B, L, C) f32 residual stream. Returns x + out_proj(attn(LN(x)))."""
    B, L, C = x.shape
    xf = x.reshape(B * L, C)
    # fused LN1 + QKV projection (Q weights carry the 1/sqrt(D) scale), bf16 out
    qkv = pallas_ln_linear(xf, p["ln1_g"], p["ln1_b"], p["qkv_w"], p["qkv_b"],
                           out_dtype=jnp.bfloat16)          # (B*L, 3C)
    attn = pallas_attention(qkv.reshape(B, L, 3 * C), num_heads)   # (B, L, C) bf16
    out = pallas_linear(attn.reshape(B * L, C), p["o_w"], p["o_b"],
                        residual=xf, out_dtype=jnp.float32)        # residual fused
    return out.reshape(B, L, C)


def transformer_layer(x, p, num_heads, t_before_attn, t_before_ffn):
    """x: (N, T, L, C) f32."""
    N_, T_, L_, C_ = x.shape
    if t_before_attn:
        x = apply_temporal(x, p["tmod1"])
    x = multihead_attention(x.reshape(N_ * T_, L_, C_), p, num_heads)
    x = x.reshape(N_, T_, L_, C_)
    if t_before_ffn:
        x = apply_temporal(x, p["tmod2"])
    xf = x.reshape(-1, C_)
    # fused LN2 + fc1 (+ QuickGELU), bf16 hidden; fc2 with fused residual add
    h = pallas_ln_linear(xf, p["ln2_g"], p["ln2_b"], p["fc1_w"], p["fc1_b"],
                         act="quick_gelu", out_dtype=jnp.bfloat16)
    out = pallas_linear(h, p["fc2_w"], p["fc2_b"], residual=xf,
                        out_dtype=jnp.float32)
    return out.reshape(N_, T_, L_, C_)


def vit_forward(x, params, cfg):
    """x: (N, 3, T, H, W) f32. Returns list of (N, T, L, C) per-layer features."""
    N_, Cin, T_, Hi, Wi = x.shape
    ph, pw = cfg["patch_size"]
    C = cfg["feature_dim"]
    gh, gw = Hi // ph, Wi // pw
    L = gh * gw + 1

    # patch embed: (N,C,T,H,W) -> patches (N*T*gh*gw, Cin*ph*pw) -> linear
    x2d = x.transpose(0, 2, 1, 3, 4).reshape(N_ * T_, Cin, Hi, Wi)
    patches = (x2d.reshape(N_ * T_, Cin, gh, ph, gw, pw)
               .transpose(0, 2, 4, 1, 3, 5)
               .reshape(N_ * T_ * gh * gw, Cin * ph * pw))
    emb = pallas_linear(patches, params["conv1_w"], params["conv1_b0"])  # bias-free conv
    emb = emb.reshape(N_ * T_, gh * gw, C)

    cls = jnp.broadcast_to(params["cls_token"].reshape(1, 1, C), (N_ * T_, 1, C))
    tok = jnp.concatenate([cls, emb], axis=1)              # (N*T, L, C)
    tok = tok + params["pos_embed"][None]
    # ln_pre = Identity (ln_pre=False in the reference config)

    x4 = tok.reshape(N_, T_, L, C)
    feats = []
    for i, bp in enumerate(params["blocks"]):
        x4 = transformer_layer(
            x4, bp, cfg["num_heads"],
            i in cfg["layers_temporal_attn"], i in cfg["layers_temporal_ffn"])
        feats.append(x4)
    return feats


# ----------------------------------------------------------------------------
# Deterministic parameter init (shapes follow the PyTorch __init__)
# Weights are pre-cast to bf16 once here (no per-step cast passes); biases,
# LayerNorm and BatchNorm parameters stay f32.
# ----------------------------------------------------------------------------
def init_params(key, cfg):
    C = cfg["feature_dim"]
    Cin = cfg["in_channels"]
    ph, pw = cfg["patch_size"]
    Hi, Wi = cfg["input_size"]
    mlp_dim = round(cfg["mlp_factor"] * C)
    num_patches = (Hi // ph) * (Wi // pw) + 1
    H = cfg["num_heads"]
    scale = 1.0 / math.sqrt(C // H)          # folded into Q projection weights

    keys = list(jax.random.split(key, 512))
    kit = iter(keys)
    nk = lambda: next(kit)

    def xavier(shape):  # (fan_in, fan_out) layout
        fan_in, fan_out = shape
        limit = math.sqrt(6.0 / (fan_in + fan_out))
        return jax.random.uniform(nk(), shape, jnp.float32, -limit, limit)

    def tmod_params():
        rC = int(C // cfg["dw_reduction"])
        rCp = ((rC + 127) // 128) * 128      # lane-pad hidden channels (extra = zeros)

        def padc(a, axis):
            pad = [(0, 0)] * a.ndim
            pad[axis] = (0, rCp - rC)
            return jnp.pad(a, pad)

        a_w = jax.random.normal(nk(), (C, rC), jnp.float32) * 0.02
        dw_w = jax.random.normal(nk(), (rC, 3), jnp.float32) * 0.02
        return dict(
            bn_g=jnp.ones((C,), jnp.float32),
            bn_b=jnp.zeros((C,), jnp.float32),
            bn_mean=jnp.zeros((C,), jnp.float32),
            bn_var=jnp.ones((C,), jnp.float32),
            a_w=padc(a_w, 1).astype(jnp.bfloat16),
            a_b=jnp.zeros((1, rCp), jnp.float32),
            dw_w=padc(dw_w, 0), dw_b=jnp.zeros((rCp,), jnp.float32),
            b_w=jnp.zeros((rCp, C), jnp.bfloat16),   # zero-init (as in PyTorch)
            b_b=jnp.zeros((1, C), jnp.float32),
        )

    params = dict(
        conv1_w=(jax.random.normal(nk(), (Cin * ph * pw, C), jnp.float32) * 0.02
                 ).astype(jnp.bfloat16),
        conv1_b0=jnp.zeros((1, C), jnp.float32),     # conv1 has no bias
        cls_token=jax.random.normal(nk(), (C,), jnp.float32) * 0.02,
        pos_embed=jax.random.normal(nk(), (num_patches, C), jnp.float32) * 0.02,
        blocks=[],
    )

    for i in range(cfg["num_layers"]):
        q_w = xavier((C, C)) * scale                 # 1/sqrt(D) pre-folded (bias is 0)
        k_w = xavier((C, C))
        v_w = xavier((C, C))
        b = dict(
            ln1_g=jnp.ones((1, C), jnp.float32), ln1_b=jnp.zeros((1, C), jnp.float32),
            qkv_w=jnp.concatenate([q_w, k_w, v_w], axis=1).astype(jnp.bfloat16),
            qkv_b=jnp.zeros((1, 3 * C), jnp.float32),
            o_w=xavier((C, C)).astype(jnp.bfloat16),
            o_b=jnp.zeros((1, C), jnp.float32),
            ln2_g=jnp.ones((1, C), jnp.float32), ln2_b=jnp.zeros((1, C), jnp.float32),
            fc1_w=xavier((C, mlp_dim)).astype(jnp.bfloat16),
            fc1_b=jax.random.normal(nk(), (1, mlp_dim), jnp.float32) * 1e-6,
            fc2_w=xavier((mlp_dim, C)).astype(jnp.bfloat16),
            fc2_b=jax.random.normal(nk(), (1, C), jnp.float32) * 1e-6,
        )
        if i in cfg["layers_temporal_attn"]:
            b["tmod1"] = tmod_params()
        if i in cfg["layers_temporal_ffn"]:
            b["tmod2"] = tmod_params()
        params["blocks"].append(b)
    return params


# ----------------------------------------------------------------------------
# reference used only by the flash-path self test in __main__
# ----------------------------------------------------------------------------
def _attention_reference(qkv, num_heads):
    B, L, C3 = qkv.shape
    C = C3 // 3
    D = C // num_heads
    q, k, v = jnp.split(qkv.astype(jnp.float32), 3, axis=-1)
    q = q.reshape(B, L, num_heads, D)
    k = k.reshape(B, L, num_heads, D)
    v = v.reshape(B, L, num_heads, D)
    s = jnp.einsum("bqhd,bkhd->bhqk", q, k)
    p = jax.nn.softmax(s, axis=-1)
    o = jnp.einsum("bhqk,bkhd->bqhd", p, v)
    return o.reshape(B, L, C)


# ----------------------------------------------------------------------------
if __name__ == "__main__":
    cfg = dict(
        feature_dim=64,
        input_size=(16, 16),
        patch_size=(8, 8),
        num_heads=4,
        num_layers=2,
        mlp_factor=4.0,
        in_channels=3,
        dw_reduction=1.5,
        layers_temporal_attn=(1,),
        layers_temporal_ffn=(1,),
    )
    key = jax.random.PRNGKey(0)
    pkey, xkey = jax.random.split(key)
    params = init_params(pkey, cfg)

    N, T = 2, 2
    x = jax.random.normal(xkey, (N, cfg["in_channels"], T,
                                 cfg["input_size"][0], cfg["input_size"][1]),
                          jnp.float32)

    fwd = jax.jit(lambda xx, pp: vit_forward(xx, pp, cfg))
    feats = fwd(x, params)
    feats = jax.block_until_ready(feats)

    L = (cfg["input_size"][0] // cfg["patch_size"][0]) * \
        (cfg["input_size"][1] // cfg["patch_size"][1]) + 1
    assert len(feats) == cfg["num_layers"]
    for f in feats:
        assert f.shape == (N, T, L, cfg["feature_dim"])
        assert bool(jnp.all(jnp.isfinite(f)))

    # --- self-test of the KV-tiled (flash-style) attention path ----------------
    Bc, Hc, Dc, Lc = 2, 4, 16, 200                  # L=200 -> padded to 256, masked
    Cc = Hc * Dc
    qkv_c = (jax.random.normal(jax.random.PRNGKey(1), (Bc, Lc, 3 * Cc),
                               jnp.float32) * 0.5).astype(jnp.bfloat16)
    out_flash = pallas_attention(qkv_c, Hc, kv_block=128)
    out_flash = jax.block_until_ready(out_flash)
    ref = _attention_reference(qkv_c, Hc)
    assert out_flash.shape == (Bc, Lc, Cc)
    err = float(jnp.max(jnp.abs(out_flash.astype(jnp.float32) - ref)))
    assert math.isfinite(err) and err < 5e-2, f"flash attention mismatch: {err}"

    print("KERNEL_OK")
</pallas_src>

<mosaic_0001>
module attributes {stable_mosaic.version = 11 : i64} {
  func.func @_linear_kernel(%arg0: i32, %arg1: i32, %arg2: i32, %arg3: memref<16x192xf32, #tpu.memory_space<vmem>>, %arg4: memref<192x64xbf16, #tpu.memory_space<vmem>>, %arg5: memref<1x64xf32, #tpu.memory_space<vmem>>, %arg6: memref<16x64xf32, #tpu.memory_space<vmem>>, %arg7: memref<16x64xf32, #tpu.memory_space<vmem>>) attributes {dimension_semantics = [#tpu.dimension_semantics<parallel>, #tpu.dimension_semantics<parallel>, #tpu.dimension_semantics<arbitrary>], iteration_bounds = array<i64: 1, 1, 1>, scalar_prefetch = 0 : i64, scratch_operands = 1 : i64, tpu.core_type = #tpu.core_type<tc>, window_params = [{transform_indices = @transform_0, window_bounds = array<i64: 16, 192>}, {transform_indices = @transform_1, window_bounds = array<i64: 192, 64>}, {transform_indices = @transform_2, window_bounds = array<i64: 1, 64>}, {transform_indices = @transform_3, window_bounds = array<i64: 16, 64>}]} {
    %c0_i32 = arith.constant 0 : i32
    %0 = arith.cmpi eq, %arg2, %c0_i32 : i32
    %1 = arith.extui %0 : i1 to i32
    %c0_i32_0 = arith.constant 0 : i32
    %2 = arith.cmpi ne, %1, %c0_i32_0 : i32
    scf.if %2 {
      %cst_10 = arith.constant 0.000000e+00 : f32
      %13 = vector.broadcast %cst_10 : f32 to vector<16x64xf32>
      %c0_11 = arith.constant 0 : index
      %c0_12 = arith.constant 0 : index
      %14 = vector.load %arg7[%c0_11, %c0_12] : memref<16x64xf32, #tpu.memory_space<vmem>>, vector<16x64xf32>
      tpu.vector_store %arg7[%c0_11, %c0_12], %13 {strides = array<i32>} : memref<16x64xf32, #tpu.memory_space<vmem>>, vector<16x64xf32>,
    } else {
    }
    %c0 = arith.constant 0 : index
    %c0_1 = arith.constant 0 : index
    %3 = vector.load %arg7[%c0, %c0_1] : memref<16x64xf32, #tpu.memory_space<vmem>>, vector<16x64xf32>
    %c0_2 = arith.constant 0 : index
    %c0_3 = arith.constant 0 : index
    %4 = vector.load %arg3[%c0_2, %c0_3] : memref<16x192xf32, #tpu.memory_space<vmem>>, vector<16x192xf32>
    %5 = arith.truncf %4 : vector<16x192xf32> to vector<16x192xbf16>
    %c0_4 = arith.constant 0 : index
    %c0_5 = arith.constant 0 : index
    %6 = vector.load %arg4[%c0_4, %c0_5] : memref<192x64xbf16, #tpu.memory_space<vmem>>, vector<192x64xbf16>
    %cst = arith.constant dense<0.000000e+00> : vector<16x64xf32>
    %7 = tpu.matmul %5, %6, %cst {dimension_numbers = #tpu.dot_dimension_numbers<[1], [0], [0], [1], [0, 0, 1, 1], [], []>} : vector<16x192xbf16>, vector<192x64xbf16>, vector<16x64xf32> -> vector<16x64xf32>
    %8 = arith.addf %3, %7 : vector<16x64xf32>
    %c0_6 = arith.constant 0 : index
    %c0_7 = arith.constant 0 : index
    %9 = vector.load %arg7[%c0_6, %c0_7] : memref<16x64xf32, #tpu.memory_space<vmem>>, vector<16x64xf32>
    tpu.vector_store %arg7[%c0_6, %c0_7], %8 {strides = array<i32>} : memref<16x64xf32, #tpu.memory_space<vmem>>, vector<16x64xf32>,
    %c0_i32_8 = arith.constant 0 : i32
    %10 = arith.cmpi eq, %arg2, %c0_i32_8 : i32
    %11 = arith.extui %10 : i1 to i32
    %c0_i32_9 = arith.constant 0 : i32
    %12 = arith.cmpi ne, %11, %c0_i32_9 : i32
    scf.if %12 {
      %c0_10 = arith.constant 0 : index
      %c0_11 = arith.constant 0 : index
      %13 = vector.load %arg7[%c0_10, %c0_11] : memref<16x64xf32, #tpu.memory_space<vmem>>, vector<16x64xf32>
      %c0_12 = arith.constant 0 : index
      %c0_13 = arith.constant 0 : index
      %14 = vector.load %arg5[%c0_12, %c0_13] : memref<1x64xf32, #tpu.memory_space<vmem>>, vector<1x64xf32>
      %15 = vector.broadcast %14 : vector<1x64xf32> to vector<16x64xf32>
      %16 = arith.addf %13, %15 : vector<16x64xf32>
      %c0_14 = arith.constant 0 : index
      %c0_15 = arith.constant 0 : index
      %17 = vector.load %arg6[%c0_14, %c0_15] : memref<16x64xf32, #tpu.memory_space<vmem>>, vector<16x64xf32>
      tpu.vector_store %arg6[%c0_14, %c0_15], %16 {strides = array<i32>} : memref<16x64xf32, #tpu.memory_space<vmem>>, vector<16x64xf32>,
    } else {
    }
    return
  }
  func.func @transform_0(%arg0: i32, %arg1: i32, %arg2: i32) -> (i32, i32) {
    %c0_i32 = arith.constant 0 : i32
    return %arg0, %arg2 : i32, i32
  }
  func.func @transform_1(%arg0: i32, %arg1: i32, %arg2: i32) -> (i32, i32) {
    %c0_i32 = arith.constant 0 : i32
    return %arg2, %arg1 : i32, i32
  }
  func.func @transform_2(%arg0: i32, %arg1: i32, %arg2: i32) -> (i32, i32) {
    %c0_i32 = arith.constant 0 : i32
    %c0_i32_0 = arith.constant 0 : i32
    return %c0_i32, %arg1 : i32, i32
  }
  func.func @transform_3(%arg0: i32, %arg1: i32, %arg2: i32) -> (i32, i32) {
    %c0_i32 = arith.constant 0 : i32
    return %arg0, %arg1 : i32, i32
  }
}

module attributes {stable_mosaic.version = 11 : i64} {
  func.func @_ln_linear_kernel(%arg0: i32, %arg1: i32, %arg2: memref<20x64xf32, #tpu.memory_space<vmem>>, %arg3: memref<1x64xf32, #tpu.memory_space<vmem>>, %arg4: memref<1x64xf32, #tpu.memory_space<vmem>>, %arg5: memref<64x192xbf16, #tpu.memory_space<vmem>>, %arg6: memref<1x192xf32, #tpu.memory_space<vmem>>, %arg7: memref<20x192xbf16, #tpu.memory_space<vmem>>) attributes {dimension_semantics = [#tpu.dimension_semantics<parallel>, #tpu.dimension_semantics<parallel>], iteration_bounds = array<i64: 1, 1>, scalar_prefetch = 0 : i64, scratch_operands = 0 : i64, tpu.core_type = #tpu.core_type<tc>, window_params = [{transform_indices = @transform_0, window_bounds = array<i64: 20, 64>}, {pipeline_mode = #tpu.pipeline_mode<synchronous>, transform_indices = @transform_1, window_bounds = array<i64: 1, 64>}, {pipeline_mode = #tpu.pipeline_mode<synchronous>, transform_indices = @transform_2, window_bounds = array<i64: 1, 64>}, {transform_indices = @transform_3, window_bounds = array<i64: 64, 192>}, {transform_indices = @transform_4, window_bounds = array<i64: 1, 192>}, {transform_indices = @transform_5, window_bounds = array<i64: 20, 192>}]} {
    %c0 = arith.constant 0 : index
    %c0_0 = arith.constant 0 : index
    %0 = vector.load %arg2[%c0, %c0_0] : memref<20x64xf32, #tpu.memory_space<vmem>>, vector<20x64xf32>
    %cst = arith.constant dense<0.000000e+00> : vector<20xf32>
    %1 = vector.multi_reduction <add>, %0, %cst [1] : vector<20x64xf32> to vector<20xf32>
    %2 = vector.shape_cast %1 : vector<20xf32> to vector<20x1xf32>
    %cst_1 = arith.constant 6.400000e+01 : f32
    %3 = vector.broadcast %cst_1 : f32 to vector<20x1xf32>
    %4 = arith.divf %2, %3 : vector<20x1xf32>
    %5 = vector.broadcast %4 : vector<20x1xf32> to vector<20x64xf32>
    %6 = arith.subf %0, %5 : vector<20x64xf32>
    %7 = arith.mulf %6, %6 : vector<20x64xf32>
    %cst_2 = arith.constant dense<0.000000e+00> : vector<20xf32>
    %8 = vector.multi_reduction <add>, %7, %cst_2 [1] : vector<20x64xf32> to vector<20xf32>
    %9 = vector.shape_cast %8 : vector<20xf32> to vector<20x1xf32>
    %cst_3 = arith.constant 6.400000e+01 : f32
    %10 = vector.broadcast %cst_3 : f32 to vector<20x1xf32>
    %11 = arith.divf %9, %10 : vector<20x1xf32>
    %cst_4 = arith.constant 9.99999974E-6 : f32
    %12 = vector.broadcast %cst_4 : f32 to vector<20x1xf32>
    %13 = arith.addf %11, %12 : vector<20x1xf32>
    %14 = math.rsqrt %13 : vector<20x1xf32>
    %15 = vector.broadcast %14 : vector<20x1xf32> to vector<20x64xf32>
    %16 = arith.mulf %6, %15 : vector<20x64xf32>
    %c0_5 = arith.constant 0 : index
    %c0_6 = arith.constant 0 : index
    %17 = vector.load %arg3[%c0_5, %c0_6] : memref<1x64xf32, #tpu.memory_space<vmem>>, vector<1x64xf32>
    %18 = vector.broadcast %17 : vector<1x64xf32> to vector<20x64xf32>
    %19 = arith.mulf %16, %18 : vector<20x64xf32>
    %c0_7 = arith.constant 0 : index
    %c0_8 = arith.constant 0 : index
    %20 = vector.load %arg4[%c0_7, %c0_8] : memref<1x64xf32, #tpu.memory_space<vmem>>, vector<1x64xf32>
    %21 = vector.broadcast %20 : vector<1x64xf32> to vector<20x64xf32>
    %22 = arith.addf %19, %21 : vector<20x64xf32>
    %23 = arith.truncf %22 : vector<20x64xf32> to vector<20x64xbf16>
    %c0_9 = arith.constant 0 : index
    %c0_10 = arith.constant 0 : index
    %24 = vector.load %arg5[%c0_9, %c0_10] : memref<64x192xbf16, #tpu.memory_space<vmem>>, vector<64x192xbf16>
    %cst_11 = arith.constant dense<0.000000e+00> : vector<20x192xf32>
    %25 = tpu.matmul %23, %24, %cst_11 {dimension_numbers = #tpu.dot_dimension_numbers<[1], [0], [0], [1], [0, 0, 1, 1], [], []>} : vector<20x64xbf16>, vector<64x192xbf16>, vector<20x192xf32> -> vector<20x192xf32>
    %c0_12 = arith.constant 0 : index
    %c0_13 = arith.constant 0 : index
    %26 = vector.load %arg6[%c0_12, %c0_13] : memref<1x192xf32, #tpu.memory_space<vmem>>, vector<1x192xf32>
    %27 = vector.broadcast %26 : vector<1x192xf32> to vector<20x192xf32>
    %28 = arith.addf %25, %27 : vector<20x192xf32>
    %29 = arith.truncf %28 : vector<20x192xf32> to vector<20x192xbf16>
    %c0_14 = arith.constant 0 : index
    %c0_15 = arith.constant 0 : index
    %30 = vector.load %arg7[%c0_14, %c0_15] : memref<20x192xbf16, #tpu.memory_space<vmem>>, vector<20x192xbf16>
    tpu.vector_store %arg7[%c0_14, %c0_15], %29 {strides = array<i32>} : memref<20x192xbf16, #tpu.memory_space<vmem>>, vector<20x192xbf16>,
    return
  }
  func.func @transform_0(%arg0: i32, %arg1: i32) -> (i32, i32) {
    %c0_i32 = arith.constant 0 : i32
    %c0_i32_0 = arith.constant 0 : i32
    return %arg0, %c0_i32 : i32, i32
  }
  func.func @transform_1(%arg0: i32, %arg1: i32) -> (i32, i32) {
    %c0_i32 = arith.constant 0 : i32
    %c0_i32_0 = arith.constant 0 : i32
    %c0_i32_1 = arith.constant 0 : i32
    return %c0_i32, %c0_i32_0 : i32, i32
  }
  func.func @transform_2(%arg0: i32, %arg1: i32) -> (i32, i32) {
    %c0_i32 = arith.constant 0 : i32
    %c0_i32_0 = arith.constant 0 : i32
    %c0_i32_1 = arith.constant 0 : i32
    return %c0_i32, %c0_i32_0 : i32, i32
  }
  func.func @transform_3(%arg0: i32, %arg1: i32) -> (i32, i32) {
    %c0_i32 = arith.constant 0 : i32
    %c0_i32_0 = arith.constant 0 : i32
    return %c0_i32, %arg1 : i32, i32
  }
  func.func @transform_4(%arg0: i32, %arg1: i32) -> (i32, i32) {
    %c0_i32 = arith.constant 0 : i32
    %c0_i32_0 = arith.constant 0 : i32
    return %c0_i32, %arg1 : i32, i32
  }
  func.func @transform_5(%arg0: i32, %arg1: i32) -> (i32, i32) {
    %c0_i32 = arith.constant 0 : i32
    return %arg0, %arg1 : i32, i32
  }
}

module attributes {stable_mosaic.version = 11 : i64} {
  func.func @_attn_kernel(%arg0: i32, %arg1: i32, %arg2: memref<1x5x192xbf16, #tpu.memory_space<vmem>>, %arg3: memref<1x5x192xbf16, #tpu.memory_space<vmem>>, %arg4: memref<1x5x64xbf16, #tpu.memory_space<vmem>>, %arg5: memref<4x5x1xf32, #tpu.memory_space<vmem>>, %arg6: memref<4x5x1xf32, #tpu.memory_space<vmem>>, %arg7: memref<4x5x16xf32, #tpu.memory_space<vmem>>) attributes {dimension_semantics = [#tpu.dimension_semantics<parallel>, #tpu.dimension_semantics<arbitrary>], iteration_bounds = array<i64: 4, 1>, scalar_prefetch = 0 : i64, scratch_operands = 3 : i64, tpu.core_type = #tpu.core_type<tc>, window_params = [{transform_indices = @transform_0, window_bounds = array<i64: 1, 5, 192>}, {transform_indices = @transform_1, window_bounds = array<i64: 1, 5, 192>}, {transform_indices = @transform_2, window_bounds = array<i64: 1, 5, 64>}]} {
    %c0_i32 = arith.constant 0 : i32
    %0 = arith.cmpi eq, %arg1, %c0_i32 : i32
    %1 = arith.extui %0 : i1 to i32
    %c0_i32_0 = arith.constant 0 : i32
    %2 = arith.cmpi ne, %1, %c0_i32_0 : i32
    scf.if %2 {
      %cst_111 = arith.constant -1.000000e+30 : f32
      %162 = vector.broadcast %cst_111 : f32 to vector<4x5x1xf32>
      %c0_112 = arith.constant 0 : index
      %c0_113 = arith.constant 0 : index
      %c0_114 = arith.constant 0 : index
      %163 = vector.load %arg5[%c0_112, %c0_113, %c0_114] : memref<4x5x1xf32, #tpu.memory_space<vmem>>, vector<4x5x1xf32>
      tpu.vector_store %arg5[%c0_112, %c0_113, %c0_114], %162 {strides = array<i32>} : memref<4x5x1xf32, #tpu.memory_space<vmem>>, vector<4x5x1xf32>,
      %cst_115 = arith.constant 0.000000e+00 : f32
      %164 = vector.broadcast %cst_115 : f32 to vector<4x5x1xf32>
      %c0_116 = arith.constant 0 : index
      %c0_117 = arith.constant 0 : index
      %c0_118 = arith.constant 0 : index
      %165 = vector.load %arg6[%c0_116, %c0_117, %c0_118] : memref<4x5x1xf32, #tpu.memory_space<vmem>>, vector<4x5x1xf32>
      tpu.vector_store %arg6[%c0_116, %c0_117, %c0_118], %164 {strides = array<i32>} : memref<4x5x1xf32, #tpu.memory_space<vmem>>, vector<4x5x1xf32>,
      %cst_119 = arith.constant 0.000000e+00 : f32
      %166 = vector.broadcast %cst_119 : f32 to vector<4x5x16xf32>
      %c0_120 = arith.constant 0 : index
      %c0_121 = arith.constant 0 : index
      %c0_122 = arith.constant 0 : index
      %167 = vector.load %arg7[%c0_120, %c0_121, %c0_122] : memref<4x5x16xf32, #tpu.memory_space<vmem>>, vector<4x5x16xf32>
      tpu.vector_store %arg7[%c0_120, %c0_121, %c0_122], %166 {strides = array<i32>} : memref<4x5x16xf32, #tpu.memory_space<vmem>>, vector<4x5x16xf32>,
    } else {
    }
    %c0 = arith.constant 0 : index
    %c0_1 = arith.constant 0 : index
    %c0_2 = arith.constant 0 : index
    %3 = vector.load %arg2[%c0, %c0_1, %c0_2] : memref<1x5x192xbf16, #tpu.memory_space<vmem>>, vector<1x5x16xbf16>
    %4 = vector.shape_cast %3 : vector<1x5x16xbf16> to vector<5x16xbf16>
    %c0_3 = arith.constant 0 : index
    %c0_4 = arith.constant 0 : index
    %c64 = arith.constant 64 : index
    %5 = vector.load %arg3[%c0_3, %c0_4, %c64] : memref<1x5x192xbf16, #tpu.memory_space<vmem>>, vector<1x5x16xbf16>
    %6 = vector.shape_cast %5 : vector<1x5x16xbf16> to vector<5x16xbf16>
    %c0_5 = arith.constant 0 : index
    %c0_6 = arith.constant 0 : index
    %c128 = arith.constant 128 : index
    %7 = vector.load %arg3[%c0_5, %c0_6, %c128] : memref<1x5x192xbf16, #tpu.memory_space<vmem>>, vector<1x5x16xbf16>
    %8 = vector.shape_cast %7 : vector<1x5x16xbf16> to vector<5x16xbf16>
    %cst = arith.constant dense<0.000000e+00> : vector<5x5xf32>
    %9 = tpu.matmul %4, %6, %cst {dimension_numbers = #tpu.dot_dimension_numbers<[1], [1], [0], [0], [0, 0, 1, 0], [], []>} : vector<5x16xbf16>, vector<5x16xbf16>, vector<5x5xf32> -> vector<5x5xf32>
    %c0_7 = arith.constant 0 : index
    %c0_8 = arith.constant 0 : index
    %c0_9 = arith.constant 0 : index
    %10 = vector.load %arg5[%c0_7, %c0_8, %c0_9] : memref<4x5x1xf32, #tpu.memory_space<vmem>>, vector<1x5x1xf32>
    %11 = vector.shape_cast %10 : vector<1x5x1xf32> to vector<5x1xf32>
    %cst_10 = arith.constant dense<0xFF800000> : vector<5xf32>
    %12 = vector.multi_reduction <maximumf>, %9, %cst_10 [1] : vector<5x5xf32> to vector<5xf32>
    %13 = vector.shape_cast %12 : vector<5xf32> to vector<5x1xf32>
    %14 = arith.maximumf %11, %13 : vector<5x1xf32>
    %15 = arith.subf %11, %14 : vector<5x1xf32>
    %16 = math.exp %15 : vector<5x1xf32>
    %17 = vector.broadcast %14 : vector<5x1xf32> to vector<5x5xf32>
    %18 = arith.subf %9, %17 : vector<5x5xf32>
    %19 = math.exp %18 : vector<5x5xf32>
    %c0_11 = arith.constant 0 : index
    %c0_12 = arith.constant 0 : index
    %c0_13 = arith.constant 0 : index
    %20 = vector.load %arg6[%c0_11, %c0_12, %c0_13] : memref<4x5x1xf32, #tpu.memory_space<vmem>>, vector<1x5x1xf32>
    %21 = vector.shape_cast %20 : vector<1x5x1xf32> to vector<5x1xf32>
    %22 = arith.mulf %16, %21 : vector<5x1xf32>
    %cst_14 = arith.constant dense<0.000000e+00> : vector<5xf32>
    %23 = vector.multi_reduction <add>, %19, %cst_14 [1] : vector<5x5xf32> to vector<5xf32>
    %24 = vector.shape_cast %23 : vector<5xf32> to vector<5x1xf32>
    %25 = arith.addf %22, %24 : vector<5x1xf32>
    %c0_15 = arith.constant 0 : index
    %c0_16 = arith.constant 0 : index
    %c0_17 = arith.constant 0 : index
    %26 = vector.load %arg6[%c0_15, %c0_16, %c0_17] : memref<4x5x1xf32, #tpu.memory_space<vmem>>, vector<1x5x1xf32>
    %27 = vector.shape_cast %26 : vector<1x5x1xf32> to vector<5x1xf32>
    %28 = vector.shape_cast %25 : vector<5x1xf32> to vector<1x5x1xf32>
    tpu.vector_store %arg6[%c0_15, %c0_16, %c0_17], %28 {strides = array<i32>} : memref<4x5x1xf32, #tpu.memory_space<vmem>>, vector<1x5x1xf32>,
    %29 = arith.truncf %19 : vector<5x5xf32> to vector<5x5xbf16>
    %cst_18 = arith.constant dense<0.000000e+00> : vector<5x16xf32>
    %30 = tpu.matmul %29, %8, %cst_18 {dimension_numbers = #tpu.dot_dimension_numbers<[1], [0], [0], [1], [0, 0, 1, 1], [], []>} : vector<5x5xbf16>, vector<5x16xbf16>, vector<5x16xf32> -> vector<5x16xf32>
    %c0_19 = arith.constant 0 : index
    %c0_20 = arith.constant 0 : index
    %c0_21 = arith.constant 0 : index
    %31 = vector.load %arg7[%c0_19, %c0_20, %c0_21] : memref<4x5x16xf32, #tpu.memory_space<vmem>>, vector<1x5x16xf32>
    %32 = vector.shape_cast %31 : vector<1x5x16xf32> to vector<5x16xf32>
    %33 = vector.broadcast %16 : vector<5x1xf32> to vector<5x16xf32>
    %34 = arith.mulf %33, %32 : vector<5x16xf32>
    %35 = arith.addf %34, %30 : vector<5x16xf32>
    %c0_22 = arith.constant 0 : index
    %c0_23 = arith.constant 0 : index
    %c0_24 = arith.constant 0 : index
    %36 = vector.load %arg7[%c0_22, %c0_23, %c0_24] : memref<4x5x16xf32, #tpu.memory_space<vmem>>, vector<1x5x16xf32>
    %37 = vector.shape_cast %36 : vector<1x5x16xf32> to vector<5x16xf32>
    %38 = vector.shape_cast %35 : vector<5x16xf32> to vector<1x5x16xf32>
    tpu.vector_store %arg7[%c0_22, %c0_23, %c0_24], %38 {strides = array<i32>} : memref<4x5x16xf32, #tpu.memory_space<vmem>>, vector<1x5x16xf32>,
    %c0_25 = arith.constant 0 : index
    %c0_26 = arith.constant 0 : index
    %c0_27 = arith.constant 0 : index
    %39 = vector.load %arg5[%c0_25, %c0_26, %c0_27] : memref<4x5x1xf32, #tpu.memory_space<vmem>>, vector<1x5x1xf32>
    %40 = vector.shape_cast %39 : vector<1x5x1xf32> to vector<5x1xf32>
    %41 = vector.shape_cast %14 : vector<5x1xf32> to vector<1x5x1xf32>
    tpu.vector_store %arg5[%c0_25, %c0_26, %c0_27], %41 {strides = array<i32>} : memref<4x5x1xf32, #tpu.memory_space<vmem>>, vector<1x5x1xf32>,
    %c0_28 = arith.constant 0 : index
    %c0_29 = arith.constant 0 : index
    %c16 = arith.constant 16 : index
    %42 = vector.load %arg2[%c0_28, %c0_29, %c16] : memref<1x5x192xbf16, #tpu.memory_space<vmem>>, vector<1x5x16xbf16>
    %43 = vector.shape_cast %42 : vector<1x5x16xbf16> to vector<5x16xbf16>
    %c0_30 = arith.constant 0 : index
    %c0_31 = arith.constant 0 : index
    %c80 = arith.constant 80 : index
    %44 = vector.load %arg3[%c0_30, %c0_31, %c80] : memref<1x5x192xbf16, #tpu.memory_space<vmem>>, vector<1x5x16xbf16>
    %45 = vector.shape_cast %44 : vector<1x5x16xbf16> to vector<5x16xbf16>
    %c0_32 = arith.constant 0 : index
    %c0_33 = arith.constant 0 : index
    %c144 = arith.constant 144 : index
    %46 = vector.load %arg3[%c0_32, %c0_33, %c144] : memref<1x5x192xbf16, #tpu.memory_space<vmem>>, vector<1x5x16xbf16>
    %47 = vector.shape_cast %46 : vector<1x5x16xbf16> to vector<5x16xbf16>
    %cst_34 = arith.constant dense<0.000000e+00> : vector<5x5xf32>
    %48 = tpu.matmul %43, %45, %cst_34 {dimension_numbers = #tpu.dot_dimension_numbers<[1], [1], [0], [0], [0, 0, 1, 0], [], []>} : vector<5x16xbf16>, vector<5x16xbf16>, vector<5x5xf32> -> vector<5x5xf32>
    %c1 = arith.constant 1 : index
    %c0_35 = arith.constant 0 : index
    %c0_36 = arith.constant 0 : index
    %49 = vector.load %arg5[%c1, %c0_35, %c0_36] : memref<4x5x1xf32, #tpu.memory_space<vmem>>, vector<1x5x1xf32>
    %50 = vector.shape_cast %49 : vector<1x5x1xf32> to vector<5x1xf32>
    %cst_37 = arith.constant dense<0xFF800000> : vector<5xf32>
    %51 = vector.multi_reduction <maximumf>, %48, %cst_37 [1] : vector<5x5xf32> to vector<5xf32>
    %52 = vector.shape_cast %51 : vector<5xf32> to vector<5x1xf32>
    %53 = arith.maximumf %50, %52 : vector<5x1xf32>
    %54 = arith.subf %50, %53 : vector<5x1xf32>
    %55 = math.exp %54 : vector<5x1xf32>
    %56 = vector.broadcast %53 : vector<5x1xf32> to vector<5x5xf32>
    %57 = arith.subf %48, %56 : vector<5x5xf32>
    %58 = math.exp %57 : vector<5x5xf32>
    %c1_38 = arith.constant 1 : index
    %c0_39 = arith.constant 0 : index
    %c0_40 = arith.constant 0 : index
    %59 = vector.load %arg6[%c1_38, %c0_39, %c0_40] : memref<4x5x1xf32, #tpu.memory_space<vmem>>, vector<1x5x1xf32>
    %60 = vector.shape_cast %59 : vector<1x5x1xf32> to vector<5x1xf32>
    %61 = arith.mulf %55, %60 : vector<5x1xf32>
    %cst_41 = arith.constant dense<0.000000e+00> : vector<5xf32>
    %62 = vector.multi_reduction <add>, %58, %cst_41 [1] : vector<5x5xf32> to vector<5xf32>
    %63 = vector.shape_cast %62 : vector<5xf32> to vector<5x1xf32>
    %64 = arith.addf %61, %63 : vector<5x1xf32>
    %c1_42 = arith.constant 1 : index
    %c0_43 = arith.constant 0 : index
    %c0_44 = arith.constant 0 : index
    %65 = vector.load %arg6[%c1_42, %c0_43, %c0_44] : memref<4x5x1xf32, #tpu.memory_space<vmem>>, vector<1x5x1xf32>
    %66 = vector.shape_cast %65 : vector<1x5x1xf32> to vector<5x1xf32>
    %67 = vector.shape_cast %64 : vector<5x1xf32> to vector<1x5x1xf32>
    tpu.vector_store %arg6[%c1_42, %c0_43, %c0_44], %67 {strides = array<i32>} : memref<4x5x1xf32, #tpu.memory_space<vmem>>, vector<1x5x1xf32>,
    %68 = arith.truncf %58 : vector<5x5xf32> to vector<5x5xbf16>
    %cst_45 = arith.constant dense<0.000000e+00> : vector<5x16xf32>
    %69 = tpu.matmul %68, %47, %cst_45 {dimension_numbers = #tpu.dot_dimension_numbers<[1], [0], [0], [1], [0, 0, 1, 1], [], []>} : vector<5x5xbf16>, vector<5x16xbf16>, vector<5x16xf32> -> vector<5x16xf32>
    %c1_46 = arith.constant 1 : index
    %c0_47 = arith.constant 0 : index
    %c0_48 = arith.constant 0 : index
    %70 = vector.load %arg7[%c1_46, %c0_47, %c0_48] : memref<4x5x16xf32, #tpu.memory_space<vmem>>, vector<1x5x16xf32>
    %71 = vector.shape_cast %70 : vector<1x5x16xf32> to vector<5x16xf32>
    %72 = vector.broadcast %55 : vector<5x1xf32> to vector<5x16xf32>
    %73 = arith.mulf %72, %71 : vector<5x16xf32>
    %74 = arith.addf %73, %69 : vector<5x16xf32>
    %c1_49 = arith.constant 1 : index
    %c0_50 = arith.constant 0 : index
    %c0_51 = arith.constant 0 : index
    %75 = vector.load %arg7[%c1_49, %c0_50, %c0_51] : memref<4x5x16xf32, #tpu.memory_space<vmem>>, vector<1x5x16xf32>
    %76 = vector.shape_cast %75 : vector<1x5x16xf32> to vector<5x16xf32>
    %77 = vector.shape_cast %74 : vector<5x16xf32> to vector<1x5x16xf32>
    tpu.vector_store %arg7[%c1_49, %c0_50, %c0_51], %77 {strides = array<i32>} : memref<4x5x16xf32, #tpu.memory_space<vmem>>, vector<1x5x16xf32>,
    %c1_52 = arith.constant 1 : index
    %c0_53 = arith.constant 0 : index
    %c0_54 = arith.constant 0 : index
    %78 = vector.load %arg5[%c1_52, %c0_53, %c0_54] : memref<4x5x1xf32, #tpu.memory_space<vmem>>, vector<1x5x1xf32>
    %79 = vector.shape_cast %78 : vector<1x5x1xf32> to vector<5x1xf32>
    %80 = vector.shape_cast %53 : vector<5x1xf32> to vector<1x5x1xf32>
    tpu.vector_store %arg5[%c1_52, %c0_53, %c0_54], %80 {strides = array<i32>} : memref<4x5x1xf32, #tpu.memory_space<vmem>>, vector<1x5x1xf32>,
    %c0_55 = arith.constant 0 : index
    %c0_56 = arith.constant 0 : index
    %c32 = arith.constant 32 : index
    %81 = vector.load %arg2[%c0_55, %c0_56, %c32] : memref<1x5x192xbf16, #tpu.memory_space<vmem>>, vector<1x5x16xbf16>
    %82 = vector.shape_cast %81 : vector<1x5x16xbf16> to vector<5x16xbf16>
    %c0_57 = arith.constant 0 : index
    %c0_58 = arith.constant 0 : index
    %c96 = arith.constant 96 : index
    %83 = vector.load %arg3[%c0_57, %c0_58, %c96] : memref<1x5x192xbf16, #tpu.memory_space<vmem>>, vector<1x5x16xbf16>
    %84 = vector.shape_cast %83 : vector<1x5x16xbf16> to vector<5x16xbf16>
    %c0_59 = arith.constant 0 : index
    %c0_60 = arith.constant 0 : index
    %c160 = arith.constant 160 : index
    %85 = vector.load %arg3[%c0_59, %c0_60, %c160] : memref<1x5x192xbf16, #tpu.memory_space<vmem>>, vector<1x5x16xbf16>
    %86 = vector.shape_cast %85 : vector<1x5x16xbf16> to vector<5x16xbf16>
    %cst_61 = arith.constant dense<0.000000e+00> : vector<5x5xf32>
    %87 = tpu.matmul %82, %84, %cst_61 {dimension_numbers = #tpu.dot_dimension_numbers<[1], [1], [0], [0], [0, 0, 1, 0], [], []>} : vector<5x16xbf16>, vector<5x16xbf16>, vector<5x5xf32> -> vector<5x5xf32>
    %c2 = arith.constant 2 : index
    %c0_62 = arith.constant 0 : index
    %c0_63 = arith.constant 0 : index
    %88 = vector.load %arg5[%c2, %c0_62, %c0_63] : memref<4x5x1xf32, #tpu.memory_space<vmem>>, vector<1x5x1xf32>
    %89 = vector.shape_cast %88 : vector<1x5x1xf32> to vector<5x1xf32>
    %cst_64 = arith.constant dense<0xFF800000> : vector<5xf32>
    %90 = vector.multi_reduction <maximumf>, %87, %cst_64 [1] : vector<5x5xf32> to vector<5xf32>
    %91 = vector.shape_cast %90 : vector<5xf32> to vector<5x1xf32>
    %92 = arith.maximumf %89, %91 : vector<5x1xf32>
    %93 = arith.subf %89, %92 : vector<5x1xf32>
    %94 = math.exp %93 : vector<5x1xf32>
    %95 = vector.broadcast %92 : vector<5x1xf32> to vector<5x5xf32>
    %96 = arith.subf %87, %95 : vector<5x5xf32>
    %97 = math.exp %96 : vector<5x5xf32>
    %c2_65 = arith.constant 2 : index
    %c0_66 = arith.constant 0 : index
    %c0_67 = arith.constant 0 : index
    %98 = vector.load %arg6[%c2_65, %c0_66, %c0_67] : memref<4x5x1xf32, #tpu.memory_space<vmem>>, vector<1x5x1xf32>
    %99 = vector.shape_cast %98 : vector<1x5x1xf32> to vector<5x1xf32>
    %100 = arith.mulf %94, %99 : vector<5x1xf32>
    %cst_68 = arith.constant dense<0.000000e+00> : vector<5xf32>
    %101 = vector.multi_reduction <add>, %97, %cst_68 [1] : vector<5x5xf32> to vector<5xf32>
    %102 = vector.shape_cast %101 : vector<5xf32> to vector<5x1xf32>
    %103 = arith.addf %100, %102 : vector<5x1xf32>
    %c2_69 = arith.constant 2 : index
    %c0_70 = arith.constant 0 : index
    %c0_71 = arith.constant 0 : index
    %104 = vector.load %arg6[%c2_69, %c0_70, %c0_71] : memref<4x5x1xf32, #tpu.memory_space<vmem>>, vector<1x5x1xf32>
    %105 = vector.shape_cast %104 : vector<1x5x1xf32> to vector<5x1xf32>
    %106 = vector.shape_cast %103 : vector<5x1xf32> to vector<1x5x1xf32>
    tpu.vector_store %arg6[%c2_69, %c0_70, %c0_71], %106 {strides = array<i32>} : memref<4x5x1xf32, #tpu.memory_space<vmem>>, vector<1x5x1xf32>,
    %107 = arith.truncf %97 : vector<5x5xf32> to vector<5x5xbf16>
    %cst_72 = arith.constant dense<0.000000e+00> : vector<5x16xf32>
    %108 = tpu.matmul %107, %86, %cst_72 {dimension_numbers = #tpu.dot_dimension_numbers<[1], [0], [0], [1], [0, 0, 1, 1], [], []>} : vector<5x5xbf16>, vector<5x16xbf16>, vector<5x16xf32> -> vector<5x16xf32>
    %c2_73 = arith.constant 2 : index
    %c0_74 = arith.constant 0 : index
    %c0_75 = arith.constant 0 : index
    %109 = vector.load %arg7[%c2_73, %c0_74, %c0_75] : memref<4x5x16xf32, #tpu.memory_space<vmem>>, vector<1x5x16xf32>
    %110 = vector.shape_cast %109 : vector<1x5x16xf32> to vector<5x16xf32>
    %111 = vector.broadcast %94 : vector<5x1xf32> to vector<5x16xf32>
    %112 = arith.mulf %111, %110 : vector<5x16xf32>
    %113 = arith.addf %112, %108 : vector<5x16xf32>
    %c2_76 = arith.constant 2 : index
    %c0_77 = arith.constant 0 : index
    %c0_78 = arith.constant 0 : index
    %114 = vector.load %arg7[%c2_76, %c0_77, %c0_78] : memref<4x5x16xf32, #tpu.memory_space<vmem>>, vector<1x5x16xf32>
    %115 = vector.shape_cast %114 : vector<1x5x16xf32> to vector<5x16xf32>
    %116 = vector.shape_cast %113 : vector<5x16xf32> to vector<1x5x16xf32>
    tpu.vector_store %arg7[%c2_76, %c0_77, %c0_78], %116 {strides = array<i32>} : memref<4x5x16xf32, #tpu.memory_space<vmem>>, vector<1x5x16xf32>,
    %c2_79 = arith.constant 2 : index
    %c0_80 = arith.constant 0 : index
    %c0_81 = arith.constant 0 : index
    %117 = vector.load %arg5[%c2_79, %c0_80, %c0_81] : memref<4x5x1xf32, #tpu.memory_space<vmem>>, vector<1x5x1xf32>
    %118 = vector.shape_cast %117 : vector<1x5x1xf32> to vector<5x1xf32>
    %119 = vector.shape_cast %92 : vector<5x1xf32> to vector<1x5x1xf32>
    tpu.vector_store %arg5[%c2_79, %c0_80, %c0_81], %119 {strides = array<i32>} : memref<4x5x1xf32, #tpu.memory_space<vmem>>, vector<1x5x1xf32>,
    %c0_82 = arith.constant 0 : index
    %c0_83 = arith.constant 0 : index
    %c48 = arith.constant 48 : index
    %120 = vector.load %arg2[%c0_82, %c0_83, %c48] : memref<1x5x192xbf16, #tpu.memory_space<vmem>>, vector<1x5x16xbf16>
    %121 = vector.shape_cast %120 : vector<1x5x16xbf16> to vector<5x16xbf16>
    %c0_84 = arith.constant 0 : index
    %c0_85 = arith.constant 0 : index
    %c112 = arith.constant 112 : index
    %122 = vector.load %arg3[%c0_84, %c0_85, %c112] : memref<1x5x192xbf16, #tpu.memory_space<vmem>>, vector<1x5x16xbf16>
    %123 = vector.shape_cast %122 : vector<1x5x16xbf16> to vector<5x16xbf16>
    %c0_86 = arith.constant 0 : index
    %c0_87 = arith.constant 0 : index
    %c176 = arith.constant 176 : index
    %124 = vector.load %arg3[%c0_86, %c0_87, %c176] : memref<1x5x192xbf16, #tpu.memory_space<vmem>>, vector<1x5x16xbf16>
    %125 = vector.shape_cast %124 : vector<1x5x16xbf16> to vector<5x16xbf16>
    %cst_88 = arith.constant dense<0.000000e+00> : vector<5x5xf32>
    %126 = tpu.matmul %121, %123, %cst_88 {dimension_numbers = #tpu.dot_dimension_numbers<[1], [1], [0], [0], [0, 0, 1, 0], [], []>} : vector<5x16xbf16>, vector<5x16xbf16>, vector<5x5xf32> -> vector<5x5xf32>
    %c3 = arith.constant 3 : index
    %c0_89 = arith.constant 0 : index
    %c0_90 = arith.constant 0 : index
    %127 = vector.load %arg5[%c3, %c0_89, %c0_90] : memref<4x5x1xf32, #tpu.memory_space<vmem>>, vector<1x5x1xf32>
    %128 = vector.shape_cast %127 : vector<1x5x1xf32> to vector<5x1xf32>
    %cst_91 = arith.constant dense<0xFF800000> : vector<5xf32>
    %129 = vector.multi_reduction <maximumf>, %126, %cst_91 [1] : vector<5x5xf32> to vector<5xf32>
    %130 = vector.shape_cast %129 : vector<5xf32> to vector<5x1xf32>
    %131 = arith.maximumf %128, %130 : vector<5x1xf32>
    %132 = arith.subf %128, %131 : vector<5x1xf32>
    %133 = math.exp %132 : vector<5x1xf32>
    %134 = vector.broadcast %131 : vector<5x1xf32> to vector<5x5xf32>
    %135 = arith.subf %126, %134 : vector<5x5xf32>
    %136 = math.exp %135 : vector<5x5xf32>
    %c3_92 = arith.constant 3 : index
    %c0_93 = arith.constant 0 : index
    %c0_94 = arith.constant 0 : index
    %137 = vector.load %arg6[%c3_92, %c0_93, %c0_94] : memref<4x5x1xf32, #tpu.memory_space<vmem>>, vector<1x5x1xf32>
    %138 = vector.shape_cast %137 : vector<1x5x1xf32> to vector<5x1xf32>
    %139 = arith.mulf %133, %138 : vector<5x1xf32>
    %cst_95 = arith.constant dense<0.000000e+00> : vector<5xf32>
    %140 = vector.multi_reduction <add>, %136, %cst_95 [1] : vector<5x5xf32> to vector<5xf32>
    %141 = vector.shape_cast %140 : vector<5xf32> to vector<5x1xf32>
    %142 = arith.addf %139, %141 : vector<5x1xf32>
    %c3_96 = arith.constant 3 : index
    %c0_97 = arith.constant 0 : index
    %c0_98 = arith.constant 0 : index
    %143 = vector.load %arg6[%c3_96, %c0_97, %c0_98] : memref<4x5x1xf32, #tpu.memory_space<vmem>>, vector<1x5x1xf32>
    %144 = vector.shape_cast %143 : vector<1x5x1xf32> to vector<5x1xf32>
    %145 = vector.shape_cast %142 : vector<5x1xf32> to vector<1x5x1xf32>
    tpu.vector_store %arg6[%c3_96, %c0_97, %c0_98], %145 {strides = array<i32>} : memref<4x5x1xf32, #tpu.memory_space<vmem>>, vector<1x5x1xf32>,
    %146 = arith.truncf %136 : vector<5x5xf32> to vector<5x5xbf16>
    %cst_99 = arith.constant dense<0.000000e+00> : vector<5x16xf32>
    %147 = tpu.matmul %146, %125, %cst_99 {dimension_numbers = #tpu.dot_dimension_numbers<[1], [0], [0], [1], [0, 0, 1, 1], [], []>} : vector<5x5xbf16>, vector<5x16xbf16>, vector<5x16xf32> -> vector<5x16xf32>
    %c3_100 = arith.constant 3 : index
    %c0_101 = arith.constant 0 : index
    %c0_102 = arith.constant 0 : index
    %148 = vector.load %arg7[%c3_100, %c0_101, %c0_102] : memref<4x5x16xf32, #tpu.memory_space<vmem>>, vector<1x5x16xf32>
    %149 = vector.shape_cast %148 : vector<1x5x16xf32> to vector<5x16xf32>
    %150 = vector.broadcast %133 : vector<5x1xf32> to vector<5x16xf32>
    %151 = arith.mulf %150, %149 : vector<5x16xf32>
    %152 = arith.addf %151, %147 : vector<5x16xf32>
    %c3_103 = arith.constant 3 : index
    %c0_104 = arith.constant 0 : index
    %c0_105 = arith.constant 0 : index
    %153 = vector.load %arg7[%c3_103, %c0_104, %c0_105] : memref<4x5x16xf32, #tpu.memory_space<vmem>>, vector<1x5x16xf32>
    %154 = vector.shape_cast %153 : vector<1x5x16xf32> to vector<5x16xf32>
    %155 = vector.shape_cast %152 : vector<5x16xf32> to vector<1x5x16xf32>
    tpu.vector_store %arg7[%c3_103, %c0_104, %c0_105], %155 {strides = array<i32>} : memref<4x5x16xf32, #tpu.memory_space<vmem>>, vector<1x5x16xf32>,
    %c3_106 = arith.constant 3 : index
    %c0_107 = arith.constant 0 : index
    %c0_108 = arith.constant 0 : index
    %156 = vector.load %arg5[%c3_106, %c0_107, %c0_108] : memref<4x5x1xf32, #tpu.memory_space<vmem>>, vector<1x5x1xf32>
    %157 = vector.shape_cast %156 : vector<1x5x1xf32> to vector<5x1xf32>
    %158 = vector.shape_cast %131 : vector<5x1xf32> to vector<1x5x1xf32>
    tpu.vector_store %arg5[%c3_106, %c0_107, %c0_108], %158 {strides = array<i32>} : memref<4x5x1xf32, #tpu.memory_space<vmem>>, vector<1x5x1xf32>,
    %c0_i32_109 = arith.constant 0 : i32
    %159 = arith.cmpi eq, %arg1, %c0_i32_109 : i32
    %160 = arith.extui %159 : i1 to i32
    %c0_i32_110 = arith.constant 0 : i32
    %161 = arith.cmpi ne, %160, %c0_i32_110 : i32
    scf.if %161 {
      %c0_111 = arith.constant 0 : index
      %c0_112 = arith.constant 0 : index
      %c0_113 = arith.constant 0 : index
      %162 = vector.load %arg6[%c0_111, %c0_112, %c0_113] : memref<4x5x1xf32, #tpu.memory_space<vmem>>, vector<4x5x1xf32>
      %163 = tpu.reciprocal %162 {approx = true} : vector<4x5x1xf32> -> vector<4x5x1xf32>
      %c0_114 = arith.constant 0 : index
      %c0_115 = arith.constant 0 : index
      %c0_116 = arith.constant 0 : index
      %164 = vector.load %arg7[%c0_114, %c0_115, %c0_116] : memref<4x5x16xf32, #tpu.memory_space<vmem>>, vector<1x5x16xf32>
      %165 = vector.shape_cast %164 : vector<1x5x16xf32> to vector<5x16xf32>
      %166 = vector.extract_strided_slice %163 {offsets = [0, 0, 0], sizes = [1, 5, 1], strides = [1, 1, 1]} : vector<4x5x1xf32> to vector<1x5x1xf32>
      %167 = vector.shape_cast %166 : vector<1x5x1xf32> to vector<5x1xf32>
      %168 = vector.broadcast %167 : vector<5x1xf32> to vector<5x16xf32>
      %169 = arith.mulf %165, %168 : vector<5x16xf32>
      %c1_117 = arith.constant 1 : index
      %c0_118 = arith.constant 0 : index
      %c0_119 = arith.constant 0 : index
      %170 = vector.load %arg7[%c1_117, %c0_118, %c0_119] : memref<4x5x16xf32, #tpu.memory_space<vmem>>, vector<1x5x16xf32>
      %171 = vector.shape_cast %170 : vector<1x5x16xf32> to vector<5x16xf32>
      %172 = vector.extract_strided_slice %163 {offsets = [1, 0, 0], sizes = [1, 5, 1], strides = [1, 1, 1]} : vector<4x5x1xf32> to vector<1x5x1xf32>
      %173 = vector.shape_cast %172 : vector<1x5x1xf32> to vector<5x1xf32>
      %174 = vector.broadcast %173 : vector<5x1xf32> to vector<5x16xf32>
      %175 = arith.mulf %171, %174 : vector<5x16xf32>
      %c2_120 = arith.constant 2 : index
      %c0_121 = arith.constant 0 : index
      %c0_122 = arith.constant 0 : index
      %176 = vector.load %arg7[%c2_120, %c0_121, %c0_122] : memref<4x5x16xf32, #tpu.memory_space<vmem>>, vector<1x5x16xf32>
      %177 = vector.shape_cast %176 : vector<1x5x16xf32> to vector<5x16xf32>
      %178 = vector.extract_strided_slice %163 {offsets = [2, 0, 0], sizes = [1, 5, 1], strides = [1, 1, 1]} : vector<4x5x1xf32> to vector<1x5x1xf32>
      %179 = vector.shape_cast %178 : vector<1x5x1xf32> to vector<5x1xf32>
      %180 = vector.broadcast %179 : vector<5x1xf32> to vector<5x16xf32>
      %181 = arith.mulf %177, %180 : vector<5x16xf32>
      %c3_123 = arith.constant 3 : index
      %c0_124 = arith.constant 0 : index
      %c0_125 = arith.constant 0 : index
      %182 = vector.load %arg7[%c3_123, %c0_124, %c0_125] : memref<4x5x16xf32, #tpu.memory_space<vmem>>, vector<1x5x16xf32>
      %183 = vector.shape_cast %182 : vector<1x5x16xf32> to vector<5x16xf32>
      %184 = vector.extract_strided_slice %163 {offsets = [3, 0, 0], sizes = [1, 5, 1], strides = [1, 1, 1]} : vector<4x5x1xf32> to vector<1x5x1xf32>
      %185 = vector.shape_cast %184 : vector<1x5x1xf32> to vector<5x1xf32>
      %186 = vector.broadcast %185 : vector<5x1xf32> to vector<5x16xf32>
      %187 = arith.mulf %183, %186 : vector<5x16xf32>
      %188 = tpu.concatenate %169, %175, %181, %187 in 1 : vector<5x16xf32>, vector<5x16xf32>, vector<5x16xf32>, vector<5x16xf32> -> vector<5x64xf32>
      %189 = arith.truncf %188 : vector<5x64xf32> to vector<5x64xbf16>
      %c0_126 = arith.constant 0 : index
      %c0_127 = arith.constant 0 : index
      %c0_128 = arith.constant 0 : index
      %190 = vector.load %arg4[%c0_126, %c0_127, %c0_128] : memref<1x5x64xbf16, #tpu.memory_space<vmem>>, vector<1x5x64xbf16>
      %191 = vector.shape_cast %190 : vector<1x5x64xbf16> to vector<5x64xbf16>
      %192 = vector.shape_cast %189 : vector<5x64xbf16> to vector<1x5x64xbf16>
      tpu.vector_store %arg4[%c0_126, %c0_127, %c0_128], %192 {strides = array<i32>} : memref<1x5x64xbf16, #tpu.memory_space<vmem>>, vector<1x5x64xbf16>,
    } else {
    }
    return
  }
  func.func @transform_0(%arg0: i32, %arg1: i32) -> (i32, i32, i32) {
    %c0_i32 = arith.constant 0 : i32
    %c0_i32_0 = arith.constant 0 : i32
    %c0_i32_1 = arith.constant 0 : i32
    return %arg0, %c0_i32, %c0_i32_0 : i32, i32, i32
  }
  func.func @transform_1(%arg0: i32, %arg1: i32) -> (i32, i32, i32) {
    %c0_i32 = arith.constant 0 : i32
    %c0_i32_0 = arith.constant 0 : i32
    return %arg0, %arg1, %c0_i32 : i32, i32, i32
  }
  func.func @transform_2(%arg0: i32, %arg1: i32) -> (i32, i32, i32) {
    %c0_i32 = arith.constant 0 : i32
    %c0_i32_0 = arith.constant 0 : i32
    %c0_i32_1 = arith.constant 0 : i32
    return %arg0, %c0_i32, %c0_i32_0 : i32, i32, i32
  }
}

module attributes {stable_mosaic.version = 11 : i64} {
  func.func @_linear_kernel(%arg0: i32, %arg1: i32, %arg2: i32, %arg3: memref<20x64xbf16, #tpu.memory_space<vmem>>, %arg4: memref<64x64xbf16, #tpu.memory_space<vmem>>, %arg5: memref<1x64xf32, #tpu.memory_space<vmem>>, %arg6: memref<20x64xf32, #tpu.memory_space<vmem>>, %arg7: memref<20x64xf32, #tpu.memory_space<vmem>>, %arg8: memref<20x64xf32, #tpu.memory_space<vmem>>) attributes {dimension_semantics = [#tpu.dimension_semantics<parallel>, #tpu.dimension_semantics<parallel>, #tpu.dimension_semantics<arbitrary>], iteration_bounds = array<i64: 1, 1, 1>, scalar_prefetch = 0 : i64, scratch_operands = 1 : i64, tpu.core_type = #tpu.core_type<tc>, window_params = [{transform_indices = @transform_0, window_bounds = array<i64: 20, 64>}, {transform_indices = @transform_1, window_bounds = array<i64: 64, 64>}, {transform_indices = @transform_2, window_bounds = array<i64: 1, 64>}, {transform_indices = @transform_3, window_bounds = array<i64: 20, 64>}, {transform_indices = @transform_4, window_bounds = array<i64: 20, 64>}]} {
    %c0_i32 = arith.constant 0 : i32
    %0 = arith.cmpi eq, %arg2, %c0_i32 : i32
    %1 = arith.extui %0 : i1 to i32
    %c0_i32_0 = arith.constant 0 : i32
    %2 = arith.cmpi ne, %1, %c0_i32_0 : i32
    scf.if %2 {
      %cst_10 = arith.constant 0.000000e+00 : f32
      %12 = vector.broadcast %cst_10 : f32 to vector<20x64xf32>
      %c0_11 = arith.constant 0 : index
      %c0_12 = arith.constant 0 : index
      %13 = vector.load %arg8[%c0_11, %c0_12] : memref<20x64xf32, #tpu.memory_space<vmem>>, vector<20x64xf32>
      tpu.vector_store %arg8[%c0_11, %c0_12], %12 {strides = array<i32>} : memref<20x64xf32, #tpu.memory_space<vmem>>, vector<20x64xf32>,
    } else {
    }
    %c0 = arith.constant 0 : index
    %c0_1 = arith.constant 0 : index
    %3 = vector.load %arg8[%c0, %c0_1] : memref<20x64xf32, #tpu.memory_space<vmem>>, vector<20x64xf32>
    %c0_2 = arith.constant 0 : index
    %c0_3 = arith.constant 0 : index
    %4 = vector.load %arg3[%c0_2, %c0_3] : memref<20x64xbf16, #tpu.memory_space<vmem>>, vector<20x64xbf16>
    %c0_4 = arith.constant 0 : index
    %c0_5 = arith.constant 0 : index
    %5 = vector.load %arg4[%c0_4, %c0_5] : memref<64x64xbf16, #tpu.memory_space<vmem>>, vector<64x64xbf16>
    %cst = arith.constant dense<0.000000e+00> : vector<20x64xf32>
    %6 = tpu.matmul %4, %5, %cst {dimension_numbers = #tpu.dot_dimension_numbers<[1], [0], [0], [1], [0, 0, 1, 1], [], []>} : vector<20x64xbf16>, vector<64x64xbf16>, vector<20x64xf32> -> vector<20x64xf32>
    %7 = arith.addf %3, %6 : vector<20x64xf32>
    %c0_6 = arith.constant 0 : index
    %c0_7 = arith.constant 0 : index
    %8 = vector.load %arg8[%c0_6, %c0_7] : memref<20x64xf32, #tpu.memory_space<vmem>>, vector<20x64xf32>
    tpu.vector_store %arg8[%c0_6, %c0_7], %7 {strides = array<i32>} : memref<20x64xf32, #tpu.memory_space<vmem>>, vector<20x64xf32>,
    %c0_i32_8 = arith.constant 0 : i32
    %9 = arith.cmpi eq, %arg2, %c0_i32_8 : i32
    %10 = arith.extui %9 : i1 to i32
    %c0_i32_9 = arith.constant 0 : i32
    %11 = arith.cmpi ne, %10, %c0_i32_9 : i32
    scf.if %11 {
      %c0_10 = arith.constant 0 : index
      %c0_11 = arith.constant 0 : index
      %12 = vector.load %arg8[%c0_10, %c0_11] : memref<20x64xf32, #tpu.memory_space<vmem>>, vector<20x64xf32>
      %c0_12 = arith.constant 0 : index
      %c0_13 = arith.constant 0 : index
      %13 = vector.load %arg5[%c0_12, %c0_13] : memref<1x64xf32, #tpu.memory_space<vmem>>, vector<1x64xf32>
      %14 = vector.broadcast %13 : vector<1x64xf32> to vector<20x64xf32>
      %15 = arith.addf %12, %14 : vector<20x64xf32>
      %c0_14 = arith.constant 0 : index
      %c0_15 = arith.constant 0 : index
      %16 = vector.load %arg6[%c0_14, %c0_15] : memref<20x64xf32, #tpu.memory_space<vmem>>, vector<20x64xf32>
      %17 = arith.addf %15, %16 : vector<20x64xf32>
      %c0_16 = arith.constant 0 : index
      %c0_17 = arith.constant 0 : index
      %18 = vector.load %arg7[%c0_16, %c0_17] : memref<20x64xf32, #tpu.memory_space<vmem>>, vector<20x64xf32>
      tpu.vector_store %arg7[%c0_16, %c0_17], %17 {strides = array<i32>} : memref<20x64xf32, #tpu.memory_space<vmem>>, vector<20x64xf32>,
    } else {
    }
    return
  }
  func.func @transform_0(%arg0: i32, %arg1: i32, %arg2: i32) -> (i32, i32) {
    %c0_i32 = arith.constant 0 : i32
    return %arg0, %arg2 : i32, i32
  }
  func.func @transform_1(%arg0: i32, %arg1: i32, %arg2: i32) -> (i32, i32) {
    %c0_i32 = arith.constant 0 : i32
    return %arg2, %arg1 : i32, i32
  }
  func.func @transform_2(%arg0: i32, %arg1: i32, %arg2: i32) -> (i32, i32) {
    %c0_i32 = arith.constant 0 : i32
    %c0_i32_0 = arith.constant 0 : i32
    return %c0_i32, %arg1 : i32, i32
  }
  func.func @transform_3(%arg0: i32, %arg1: i32, %arg2: i32) -> (i32, i32) {
    %c0_i32 = arith.constant 0 : i32
    return %arg0, %arg1 : i32, i32
  }
  func.func @transform_4(%arg0: i32, %arg1: i32, %arg2: i32) -> (i32, i32) {
    %c0_i32 = arith.constant 0 : i32
    return %arg0, %arg1 : i32, i32
  }
}

module attributes {stable_mosaic.version = 11 : i64} {
  func.func @_ln_linear_kernel(%arg0: i32, %arg1: i32, %arg2: memref<20x64xf32, #tpu.memory_space<vmem>>, %arg3: memref<1x64xf32, #tpu.memory_space<vmem>>, %arg4: memref<1x64xf32, #tpu.memory_space<vmem>>, %arg5: memref<64x256xbf16, #tpu.memory_space<vmem>>, %arg6: memref<1x256xf32, #tpu.memory_space<vmem>>, %arg7: memref<20x256xbf16, #tpu.memory_space<vmem>>) attributes {dimension_semantics = [#tpu.dimension_semantics<parallel>, #tpu.dimension_semantics<parallel>], iteration_bounds = array<i64: 1, 1>, scalar_prefetch = 0 : i64, scratch_operands = 0 : i64, tpu.core_type = #tpu.core_type<tc>, window_params = [{transform_indices = @transform_0, window_bounds = array<i64: 20, 64>}, {pipeline_mode = #tpu.pipeline_mode<synchronous>, transform_indices = @transform_1, window_bounds = array<i64: 1, 64>}, {pipeline_mode = #tpu.pipeline_mode<synchronous>, transform_indices = @transform_2, window_bounds = array<i64: 1, 64>}, {transform_indices = @transform_3, window_bounds = array<i64: 64, 256>}, {transform_indices = @transform_4, window_bounds = array<i64: 1, 256>}, {transform_indices = @transform_5, window_bounds = array<i64: 20, 256>}]} {
    %c0 = arith.constant 0 : index
    %c0_0 = arith.constant 0 : index
    %0 = vector.load %arg2[%c0, %c0_0] : memref<20x64xf32, #tpu.memory_space<vmem>>, vector<20x64xf32>
    %cst = arith.constant dense<0.000000e+00> : vector<20xf32>
    %1 = vector.multi_reduction <add>, %0, %cst [1] : vector<20x64xf32> to vector<20xf32>
    %2 = vector.shape_cast %1 : vector<20xf32> to vector<20x1xf32>
    %cst_1 = arith.constant 6.400000e+01 : f32
    %3 = vector.broadcast %cst_1 : f32 to vector<20x1xf32>
    %4 = arith.divf %2, %3 : vector<20x1xf32>
    %5 = vector.broadcast %4 : vector<20x1xf32> to vector<20x64xf32>
    %6 = arith.subf %0, %5 : vector<20x64xf32>
    %7 = arith.mulf %6, %6 : vector<20x64xf32>
    %cst_2 = arith.constant dense<0.000000e+00> : vector<20xf32>
    %8 = vector.multi_reduction <add>, %7, %cst_2 [1] : vector<20x64xf32> to vector<20xf32>
    %9 = vector.shape_cast %8 : vector<20xf32> to vector<20x1xf32>
    %cst_3 = arith.constant 6.400000e+01 : f32
    %10 = vector.broadcast %cst_3 : f32 to vector<20x1xf32>
    %11 = arith.divf %9, %10 : vector<20x1xf32>
    %cst_4 = arith.constant 9.99999974E-6 : f32
    %12 = vector.broadcast %cst_4 : f32 to vector<20x1xf32>
    %13 = arith.addf %11, %12 : vector<20x1xf32>
    %14 = math.rsqrt %13 : vector<20x1xf32>
    %15 = vector.broadcast %14 : vector<20x1xf32> to vector<20x64xf32>
    %16 = arith.mulf %6, %15 : vector<20x64xf32>
    %c0_5 = arith.constant 0 : index
    %c0_6 = arith.constant 0 : index
    %17 = vector.load %arg3[%c0_5, %c0_6] : memref<1x64xf32, #tpu.memory_space<vmem>>, vector<1x64xf32>
    %18 = vector.broadcast %17 : vector<1x64xf32> to vector<20x64xf32>
    %19 = arith.mulf %16, %18 : vector<20x64xf32>
    %c0_7 = arith.constant 0 : index
    %c0_8 = arith.constant 0 : index
    %20 = vector.load %arg4[%c0_7, %c0_8] : memref<1x64xf32, #tpu.memory_space<vmem>>, vector<1x64xf32>
    %21 = vector.broadcast %20 : vector<1x64xf32> to vector<20x64xf32>
    %22 = arith.addf %19, %21 : vector<20x64xf32>
    %23 = arith.truncf %22 : vector<20x64xf32> to vector<20x64xbf16>
    %c0_9 = arith.constant 0 : index
    %c0_10 = arith.constant 0 : index
    %24 = vector.load %arg5[%c0_9, %c0_10] : memref<64x256xbf16, #tpu.memory_space<vmem>>, vector<64x256xbf16>
    %cst_11 = arith.constant dense<0.000000e+00> : vector<20x256xf32>
    %25 = tpu.matmul %23, %24, %cst_11 {dimension_numbers = #tpu.dot_dimension_numbers<[1], [0], [0], [1], [0, 0, 1, 1], [], []>} : vector<20x64xbf16>, vector<64x256xbf16>, vector<20x256xf32> -> vector<20x256xf32>
    %c0_12 = arith.constant 0 : index
    %c0_13 = arith.constant 0 : index
    %26 = vector.load %arg6[%c0_12, %c0_13] : memref<1x256xf32, #tpu.memory_space<vmem>>, vector<1x256xf32>
    %27 = vector.broadcast %26 : vector<1x256xf32> to vector<20x256xf32>
    %28 = arith.addf %25, %27 : vector<20x256xf32>
    %cst_14 = arith.constant 1.702000e+00 : f32
    %29 = vector.broadcast %cst_14 : f32 to vector<20x256xf32>
    %30 = arith.mulf %29, %28 : vector<20x256xf32>
    %31 = arith.negf %30 : vector<20x256xf32>
    %32 = math.exp %31 : vector<20x256xf32>
    %cst_15 = arith.constant 1.000000e+00 : f32
    %33 = vector.broadcast %cst_15 : f32 to vector<20x256xf32>
    %34 = arith.addf %33, %32 : vector<20x256xf32>
    %35 = arith.divf %33, %34 : vector<20x256xf32>
    %36 = arith.mulf %28, %35 : vector<20x256xf32>
    %37 = arith.truncf %36 : vector<20x256xf32> to vector<20x256xbf16>
    %c0_16 = arith.constant 0 : index
    %c0_17 = arith.constant 0 : index
    %38 = vector.load %arg7[%c0_16, %c0_17] : memref<20x256xbf16, #tpu.memory_space<vmem>>, vector<20x256xbf16>
    tpu.vector_store %arg7[%c0_16, %c0_17], %37 {strides = array<i32>} : memref<20x256xbf16, #tpu.memory_space<vmem>>, vector<20x256xbf16>,
    return
  }
  func.func @transform_0(%arg0: i32, %arg1: i32) -> (i32, i32) {
    %c0_i32 = arith.constant 0 : i32
    %c0_i32_0 = arith.constant 0 : i32
    return %arg0, %c0_i32 : i32, i32
  }
  func.func @transform_1(%arg0: i32, %arg1: i32) -> (i32, i32) {
    %c0_i32 = arith.constant 0 : i32
    %c0_i32_0 = arith.constant 0 : i32
    %c0_i32_1 = arith.constant 0 : i32
    return %c0_i32, %c0_i32_0 : i32, i32
  }
  func.func @transform_2(%arg0: i32, %arg1: i32) -> (i32, i32) {
    %c0_i32 = arith.constant 0 : i32
    %c0_i32_0 = arith.constant 0 : i32
    %c0_i32_1 = arith.constant 0 : i32
    return %c0_i32, %c0_i32_0 : i32, i32
  }
  func.func @transform_3(%arg0: i32, %arg1: i32) -> (i32, i32) {
    %c0_i32 = arith.constant 0 : i32
    %c0_i32_0 = arith.constant 0 : i32
    return %c0_i32, %arg1 : i32, i32
  }
  func.func @transform_4(%arg0: i32, %arg1: i32) -> (i32, i32) {
    %c0_i32 = arith.constant 0 : i32
    %c0_i32_0 = arith.constant 0 : i32
    return %c0_i32, %arg1 : i32, i32
  }
  func.func @transform_5(%arg0: i32, %arg1: i32) -> (i32, i32) {
    %c0_i32 = arith.constant 0 : i32
    return %arg0, %arg1 : i32, i32
  }
}

module attributes {stable_mosaic.version = 11 : i64} {
  func.func @_linear_kernel(%arg0: i32, %arg1: i32, %arg2: i32, %arg3: memref<20x256xbf16, #tpu.memory_space<vmem>>, %arg4: memref<256x64xbf16, #tpu.memory_space<vmem>>, %arg5: memref<1x64xf32, #tpu.memory_space<vmem>>, %arg6: memref<20x64xf32, #tpu.memory_space<vmem>>, %arg7: memref<20x64xf32, #tpu.memory_space<vmem>>, %arg8: memref<20x64xf32, #tpu.memory_space<vmem>>) attributes {dimension_semantics = [#tpu.dimension_semantics<parallel>, #tpu.dimension_semantics<parallel>, #tpu.dimension_semantics<arbitrary>], iteration_bounds = array<i64: 1, 1, 1>, scalar_prefetch = 0 : i64, scratch_operands = 1 : i64, tpu.core_type = #tpu.core_type<tc>, window_params = [{transform_indices = @transform_0, window_bounds = array<i64: 20, 256>}, {transform_indices = @transform_1, window_bounds = array<i64: 256, 64>}, {transform_indices = @transform_2, window_bounds = array<i64: 1, 64>}, {transform_indices = @transform_3, window_bounds = array<i64: 20, 64>}, {transform_indices = @transform_4, window_bounds = array<i64: 20, 64>}]} {
    %c0_i32 = arith.constant 0 : i32
    %0 = arith.cmpi eq, %arg2, %c0_i32 : i32
    %1 = arith.extui %0 : i1 to i32
    %c0_i32_0 = arith.constant 0 : i32
    %2 = arith.cmpi ne, %1, %c0_i32_0 : i32
    scf.if %2 {
      %cst_10 = arith.constant 0.000000e+00 : f32
      %12 = vector.broadcast %cst_10 : f32 to vector<20x64xf32>
      %c0_11 = arith.constant 0 : index
      %c0_12 = arith.constant 0 : index
      %13 = vector.load %arg8[%c0_11, %c0_12] : memref<20x64xf32, #tpu.memory_space<vmem>>, vector<20x64xf32>
      tpu.vector_store %arg8[%c0_11, %c0_12], %12 {strides = array<i32>} : memref<20x64xf32, #tpu.memory_space<vmem>>, vector<20x64xf32>,
    } else {
    }
    %c0 = arith.constant 0 : index
    %c0_1 = arith.constant 0 : index
    %3 = vector.load %arg8[%c0, %c0_1] : memref<20x64xf32, #tpu.memory_space<vmem>>, vector<20x64xf32>
    %c0_2 = arith.constant 0 : index
    %c0_3 = arith.constant 0 : index
    %4 = vector.load %arg3[%c0_2, %c0_3] : memref<20x256xbf16, #tpu.memory_space<vmem>>, vector<20x256xbf16>
    %c0_4 = arith.constant 0 : index
    %c0_5 = arith.constant 0 : index
    %5 = vector.load %arg4[%c0_4, %c0_5] : memref<256x64xbf16, #tpu.memory_space<vmem>>, vector<256x64xbf16>
    %cst = arith.constant dense<0.000000e+00> : vector<20x64xf32>
    %6 = tpu.matmul %4, %5, %cst {dimension_numbers = #tpu.dot_dimension_numbers<[1], [0], [0], [1], [0, 0, 1, 1], [], []>} : vector<20x256xbf16>, vector<256x64xbf16>, vector<20x64xf32> -> vector<20x64xf32>
    %7 = arith.addf %3, %6 : vector<20x64xf32>
    %c0_6 = arith.constant 0 : index
    %c0_7 = arith.constant 0 : index
    %8 = vector.load %arg8[%c0_6, %c0_7] : memref<20x64xf32, #tpu.memory_space<vmem>>, vector<20x64xf32>
    tpu.vector_store %arg8[%c0_6, %c0_7], %7 {strides = array<i32>} : memref<20x64xf32, #tpu.memory_space<vmem>>, vector<20x64xf32>,
    %c0_i32_8 = arith.constant 0 : i32
    %9 = arith.cmpi eq, %arg2, %c0_i32_8 : i32
    %10 = arith.extui %9 : i1 to i32
    %c0_i32_9 = arith.constant 0 : i32
    %11 = arith.cmpi ne, %10, %c0_i32_9 : i32
    scf.if %11 {
      %c0_10 = arith.constant 0 : index
      %c0_11 = arith.constant 0 : index
      %12 = vector.load %arg8[%c0_10, %c0_11] : memref<20x64xf32, #tpu.memory_space<vmem>>, vector<20x64xf32>
      %c0_12 = arith.constant 0 : index
      %c0_13 = arith.constant 0 : index
      %13 = vector.load %arg5[%c0_12, %c0_13] : memref<1x64xf32, #tpu.memory_space<vmem>>, vector<1x64xf32>
      %14 = vector.broadcast %13 : vector<1x64xf32> to vector<20x64xf32>
      %15 = arith.addf %12, %14 : vector<20x64xf32>
      %c0_14 = arith.constant 0 : index
      %c0_15 = arith.constant 0 : index
      %16 = vector.load %arg6[%c0_14, %c0_15] : memref<20x64xf32, #tpu.memory_space<vmem>>, vector<20x64xf32>
      %17 = arith.addf %15, %16 : vector<20x64xf32>
      %c0_16 = arith.constant 0 : index
      %c0_17 = arith.constant 0 : index
      %18 = vector.load %arg7[%c0_16, %c0_17] : memref<20x64xf32, #tpu.memory_space<vmem>>, vector<20x64xf32>
      tpu.vector_store %arg7[%c0_16, %c0_17], %17 {strides = array<i32>} : memref<20x64xf32, #tpu.memory_space<vmem>>, vector<20x64xf32>,
    } else {
    }
    return
  }
  func.func @transform_0(%arg0: i32, %arg1: i32, %arg2: i32) -> (i32, i32) {
    %c0_i32 = arith.constant 0 : i32
    return %arg0, %arg2 : i32, i32
  }
  func.func @transform_1(%arg0: i32, %arg1: i32, %arg2: i32) -> (i32, i32) {
    %c0_i32 = arith.constant 0 : i32
    return %arg2, %arg1 : i32, i32
  }
  func.func @transform_2(%arg0: i32, %arg1: i32, %arg2: i32) -> (i32, i32) {
    %c0_i32 = arith.constant 0 : i32
    %c0_i32_0 = arith.constant 0 : i32
    return %c0_i32, %arg1 : i32, i32
  }
  func.func @transform_3(%arg0: i32, %arg1: i32, %arg2: i32) -> (i32, i32) {
    %c0_i32 = arith.constant 0 : i32
    return %arg0, %arg1 : i32, i32
  }
  func.func @transform_4(%arg0: i32, %arg1: i32, %arg2: i32) -> (i32, i32) {
    %c0_i32 = arith.constant 0 : i32
    return %arg0, %arg1 : i32, i32
  }
}

module attributes {stable_mosaic.version = 11 : i64} {
  func.func @_linear_kernel(%arg0: i32, %arg1: i32, %arg2: i32, %arg3: memref<16x64xf32, #tpu.memory_space<vmem>>, %arg4: memref<64x128xbf16, #tpu.memory_space<vmem>>, %arg5: memref<1x128xf32, #tpu.memory_space<vmem>>, %arg6: memref<16x128xbf16, #tpu.memory_space<vmem>>, %arg7: memref<16x128xf32, #tpu.memory_space<vmem>>) attributes {dimension_semantics = [#tpu.dimension_semantics<parallel>, #tpu.dimension_semantics<parallel>, #tpu.dimension_semantics<arbitrary>], iteration_bounds = array<i64: 1, 1, 1>, scalar_prefetch = 0 : i64, scratch_operands = 1 : i64, tpu.core_type = #tpu.core_type<tc>, window_params = [{transform_indices = @transform_0, window_bounds = array<i64: 16, 64>}, {transform_indices = @transform_1, window_bounds = array<i64: 64, 128>}, {transform_indices = @transform_2, window_bounds = array<i64: 1, 128>}, {transform_indices = @transform_3, window_bounds = array<i64: 16, 128>}]} {
    %c0_i32 = arith.constant 0 : i32
    %0 = arith.cmpi eq, %arg2, %c0_i32 : i32
    %1 = arith.extui %0 : i1 to i32
    %c0_i32_0 = arith.constant 0 : i32
    %2 = arith.cmpi ne, %1, %c0_i32_0 : i32
    scf.if %2 {
      %cst_10 = arith.constant 0.000000e+00 : f32
      %13 = vector.broadcast %cst_10 : f32 to vector<16x128xf32>
      %c0_11 = arith.constant 0 : index
      %c0_12 = arith.constant 0 : index
      %14 = vector.load %arg7[%c0_11, %c0_12] : memref<16x128xf32, #tpu.memory_space<vmem>>, vector<16x128xf32>
      tpu.vector_store %arg7[%c0_11, %c0_12], %13 {strides = array<i32>} : memref<16x128xf32, #tpu.memory_space<vmem>>, vector<16x128xf32>,
    } else {
    }
    %c0 = arith.constant 0 : index
    %c0_1 = arith.constant 0 : index
    %3 = vector.load %arg7[%c0, %c0_1] : memref<16x128xf32, #tpu.memory_space<vmem>>, vector<16x128xf32>
    %c0_2 = arith.constant 0 : index
    %c0_3 = arith.constant 0 : index
    %4 = vector.load %arg3[%c0_2, %c0_3] : memref<16x64xf32, #tpu.memory_space<vmem>>, vector<16x64xf32>
    %5 = arith.truncf %4 : vector<16x64xf32> to vector<16x64xbf16>
    %c0_4 = arith.constant 0 : index
    %c0_5 = arith.constant 0 : index
    %6 = vector.load %arg4[%c0_4, %c0_5] : memref<64x128xbf16, #tpu.memory_space<vmem>>, vector<64x128xbf16>
    %cst = arith.constant dense<0.000000e+00> : vector<16x128xf32>
    %7 = tpu.matmul %5, %6, %cst {dimension_numbers = #tpu.dot_dimension_numbers<[1], [0], [0], [1], [0, 0, 1, 1], [], []>} : vector<16x64xbf16>, vector<64x128xbf16>, vector<16x128xf32> -> vector<16x128xf32>
    %8 = arith.addf %3, %7 : vector<16x128xf32>
    %c0_6 = arith.constant 0 : index
    %c0_7 = arith.constant 0 : index
    %9 = vector.load %arg7[%c0_6, %c0_7] : memref<16x128xf32, #tpu.memory_space<vmem>>, vector<16x128xf32>
    tpu.vector_store %arg7[%c0_6, %c0_7], %8 {strides = array<i32>} : memref<16x128xf32, #tpu.memory_space<vmem>>, vector<16x128xf32>,
    %c0_i32_8 = arith.constant 0 : i32
    %10 = arith.cmpi eq, %arg2, %c0_i32_8 : i32
    %11 = arith.extui %10 : i1 to i32
    %c0_i32_9 = arith.constant 0 : i32
    %12 = arith.cmpi ne, %11, %c0_i32_9 : i32
    scf.if %12 {
      %c0_10 = arith.constant 0 : index
      %c0_11 = arith.constant 0 : index
      %13 = vector.load %arg7[%c0_10, %c0_11] : memref<16x128xf32, #tpu.memory_space<vmem>>, vector<16x128xf32>
      %c0_12 = arith.constant 0 : index
      %c0_13 = arith.constant 0 : index
      %14 = vector.load %arg5[%c0_12, %c0_13] : memref<1x128xf32, #tpu.memory_space<vmem>>, vector<1x128xf32>
      %15 = vector.broadcast %14 : vector<1x128xf32> to vector<16x128xf32>
      %16 = arith.addf %13, %15 : vector<16x128xf32>
      %17 = arith.truncf %16 : vector<16x128xf32> to vector<16x128xbf16>
      %c0_14 = arith.constant 0 : index
      %c0_15 = arith.constant 0 : index
      %18 = vector.load %arg6[%c0_14, %c0_15] : memref<16x128xbf16, #tpu.memory_space<vmem>>, vector<16x128xbf16>
      tpu.vector_store %arg6[%c0_14, %c0_15], %17 {strides = array<i32>} : memref<16x128xbf16, #tpu.memory_space<vmem>>, vector<16x128xbf16>,
    } else {
    }
    return
  }
  func.func @transform_0(%arg0: i32, %arg1: i32, %arg2: i32) -> (i32, i32) {
    %c0_i32 = arith.constant 0 : i32
    return %arg0, %arg2 : i32, i32
  }
  func.func @transform_1(%arg0: i32, %arg1: i32, %arg2: i32) -> (i32, i32) {
    %c0_i32 = arith.constant 0 : i32
    return %arg2, %arg1 : i32, i32
  }
  func.func @transform_2(%arg0: i32, %arg1: i32, %arg2: i32) -> (i32, i32) {
    %c0_i32 = arith.constant 0 : i32
    %c0_i32_0 = arith.constant 0 : i32
    return %c0_i32, %arg1 : i32, i32
  }
  func.func @transform_3(%arg0: i32, %arg1: i32, %arg2: i32) -> (i32, i32) {
    %c0_i32 = arith.constant 0 : i32
    return %arg0, %arg1 : i32, i32
  }
}

module attributes {stable_mosaic.version = 11 : i64} {
  func.func @_linear_kernel(%arg0: i32, %arg1: i32, %arg2: i32, %arg3: memref<16x128xf32, #tpu.memory_space<vmem>>, %arg4: memref<128x64xbf16, #tpu.memory_space<vmem>>, %arg5: memref<1x64xf32, #tpu.memory_space<vmem>>, %arg6: memref<16x64xf32, #tpu.memory_space<vmem>>, %arg7: memref<16x64xf32, #tpu.memory_space<vmem>>, %arg8: memref<16x64xf32, #tpu.memory_space<vmem>>) attributes {dimension_semantics = [#tpu.dimension_semantics<parallel>, #tpu.dimension_semantics<parallel>, #tpu.dimension_semantics<arbitrary>], iteration_bounds = array<i64: 1, 1, 1>, scalar_prefetch = 0 : i64, scratch_operands = 1 : i64, tpu.core_type = #tpu.core_type<tc>, window_params = [{transform_indices = @transform_0, window_bounds = array<i64: 16, 128>}, {transform_indices = @transform_1, window_bounds = array<i64: 128, 64>}, {transform_indices = @transform_2, window_bounds = array<i64: 1, 64>}, {transform_indices = @transform_3, window_bounds = array<i64: 16, 64>}, {transform_indices = @transform_4, window_bounds = array<i64: 16, 64>}]} {
    %c0_i32 = arith.constant 0 : i32
    %0 = arith.cmpi eq, %arg2, %c0_i32 : i32
    %1 = arith.extui %0 : i1 to i32
    %c0_i32_0 = arith.constant 0 : i32
    %2 = arith.cmpi ne, %1, %c0_i32_0 : i32
    scf.if %2 {
      %cst_10 = arith.constant 0.000000e+00 : f32
      %13 = vector.broadcast %cst_10 : f32 to vector<16x64xf32>
      %c0_11 = arith.constant 0 : index
      %c0_12 = arith.constant 0 : index
      %14 = vector.load %arg8[%c0_11, %c0_12] : memref<16x64xf32, #tpu.memory_space<vmem>>, vector<16x64xf32>
      tpu.vector_store %arg8[%c0_11, %c0_12], %13 {strides = array<i32>} : memref<16x64xf32, #tpu.memory_space<vmem>>, vector<16x64xf32>,
    } else {
    }
    %c0 = arith.constant 0 : index
    %c0_1 = arith.constant 0 : index
    %3 = vector.load %arg8[%c0, %c0_1] : memref<16x64xf32, #tpu.memory_space<vmem>>, vector<16x64xf32>
    %c0_2 = arith.constant 0 : index
    %c0_3 = arith.constant 0 : index
    %4 = vector.load %arg3[%c0_2, %c0_3] : memref<16x128xf32, #tpu.memory_space<vmem>>, vector<16x128xf32>
    %5 = arith.truncf %4 : vector<16x128xf32> to vector<16x128xbf16>
    %c0_4 = arith.constant 0 : index
    %c0_5 = arith.constant 0 : index
    %6 = vector.load %arg4[%c0_4, %c0_5] : memref<128x64xbf16, #tpu.memory_space<vmem>>, vector<128x64xbf16>
    %cst = arith.constant dense<0.000000e+00> : vector<16x64xf32>
    %7 = tpu.matmul %5, %6, %cst {dimension_numbers = #tpu.dot_dimension_numbers<[1], [0], [0], [1], [0, 0, 1, 1], [], []>} : vector<16x128xbf16>, vector<128x64xbf16>, vector<16x64xf32> -> vector<16x64xf32>
    %8 = arith.addf %3, %7 : vector<16x64xf32>
    %c0_6 = arith.constant 0 : index
    %c0_7 = arith.constant 0 : index
    %9 = vector.load %arg8[%c0_6, %c0_7] : memref<16x64xf32, #tpu.memory_space<vmem>>, vector<16x64xf32>
    tpu.vector_store %arg8[%c0_6, %c0_7], %8 {strides = array<i32>} : memref<16x64xf32, #tpu.memory_space<vmem>>, vector<16x64xf32>,
    %c0_i32_8 = arith.constant 0 : i32
    %10 = arith.cmpi eq, %arg2, %c0_i32_8 : i32
    %11 = arith.extui %10 : i1 to i32
    %c0_i32_9 = arith.constant 0 : i32
    %12 = arith.cmpi ne, %11, %c0_i32_9 : i32
    scf.if %12 {
      %c0_10 = arith.constant 0 : index
      %c0_11 = arith.constant 0 : index
      %13 = vector.load %arg8[%c0_10, %c0_11] : memref<16x64xf32, #tpu.memory_space<vmem>>, vector<16x64xf32>
      %c0_12 = arith.constant 0 : index
      %c0_13 = arith.constant 0 : index
      %14 = vector.load %arg5[%c0_12, %c0_13] : memref<1x64xf32, #tpu.memory_space<vmem>>, vector<1x64xf32>
      %15 = vector.broadcast %14 : vector<1x64xf32> to vector<16x64xf32>
      %16 = arith.addf %13, %15 : vector<16x64xf32>
      %c0_14 = arith.constant 0 : index
      %c0_15 = arith.constant 0 : index
      %17 = vector.load %arg6[%c0_14, %c0_15] : memref<16x64xf32, #tpu.memory_space<vmem>>, vector<16x64xf32>
      %18 = arith.addf %16, %17 : vector<16x64xf32>
      %c0_16 = arith.constant 0 : index
      %c0_17 = arith.constant 0 : index
      %19 = vector.load %arg7[%c0_16, %c0_17] : memref<16x64xf32, #tpu.memory_space<vmem>>, vector<16x64xf32>
      tpu.vector_store %arg7[%c0_16, %c0_17], %18 {strides = array<i32>} : memref<16x64xf32, #tpu.memory_space<vmem>>, vector<16x64xf32>,
    } else {
    }
    return
  }
  func.func @transform_0(%arg0: i32, %arg1: i32, %arg2: i32) -> (i32, i32) {
    %c0_i32 = arith.constant 0 : i32
    return %arg0, %arg2 : i32, i32
  }
  func.func @transform_1(%arg0: i32, %arg1: i32, %arg2: i32) -> (i32, i32) {
    %c0_i32 = arith.constant 0 : i32
    return %arg2, %arg1 : i32, i32
  }
  func.func @transform_2(%arg0: i32, %arg1: i32, %arg2: i32) -> (i32, i32) {
    %c0_i32 = arith.constant 0 : i32
    %c0_i32_0 = arith.constant 0 : i32
    return %c0_i32, %arg1 : i32, i32
  }
  func.func @transform_3(%arg0: i32, %arg1: i32, %arg2: i32) -> (i32, i32) {
    %c0_i32 = arith.constant 0 : i32
    return %arg0, %arg1 : i32, i32
  }
  func.func @transform_4(%arg0: i32, %arg1: i32, %arg2: i32) -> (i32, i32) {
    %c0_i32 = arith.constant 0 : i32
    return %arg0, %arg1 : i32, i32
  }
}

</mosaic_0001>

<llo_original>
// kernel: _lambda_.18
$region0: #{_lambda_.18}
  #allocation0 [shape = 'u32[]', space=smem, size = 0x4, offset = 0x4, fixed_abs, tag = 'smem constant byte address 0x4 - core index']
  #allocation1 [shape = 'u32[144,128]{1,0:T(1,128)}', space=vmem, size = 0x12000, scoped, tag = 'internal scratch']
  #allocation2 [shape = 'f32[20,64]{1,0:T(8,128)}', space=vmem, size = 0x3000, scoped, tag = 'scratch operand']
  %s0 = inlined_call_operand.vmem [shape: bf16[20,64], index: 0, kind: input, shape index: {}]
  %s1 = inlined_call_operand.vmem [shape: bf16[64,64], index: 1, kind: input, shape index: {}]
  %s2 = inlined_call_operand.vmem [shape: f32[1,64], index: 2, kind: input, shape index: {}]
  %s3 = inlined_call_operand.vmem [shape: f32[20,64], index: 3, kind: input, shape index: {}]
  %s4 = inlined_call_operand.vmem [shape: f32[20,64], index: 4, kind: output, shape index: {}]
  %s5 = sld [smem:[#allocation0]]
  $region34: #{_lambda_.18} parent=0
    _
  %s7 = ssub.s32 1, %s5
  %s8 = scalar_select 0, %s7, %s5
  // Predicated region
  $region2: #{_lambda_.18} parent=0 // pred_check
    _
  $region3: #{_lambda_.18} parent=0 // pred_check_branch
    %10 = sbr.rel (0) target = $region5
  $region4: #{_lambda_.18} parent=0 // pred_region
    _
  $region5: #{_lambda_.18} parent=0 // pred_fallthru
    _
  // Predicated region
  $region6: #{_lambda_.18} parent=0 // pred_check
    _
  $region7: #{_lambda_.18} parent=0 // pred_check_branch
    %12 = sbr.rel (0) target = $region9
  $region8: #{_lambda_.18} parent=0 // pred_region
    _
  $region9: #{_lambda_.18} parent=0 // pred_fallthru
    _
  // Predicated region
  $region10: #{_lambda_.18} parent=0 // pred_check
    _
  $region11: #{_lambda_.18} parent=0 // pred_check_branch
    %14 = sbr.rel (0) target = $region13
  $region12: #{_lambda_.18} parent=0 // pred_region
    _
  $region13: #{_lambda_.18} parent=0 // pred_fallthru
    _
  // Predicated region
  $region14: #{_lambda_.18} parent=0 // pred_check
    _
  $region15: #{_lambda_.18} parent=0 // pred_check_branch
    %16 = sbr.rel (0) target = $region17
  $region16: #{_lambda_.18} parent=0 // pred_region
    _
  $region17: #{_lambda_.18} parent=0 // pred_fallthru
    _
  %p18 = scmp.eq.s32.totalorder 0, 0
  // Predicated region
  $region18: #{_lambda_.18} parent=0 // pred_check
    %p19 = pneg %p18
  $region19: #{_lambda_.18} parent=0 // pred_check_branch
    %21 = sbr.rel (%p19) target = $region21
  $region20: #{_lambda_.18} parent=0 // pred_region
    %vm22 = vcmask 523264
    %23 = vst.msk [vmem:[#allocation2] sm:$0xff] %vm22, 0.0
    %24 = vst.msk [vmem:[#allocation2 + $0x8] sm:$0xff] %vm22, 0.0
    %vm25 = vcmask 519168
    %26 = vst.msk [vmem:[#allocation2 + $0x10] sm:$0xf] %vm25, 0.0
  $region21: #{_lambda_.18} parent=0 // pred_fallthru
    _
  %v27 = vld [vmem:[#allocation2] sm:$0xff]
  %v28 = vld [vmem:[#allocation2 + $0x8] sm:$0xff]
  %v29 = vld [vmem:[#allocation2 + $0x10] sm:$0xf]
  %v30 = vld [vmem:[%s0] sm:$0xf]
  %v31 = vld [vmem:[%s0 + $0x4] sm:$0xf]
  %v32 = vld [vmem:[%s0 + $0x8] sm:$0x3]
  %v33 = vld [vmem:[%s1] sm:$0xf]
  %v34 = vld [vmem:[%s1 + $0x4] sm:$0xf]
  %v35 = vld [vmem:[%s1 + $0x8] sm:$0xf]
  %v36 = vld [vmem:[%s1 + $0xc] sm:$0xf]
  %v37 = vld [vmem:[%s1 + $0x10] sm:$0xf]
  %v38 = vld [vmem:[%s1 + $0x14] sm:$0xf]
  %v39 = vld [vmem:[%s1 + $0x18] sm:$0xf]
  %v40 = vld [vmem:[%s1 + $0x1c] sm:$0xf]
  %v44 = vunpack.c.l.b16 %v30
  %v45 = vunpack.c.l.b16 %v31
  %v46 = vunpack.c.l.b16 %v32
  %v47 = vpack.c.b16 %v45, %v44
  %v48 = vpack.c.b16 %v46, %v46
  %v57 = vunpack.c.l.b16 %v33
  %v58 = vunpack.c.l.b16 %v34
  %v59 = vunpack.c.l.b16 %v35
  %v60 = vunpack.c.l.b16 %v36
  %v61 = vunpack.c.l.b16 %v37
  %v62 = vunpack.c.l.b16 %v38
  %v63 = vunpack.c.l.b16 %v39
  %v64 = vunpack.c.l.b16 %v40
  %v65 = vpack.c.b16 %v58, %v57
  %v66 = vpack.c.b16 %v60, %v59
  %v67 = vpack.c.b16 %v62, %v61
  %v68 = vpack.c.b16 %v64, %v63
  %vm73 = vcmask 523264
  %v75 = vsel %vm73, %v47, 0
  %v78 = vsel %vm73, %v48, 0
  %80 = vmatprep.subr.bf16.mxu0 0
  %81 = vmatpush1.bf16.msra.mxu0 0
  %82 = vmatprep.subr.bf16.mxu0 0
  %83 = vmatpush1.bf16.msra.mxu0 0
  %84 = vmatprep.subr.bf16.mxu0 0
  %85 = vmatpush1.bf16.msra.mxu0 0
  %86 = vmatprep.subr.bf16.mxu0 0
  %87 = vmatpush1.bf16.msra.mxu0 0
  %88 = vmatprep.subr.bf16.mxu0 0
  %89 = vmatpush1.bf16.msra.mxu0 %v68
  %90 = vmatprep.subr.bf16.mxu0 0
  %91 = vmatpush1.bf16.msra.mxu0 %v67
  %92 = vmatprep.subr.bf16.mxu0 0
  %93 = vmatpush1.bf16.msra.mxu0 %v66
  %94 = vmatprep.subr.bf16.mxu0 0
  %95 = vmatpush1.bf16.msra.mxu0 %v65
  %96 = vmatprep.subr.bf16.mxu0 0
  %97 = vmatpush2.bf16.msra.mxu0 0
  %98 = vmatprep.subr.bf16.mxu0 0
  %99 = vmatpush2.bf16.msra.mxu0 0
  %100 = vmatprep.subr.bf16.mxu0 0
  %101 = vmatpush2.bf16.msra.mxu0 0
  %102 = vmatprep.subr.bf16.mxu0 0
  %103 = vmatpush2.bf16.msra.mxu0 0
  %104 = vmatprep.subr.bf16.mxu0 0
  %105 = vmatpush2.bf16.msra.mxu0 0
  %106 = vmatprep.subr.bf16.mxu0 0
  %107 = vmatpush2.bf16.msra.mxu0 0
  %108 = vmatprep.subr.bf16.mxu0 0
  %109 = vmatpush2.bf16.msra.mxu0 0
  %110 = vmatprep.subr.bf16.mxu0 0
  %111 = vmatpush2.bf16.msra.mxu0 0
  %112 = vmatprep.mubr.bf16.mxu0 0
  %113 = vmatmul.mubr.bf16.gmra.mxu0 %v75
  %v114 = vpop.f32.mrf.mxu0
  %v115 = vadd.f32 0.0, %v114
  %v116 = vpop.f32.mrf.mxu0
  %v117 = vpop.f32.mrf.mxu0
  %v118 = vadd.f32 0.0, %v117
  %v119 = vpop.f32.mrf.mxu0
  %120 = vmatprep.mubr.bf16.mxu0 0
  %121 = vmatmul.mubr.bf16.gmra.mxu0 %v78
  %v122 = vpop.f32.mrf.mxu0
  %v123 = vadd.f32 0.0, %v122
  %v124 = vpop.f32.mrf.mxu0
  %v125 = vpop.f32.mrf.mxu0
  %v126 = vpop.f32.mrf.mxu0
  %127 = vdwg.mxu0
  %v128 = vadd.f32 %v27, %v115
  %v129 = vadd.f32 %v28, %v118
  %v130 = vadd.f32 %v29, %v123
  %131 = vst.msk [vmem:[#allocation2] sm:$0xff] %vm73, %v128
  %132 = vst.msk [vmem:[#allocation2 + $0x8] sm:$0xff] %vm73, %v129
  %vm133 = vcmask 519168
  %134 = vst.msk [vmem:[#allocation2 + $0x10] sm:$0xf] %vm133, %v130
  // Predicated region
  $region22: #{_lambda_.18} parent=0 // pred_check
    %p135 = pneg %p18
  $region23: #{_lambda_.18} parent=0 // pred_check_branch
    %137 = sbr.rel (%p135) target = $region25
  $region24: #{_lambda_.18} parent=0 // pred_region
    %v138 = vld [vmem:[#allocation2] sm:$0xff]
    %v139 = vld [vmem:[#allocation2 + $0x8] sm:$0xff]
    %v140 = vld [vmem:[#allocation2 + $0x10] sm:$0xf]
    %v141 = vld [vmem:[%s2] sm:$0x1]
    %v143 = vlaneseq
    %v144 = vshrl.u32 %v143, 7
    %v145 = vsub.s32 0, %v144
    %v146 = vrot.slane %v141, %v145
    %v148 = vadd.f32 %v138, %v146
    %v149 = vadd.f32 %v139, %v146
    %v150 = vadd.f32 %v140, %v146
    %v151 = vld [vmem:[%s3] sm:$0xff]
    %v152 = vld [vmem:[%s3 + $0x8] sm:$0xff]
    %v153 = vld [vmem:[%s3 + $0x10] sm:$0xf]
    %v154 = vadd.f32 %v148, %v151
    %v155 = vadd.f32 %v149, %v152
    %v156 = vadd.f32 %v150, %v153
    %157 = vst.msk [vmem:[%s4] sm:$0xff] %vm73, %v154
    %158 = vst.msk [vmem:[%s4 + $0x8] sm:$0xff] %vm73, %v155
    %159 = vst.msk [vmem:[%s4 + $0x10] sm:$0xf] %vm133, %v156
  $region25: #{_lambda_.18} parent=0 // pred_fallthru
    _
  // Predicated region
  $region26: #{_lambda_.18} parent=0 // pred_check
    _
  $region27: #{_lambda_.18} parent=0 // pred_check_branch
    %161 = sbr.rel (0) target = $region29
  $region28: #{_lambda_.18} parent=0 // pred_region
    _
  $region29: #{_lambda_.18} parent=0 // pred_fallthru
    _
  // Predicated region
  $region30: #{_lambda_.18} parent=0 // pred_check
    _
  $region31: #{_lambda_.18} parent=0 // pred_check_branch
    %163 = sbr.rel (0) target = $region33
  $region32: #{_lambda_.18} parent=0 // pred_region
    _
  $region33: #{_lambda_.18} parent=0 // pred_fallthru
    _

// kernel: _lambda_.15
$region0: #{_lambda_.15}
  #allocation0 [shape = 'u32[]', space=smem, size = 0x4, offset = 0x4, fixed_abs, tag = 'smem constant byte address 0x4 - core index']
  #allocation1 [shape = 'u32[144,128]{1,0:T(1,128)}', space=vmem, size = 0x12000, scoped, tag = 'internal scratch']
  #allocation2 [shape = 'f32[16,64]{1,0:T(8,128)}', space=vmem, size = 0x2000, scoped, tag = 'scratch operand']
  %s0 = inlined_call_operand.vmem [shape: f32[16,192], index: 0, kind: input, shape index: {}]
  %s1 = inlined_call_operand.vmem [shape: bf16[192,64], index: 1, kind: input, shape index: {}]
  %s2 = inlined_call_operand.vmem [shape: f32[1,64], index: 2, kind: input, shape index: {}]
  %s3 = inlined_call_operand.vmem [shape: f32[16,64], index: 3, kind: output, shape index: {}]
  %s4 = sld [smem:[#allocation0]]
  $region30: #{_lambda_.15} parent=0
    _
  %s6 = ssub.s32 1, %s4
  %s7 = scalar_select 0, %s6, %s4
  // Predicated region
  $region2: #{_lambda_.15} parent=0 // pred_check
    _
  $region3: #{_lambda_.15} parent=0 // pred_check_branch
    %9 = sbr.rel (0) target = $region5
  $region4: #{_lambda_.15} parent=0 // pred_region
    _
  $region5: #{_lambda_.15} parent=0 // pred_fallthru
    _
  // Predicated region
  $region6: #{_lambda_.15} parent=0 // pred_check
    _
  $region7: #{_lambda_.15} parent=0 // pred_check_branch
    %11 = sbr.rel (0) target = $region9
  $region8: #{_lambda_.15} parent=0 // pred_region
    _
  $region9: #{_lambda_.15} parent=0 // pred_fallthru
    _
  // Predicated region
  $region10: #{_lambda_.15} parent=0 // pred_check
    _
  $region11: #{_lambda_.15} parent=0 // pred_check_branch
    %13 = sbr.rel (0) target = $region13
  $region12: #{_lambda_.15} parent=0 // pred_region
    _
  $region13: #{_lambda_.15} parent=0 // pred_fallthru
    _
  %p15 = scmp.eq.s32.totalorder 0, 0
  // Predicated region
  $region14: #{_lambda_.15} parent=0 // pred_check
    %p16 = pneg %p15
  $region15: #{_lambda_.15} parent=0 // pred_check_branch
    %18 = sbr.rel (%p16) target = $region17
  $region16: #{_lambda_.15} parent=0 // pred_region
    %vm19 = vcmask 523264
    %20 = vst.msk [vmem:[#allocation2] sm:$0xff] %vm19, 0.0
    %21 = vst.msk [vmem:[#allocation2 + $0x8] sm:$0xff] %vm19, 0.0
  $region17: #{_lambda_.15} parent=0 // pred_fallthru
    _
  %v22 = vld [vmem:[#allocation2] sm:$0xff]
  %v23 = vld [vmem:[#allocation2 + $0x8] sm:$0xff]
  %v24 = vld [vmem:[%s0] sm:$0xff]
  %v25 = vld [vmem:[%s0 + $0x8] sm:$0xff]
  %v26 = vld [vmem:[%s0 + $0x10] sm:$0xff]
  %v27 = vld [vmem:[%s0 + $0x18] sm:$0xff]
  %v28 = vpack.c.bf16 %v26, %v24
  %v29 = vpack.c.bf16 %v27, %v25
  %v30 = vld [vmem:[%s1] sm:$0xf]
  %v31 = vld [vmem:[%s1 + $0x4] sm:$0xf]
  %v32 = vld [vmem:[%s1 + $0x8] sm:$0xf]
  %v33 = vld [vmem:[%s1 + $0xc] sm:$0xf]
  %v34 = vld [vmem:[%s1 + $0x10] sm:$0xf]
  %v35 = vld [vmem:[%s1 + $0x14] sm:$0xf]
  %v36 = vld [vmem:[%s1 + $0x18] sm:$0xf]
  %v37 = vld [vmem:[%s1 + $0x1c] sm:$0xf]
  %v38 = vld [vmem:[%s1 + $0x20] sm:$0xf]
  %v39 = vld [vmem:[%s1 + $0x24] sm:$0xf]
  %v40 = vld [vmem:[%s1 + $0x28] sm:$0xf]
  %v41 = vld [vmem:[%s1 + $0x2c] sm:$0xf]
  %v42 = vld [vmem:[%s1 + $0x30] sm:$0xf]
  %v43 = vld [vmem:[%s1 + $0x34] sm:$0xf]
  %v44 = vld [vmem:[%s1 + $0x38] sm:$0xf]
  %v45 = vld [vmem:[%s1 + $0x3c] sm:$0xf]
  %v46 = vld [vmem:[%s1 + $0x40] sm:$0xf]
  %v47 = vld [vmem:[%s1 + $0x44] sm:$0xf]
  %v48 = vld [vmem:[%s1 + $0x48] sm:$0xf]
  %v49 = vld [vmem:[%s1 + $0x4c] sm:$0xf]
  %v50 = vld [vmem:[%s1 + $0x50] sm:$0xf]
  %v51 = vld [vmem:[%s1 + $0x54] sm:$0xf]
  %v52 = vld [vmem:[%s1 + $0x58] sm:$0xf]
  %v53 = vld [vmem:[%s1 + $0x5c] sm:$0xf]
  %v78 = vunpack.c.l.b16 %v30
  %v79 = vunpack.c.l.b16 %v31
  %v80 = vunpack.c.l.b16 %v32
  %v81 = vunpack.c.l.b16 %v33
  %v82 = vunpack.c.l.b16 %v34
  %v83 = vunpack.c.l.b16 %v35
  %v84 = vunpack.c.l.b16 %v36
  %v85 = vunpack.c.l.b16 %v37
  %v86 = vunpack.c.l.b16 %v38
  %v87 = vunpack.c.l.b16 %v39
  %v88 = vunpack.c.l.b16 %v40
  %v89 = vunpack.c.l.b16 %v41
  %v90 = vunpack.c.l.b16 %v42
  %v91 = vunpack.c.l.b16 %v43
  %v92 = vunpack.c.l.b16 %v44
  %v93 = vunpack.c.l.b16 %v45
  %v94 = vunpack.c.l.b16 %v46
  %v95 = vunpack.c.l.b16 %v47
  %v96 = vunpack.c.l.b16 %v48
  %v97 = vunpack.c.l.b16 %v49
  %v98 = vunpack.c.l.b16 %v50
  %v99 = vunpack.c.l.b16 %v51
  %v100 = vunpack.c.l.b16 %v52
  %v101 = vunpack.c.l.b16 %v53
  %v102 = vpack.c.b16 %v79, %v78
  %v103 = vpack.c.b16 %v81, %v80
  %v104 = vpack.c.b16 %v83, %v82
  %v105 = vpack.c.b16 %v85, %v84
  %v106 = vpack.c.b16 %v87, %v86
  %v107 = vpack.c.b16 %v89, %v88
  %v108 = vpack.c.b16 %v91, %v90
  %v109 = vpack.c.b16 %v93, %v92
  %v110 = vpack.c.b16 %v95, %v94
  %v111 = vpack.c.b16 %v97, %v96
  %v112 = vpack.c.b16 %v99, %v98
  %v113 = vpack.c.b16 %v101, %v100
  %vm126 = vcmask 523264
  %v128 = vsel %vm126, %v29, 0
  %130 = vmatprep.subr.bf16.mxu0 0
  %131 = vmatpush1.bf16.msra.mxu0 %v109
  %132 = vmatprep.subr.bf16.mxu0 0
  %133 = vmatpush1.bf16.msra.mxu0 %v108
  %134 = vmatprep.subr.bf16.mxu0 0
  %135 = vmatpush1.bf16.msra.mxu0 %v107
  %136 = vmatprep.subr.bf16.mxu0 0
  %137 = vmatpush1.bf16.msra.mxu0 %v106
  %138 = vmatprep.subr.bf16.mxu0 0
  %139 = vmatpush1.bf16.msra.mxu0 %v105
  %140 = vmatprep.subr.bf16.mxu0 0
  %141 = vmatpush1.bf16.msra.mxu0 %v104
  %142 = vmatprep.subr.bf16.mxu0 0
  %143 = vmatpush1.bf16.msra.mxu0 %v103
  %144 = vmatprep.subr.bf16.mxu0 0
  %145 = vmatpush1.bf16.msra.mxu0 %v102
  %146 = vmatprep.subr.bf16.mxu0 0
  %147 = vmatpush2.bf16.msra.mxu0 0
  %148 = vmatprep.subr.bf16.mxu0 0
  %149 = vmatpush2.bf16.msra.mxu0 0
  %150 = vmatprep.subr.bf16.mxu0 0
  %151 = vmatpush2.bf16.msra.mxu0 0
  %152 = vmatprep.subr.bf16.mxu0 0
  %153 = vmatpush2.bf16.msra.mxu0 0
  %154 = vmatprep.subr.bf16.mxu0 0
  %155 = vmatpush2.bf16.msra.mxu0 %v113
  %156 = vmatprep.subr.bf16.mxu0 0
  %157 = vmatpush2.bf16.msra.mxu0 %v112
  %158 = vmatprep.subr.bf16.mxu0 0
  %159 = vmatpush2.bf16.msra.mxu0 %v111
  %160 = vmatprep.subr.bf16.mxu0 0
  %161 = vmatpush2.bf16.msra.mxu0 %v110
  %162 = vmatprep.mubr.bf16.mxu0 %v128
  %163 = vmatmul.mubr.bf16.gmra.mxu0 %v28
  %v164 = vpop.f32.mrf.mxu0
  %v165 = vadd.f32 0.0, %v164
  %v166 = vpop.f32.mrf.mxu0
  %v167 = vpop.f32.mrf.mxu0
  %v168 = vadd.f32 0.0, %v167
  %v169 = vpop.f32.mrf.mxu0
  %170 = vdwg.mxu0
  %v171 = vadd.f32 %v22, %v165
  %v172 = vadd.f32 %v23, %v168
  %173 = vst.msk [vmem:[#allocation2] sm:$0xff] %vm126, %v171
  %174 = vst.msk [vmem:[#allocation2 + $0x8] sm:$0xff] %vm126, %v172
  // Predicated region
  $region18: #{_lambda_.15} parent=0 // pred_check
    %p175 = pneg %p15
  $region19: #{_lambda_.15} parent=0 // pred_check_branch
    %177 = sbr.rel (%p175) target = $region21
  $region20: #{_lambda_.15} parent=0 // pred_region
    %v178 = vld [vmem:[#allocation2] sm:$0xff]
    %v179 = vld [vmem:[#allocation2 + $0x8] sm:$0xff]
    %v180 = vld [vmem:[%s2] sm:$0x1]
    %v182 = vlaneseq
    %v183 = vshrl.u32 %v182, 7
    %v184 = vsub.s32 0, %v183
    %v185 = vrot.slane %v180, %v184
    %v187 = vadd.f32 %v178, %v185
    %v188 = vadd.f32 %v179, %v185
    %189 = vst.msk [vmem:[%s3] sm:$0xff] %vm126, %v187
    %190 = vst.msk [vmem:[%s3 + $0x8] sm:$0xff] %vm126, %v188
  $region21: #{_lambda_.15} parent=0 // pred_fallthru
    _
  // Predicated region
  $region22: #{_lambda_.15} parent=0 // pred_check
    _
  $region23: #{_lambda_.15} parent=0 // pred_check_branch
    %192 = sbr.rel (0) target = $region25
  $region24: #{_lambda_.15} parent=0 // pred_region
    _
  $region25: #{_lambda_.15} parent=0 // pred_fallthru
    _
  // Predicated region
  $region26: #{_lambda_.15} parent=0 // pred_check
    _
  $region27: #{_lambda_.15} parent=0 // pred_check_branch
    %194 = sbr.rel (0) target = $region29
  $region28: #{_lambda_.15} parent=0 // pred_region
    _
  $region29: #{_lambda_.15} parent=0 // pred_fallthru
    _

// kernel: _lambda_.16
$region0: #{_lambda_.16}
  #allocation0 [shape = 'u32[]', space=smem, size = 0x4, offset = 0x4, fixed_abs, tag = 'smem constant byte address 0x4 - core index']
  #allocation1 [shape = 'u32[144,128]{1,0:T(1,128)}', space=vmem, size = 0x12000, scoped, tag = 'internal scratch']
  %s0 = inlined_call_operand.vmem [shape: f32[20,64], index: 0, kind: input, shape index: {}]
  %s1 = inlined_call_operand.vmem [shape: f32[1,64], index: 1, kind: input, shape index: {}]
  %s2 = inlined_call_operand.vmem [shape: f32[1,64], index: 2, kind: input, shape index: {}]
  %s3 = inlined_call_operand.vmem [shape: bf16[64,192], index: 3, kind: input, shape index: {}]
  %s4 = inlined_call_operand.vmem [shape: f32[1,192], index: 4, kind: input, shape index: {}]
  %s5 = inlined_call_operand.vmem [shape: bf16[20,192], index: 5, kind: output, shape index: {}]
  %s6 = sld [smem:[#allocation0]]
  $region30: #{_lambda_.16} parent=0
    _
  %s8 = ssub.s32 1, %s6
  %s9 = scalar_select 0, %s8, %s6
  // Predicated region
  $region2: #{_lambda_.16} parent=0 // pred_check
    _
  $region3: #{_lambda_.16} parent=0 // pred_check_branch
    %11 = sbr.rel (0) target = $region5
  $region4: #{_lambda_.16} parent=0 // pred_region
    _
  $region5: #{_lambda_.16} parent=0 // pred_fallthru
    _
  // Predicated region
  $region6: #{_lambda_.16} parent=0 // pred_check
    _
  $region7: #{_lambda_.16} parent=0 // pred_check_branch
    %13 = sbr.rel (0) target = $region9
  $region8: #{_lambda_.16} parent=0 // pred_region
    _
  $region9: #{_lambda_.16} parent=0 // pred_fallthru
    _
  // Predicated region
  $region10: #{_lambda_.16} parent=0 // pred_check
    _
  $region11: #{_lambda_.16} parent=0 // pred_check_branch
    %15 = sbr.rel (0) target = $region13
  $region12: #{_lambda_.16} parent=0 // pred_region
    _
  $region13: #{_lambda_.16} parent=0 // pred_fallthru
    _
  // Predicated region
  $region14: #{_lambda_.16} parent=0 // pred_check
    _
  $region15: #{_lambda_.16} parent=0 // pred_check_branch
    %17 = sbr.rel (0) target = $region17
  $region16: #{_lambda_.16} parent=0 // pred_region
    _
  $region17: #{_lambda_.16} parent=0 // pred_fallthru
    _
  // Predicated region
  $region18: #{_lambda_.16} parent=0 // pred_check
    _
  $region19: #{_lambda_.16} parent=0 // pred_check_branch
    %19 = sbr.rel (0) target = $region21
  $region20: #{_lambda_.16} parent=0 // pred_region
    _
  $region21: #{_lambda_.16} parent=0 // pred_fallthru
    _
  %v21 = vld [vmem:[%s0] sm:$0xff]
  %v22 = vld [vmem:[%s0 + $0x8] sm:$0xff]
  %v23 = vld [vmem:[%s0 + $0x10] sm:$0xf]
  %vm24 = vcmask 523264
  %v25 = vsel %vm24, %v21, 0.0
  %26 = vadd.xlane.f32.xlu0 %v25
  %v27 = vpop.xlane.xlu0 %26
  %v28 = vsel %vm24, %v22, 0.0
  %29 = vadd.xlane.f32.xlu0 %v28
  %v30 = vpop.xlane.xlu0 %29
  %vm31 = vcmask 519168
  %v32 = vsel %vm31, %v23, 0.0
  %33 = vadd.xlane.f32.xlu0 %v32
  %v34 = vpop.xlane.xlu0 %33
  %v35 = vrcp.pop 64.0
  %v36 = vmul.f32 %v27, %v35
  %v37 = vmul.f32 %v30, %v35
  %v38 = vmul.f32 %v34, %v35
  %v39 = vsub.f32 %v21, %v36
  %v40 = vsub.f32 %v22, %v37
  %v41 = vsub.f32 %v23, %v38
  %v42 = vmul.f32 %v39, %v39
  %v43 = vmul.f32 %v40, %v40
  %v44 = vmul.f32 %v41, %v41
  %v45 = vsel %vm24, %v42, 0.0
  %46 = vadd.xlane.f32.xlu0 %v45
  %v47 = vpop.xlane.xlu0 %46
  %v48 = vsel %vm24, %v43, 0.0
  %49 = vadd.xlane.f32.xlu0 %v48
  %v50 = vpop.xlane.xlu0 %49
  %v51 = vsel %vm31, %v44, 0.0
  %52 = vadd.xlane.f32.xlu0 %v51
  %v53 = vpop.xlane.xlu0 %52
  %v54 = vmul.f32 %v47, %v35
  %v55 = vmul.f32 %v50, %v35
  %v56 = vmul.f32 %v53, %v35
  %v57 = vadd.f32 %v54, 1e-05
  %v58 = vadd.f32 %v55, 1e-05
  %v59 = vadd.f32 %v56, 1e-05
  %v60 = vrsqrt.pop %v57
  %v61 = vrsqrt.pop %v58
  %v62 = vrsqrt.pop %v59
  %v63 = vmul.f32 %v39, %v60
  %v64 = vmul.f32 %v40, %v61
  %v65 = vmul.f32 %v41, %v62
  %v66 = vld [vmem:[%s1] sm:$0x1]
  %v68 = vlaneseq
  %v69 = vshrl.u32 %v68, 7
  %v70 = vsub.s32 0, %v69
  %v71 = vrot.slane %v66, %v70
  %v73 = vmul.f32 %v63, %v71
  %v74 = vmul.f32 %v64, %v71
  %v75 = vmul.f32 %v65, %v71
  %v76 = vld [vmem:[%s2] sm:$0x1]
  %v78 = vlaneseq
  %v79 = vshrl.u32 %v78, 7
  %v80 = vsub.s32 0, %v79
  %v81 = vrot.slane %v76, %v80
  %v83 = vadd.f32 %v73, %v81
  %v84 = vadd.f32 %v74, %v81
  %v85 = vadd.f32 %v75, %v81
  %v86 = vpack.c.bf16 %v84, %v83
  %v87 = vpack.c.bf16 %v85, %v85
  %v88 = vld [vmem:[%s3] sm:$0xff]
  %v89 = vld [vmem:[%s3 + $0x8] sm:$0xff]
  %v90 = vld [vmem:[%s3 + $0x10] sm:$0xff]
  %v91 = vld [vmem:[%s3 + $0x18] sm:$0xff]
  %v92 = vld [vmem:[%s3 + $0x20] sm:$0xff]
  %v93 = vld [vmem:[%s3 + $0x28] sm:$0xff]
  %v94 = vld [vmem:[%s3 + $0x30] sm:$0xff]
  %v95 = vld [vmem:[%s3 + $0x38] sm:$0xff]
  %v96 = vld [vmem:[%s4] sm:$0x3]
  %v98 = vlaneseq
  %v99 = vshrl.u32 %v98, 7
  %v100 = vsub.s32 0, %v99
  %v101 = vrot.slane %v96, %v100
  %v102 = vlaneseq
  %v103 = vshrl.u32 %v102, 7
  %v104 = vsub.s32 1, %v103
  %v105 = vrot.slane %v96, %v104
  %v116 = vunpack.c.l.b16 %v88
  %v117 = vunpack.c.h.b16 %v88
  %v118 = vunpack.c.l.b16 %v89
  %v119 = vunpack.c.h.b16 %v89
  %v120 = vunpack.c.l.b16 %v90
  %v121 = vunpack.c.h.b16 %v90
  %v122 = vunpack.c.l.b16 %v91
  %v123 = vunpack.c.h.b16 %v91
  %v124 = vunpack.c.l.b16 %v92
  %v125 = vunpack.c.h.b16 %v92
  %v126 = vunpack.c.l.b16 %v93
  %v127 = vunpack.c.h.b16 %v93
  %v128 = vunpack.c.l.b16 %v94
  %v129 = vunpack.c.h.b16 %v94
  %v130 = vunpack.c.l.b16 %v95
  %v131 = vunpack.c.h.b16 %v95
  %v132 = vpack.c.b16 %v118, %v116
  %v133 = vpack.c.b16 %v119, %v117
  %v134 = vpack.c.b16 %v122, %v120
  %v135 = vpack.c.b16 %v123, %v121
  %v136 = vpack.c.b16 %v126, %v124
  %v137 = vpack.c.b16 %v127, %v125
  %v138 = vpack.c.b16 %v130, %v128
  %v139 = vpack.c.b16 %v131, %v129
  %v149 = vsel %vm24, %v86, 0
  %v152 = vsel %vm24, %v87, 0
  %154 = vmatprep.subr.bf16.mxu0 0
  %155 = vmatpush1.bf16.msra.mxu0 0
  %156 = vmatprep.subr.bf16.mxu0 0
  %157 = vmatpush1.bf16.msra.mxu0 0
  %158 = vmatprep.subr.bf16.mxu0 0
  %159 = vmatpush1.bf16.msra.mxu0 0
  %160 = vmatprep.subr.bf16.mxu0 0
  %161 = vmatpush1.bf16.msra.mxu0 0
  %162 = vmatprep.subr.bf16.mxu0 %v139
  %163 = vmatpush1.bf16.msra.mxu0 %v138
  %164 = vmatprep.subr.bf16.mxu0 %v137
  %165 = vmatpush1.bf16.msra.mxu0 %v136
  %166 = vmatprep.subr.bf16.mxu0 %v135
  %167 = vmatpush1.bf16.msra.mxu0 %v134
  %168 = vmatprep.subr.bf16.mxu0 %v133
  %169 = vmatpush1.bf16.msra.mxu0 %v132
  %170 = vmatprep.subr.bf16.mxu0 0
  %171 = vmatpush2.bf16.msra.mxu0 0
  %172 = vmatprep.subr.bf16.mxu0 0
  %173 = vmatpush2.bf16.msra.mxu0 0
  %174 = vmatprep.subr.bf16.mxu0 0
  %175 = vmatpush2.bf16.msra.mxu0 0
  %176 = vmatprep.subr.bf16.mxu0 0
  %177 = vmatpush2.bf16.msra.mxu0 0
  %178 = vmatprep.subr.bf16.mxu0 0
  %179 = vmatpush2.bf16.msra.mxu0 0
  %180 = vmatprep.subr.bf16.mxu0 0
  %181 = vmatpush2.bf16.msra.mxu0 0
  %182 = vmatprep.subr.bf16.mxu0 0
  %183 = vmatpush2.bf16.msra.mxu0 0
  %184 = vmatprep.subr.bf16.mxu0 0
  %185 = vmatpush2.bf16.msra.mxu0 0
  %186 = vmatprep.mubr.bf16.mxu0 0
  %187 = vmatmul.mubr.bf16.gmra.mxu0 %v149
  %v188 = vpop.f32.mrf.mxu0
  %v189 = vadd.f32 %v101, %v188
  %v190 = vpop.f32.mrf.mxu0
  %v191 = vadd.f32 %v105, %v190
  %v192 = vpop.f32.mrf.mxu0
  %v193 = vadd.f32 %v101, %v192
  %v194 = vpop.f32.mrf.mxu0
  %v195 = vadd.f32 %v105, %v194
  %196 = vmatprep.mubr.bf16.mxu0 0
  %197 = vmatmul.mubr.bf16.gmra.mxu0 %v152
  %v198 = vpop.f32.mrf.mxu0
  %v199 = vadd.f32 %v101, %v198
  %v200 = vpop.f32.mrf.mxu0
  %v201 = vadd.f32 %v105, %v200
  %v202 = vpop.f32.mrf.mxu0
  %v203 = vpop.f32.mrf.mxu0
  %204 = vdwg.mxu0
  %v205 = vpack.c.bf16 %v193, %v189
  %v206 = vpack.c.bf16 %v195, %v191
  %v207 = vpack.c.bf16 %v199, %v199
  %v208 = vpack.c.bf16 %v201, %v201
  %v213 = vunpack.c.l.b16 %v205
  %v214 = vunpack.c.l.b16 %v206
  %v215 = vunpack.c.h.b16 %v205
  %v216 = vunpack.c.h.b16 %v206
  %v217 = vunpack.c.l.b16 %v207
  %v218 = vunpack.c.l.b16 %v208
  %v219 = vpack.c.b16 %v214, %v213
  %v220 = vpack.c.b16 %v216, %v215
  %v221 = vpack.c.b16 %v218, %v217
  %vm225 = vcmask 1043456
  %vm226 = vcmask 523268
  %vm227 = vmor %vm226, %vm225
  %228 = vst.msk [vmem:[%s5] sm:$0xff] %vm227, %v219
  %229 = vst.msk [vmem:[%s5 + $0x8] sm:$0xff] %vm227, %v220
  %vm230 = vcmask 1041408
  %vm231 = vcmask 521220
  %vm232 = vmor %vm231, %vm230
  %233 = vst.msk [vmem:[%s5 + $0x10] sm:$0x33] %vm232, %v221
  // Predicated region
  $region22: #{_lambda_.16} parent=0 // pred_check
    _
  $region23: #{_lambda_.16} parent=0 // pred_check_branch
    %235 = sbr.rel (0) target = $region25
  $region24: #{_lambda_.16} parent=0 // pred_region
    _
  $region25: #{_lambda_.16} parent=0 // pred_fallthru
    _
  // Predicated region
  $region26: #{_lambda_.16} parent=0 // pred_check
    _
  $region27: #{_lambda_.16} parent=0 // pred_check_branch
    %237 = sbr.rel (0) target = $region29
  $region28: #{_lambda_.16} parent=0 // pred_region
    _
  $region29: #{_lambda_.16} parent=0 // pred_fallthru
    _

// kernel: _lambda_.17
$region0: #{_lambda_.17}
  #allocation0 [shape = 'u32[]', space=smem, size = 0x4, offset = 0x4, fixed_abs, tag = 'smem constant byte address 0x4 - core index']
  #allocation1 [shape = 'u32[144,128]{1,0:T(1,128)}', space=vmem, size = 0x12000, scoped, tag = 'internal scratch']
  #allocation2 [shape = 'f32[4,5,1]{2,1,0:T(8,128)}', space=vmem, size = 0x4000, scoped, tag = 'scratch operand']
  #allocation3 [shape = 'f32[4,5,1]{2,1,0:T(8,128)}', space=vmem, size = 0x4000, scoped, tag = 'scratch operand']
  #allocation4 [shape = 'f32[4,5,16]{2,1,0:T(8,128)}', space=vmem, size = 0x4000, scoped, tag = 'scratch operand']
  %s0 = inlined_call_operand.vmem [shape: bf16[4,5,192], index: 0, kind: input, shape index: {}, may-alias: {0,1}]
  %s1 = inlined_call_operand.vmem [shape: bf16[4,5,192], index: 1, kind: input, shape index: {}, may-alias: {0,1}]
  %s2 = inlined_call_operand.vmem [shape: bf16[4,5,64], index: 2, kind: output, shape index: {}]
  %s3 = sld [smem:[#allocation0]]
  $region49: #{_lambda_.17} parent=0
    _
  %s5 = ssub.s32 1, %s3
  %s6 = scalar_select 0, %s5, %s3
  loop: start=0, step=1, limit=6
  $region2: #{_lambda_.17} parent=0 // loop_pre_header
    _
  $region3: #{_lambda_.17} parent=0 // loop_header
    %s8 = sphi 0, %s12
    %p9 = scmp.ge.s32.totalorder %s8, 6
    %s15 = sphi 0, %s27
    %s16 = sphi 0, %s23
    %s17 = sphi 0, %s15
    %s18 = sphi 0, %s16
    %s19 = sphi 0, %s17
    %s20 = sphi 0, %s18
    %s30 = sphi 0, %s32
    %s33 = sphi 0, %s30
    %s34 = sphi 0, %s33
    %s50 = sphi 0, %s34
    %s58 = sphi 0, %s60
    %s61 = sphi 0, %s58
    %s62 = sphi 0, %s61
    %s78 = sphi 0, %s62
    %s84 = sphi 0, %s86
    %s87 = sphi 0, %s84
    %s88 = sphi 0, %s87
    %s104 = sphi 0, %s88
  $region4: #{_lambda_.17} parent=0 // loop_header_branch
    %11 = sbr.rel (%p9) target = $region8
  $region5: #{_lambda_.17} parent=0 // loop_body
    %s13 = ssub.s32 %s8, 1
    %s14 = ssub.s32 %s8, 2
    %s21 = sadd.s32 1, %s16
    %p22 = scmp.ge.s32.totalorder %s21, 1
    %s23 = scalar_select %p22, 0, %s21
    %s24 = sadd.s32 1, %s15
    %s25 = scalar_select %p22, %s24, %s15
    %p26 = scmp.ge.s32.totalorder %s25, 4
    %s27 = scalar_select %p26, 0, %s25
    %s28 = ssub.s32 %s15, %s27
    %p29 = scmp.eq.s32.totalorder %s28, 0
    %s31 = sadd.s32 %s30, 1
    %s32 = scalar_select %p29, %s30, %s31
    %p35 = pneg %p29
    %p36 = scmp.eq.s32.totalorder %s8, 3
    %p37 = por %p35, %p36
    %p38 = scmp.ne.s32.totalorder %s30, %s33
    %p39 = scmp.eq.s32.totalorder %s8, 0
    %p40 = por %p38, %p39
    %p41 = scmp.ne.s32.totalorder %s30, %s33
    %p42 = scmp.eq.s32.totalorder %s13, 3
    %p43 = por %p41, %p42
    %p44 = scmp.ne.s32.totalorder %s33, %s34
    %p45 = scmp.eq.s32.totalorder %s13, 0
    %p46 = por %p44, %p45
    %p47 = scmp.ne.s32.totalorder %s33, %s34
    %p48 = scmp.eq.s32.totalorder %s14, 3
    %p49 = por %p47, %p48
    %p51 = scmp.ne.s32.totalorder %s34, %s50
    %p52 = scmp.eq.s32.totalorder %s14, 0
    %p53 = por %p51, %p52
    %s54 = ssub.s32 %s15, %s27
    %s55 = ssub.s32 %s16, %s23
    %s56 = sor.u32 %s54, %s55
    %p57 = scmp.eq.s32.totalorder %s56, 0
    %s59 = sadd.s32 %s58, 1
    %s60 = scalar_select %p57, %s58, %s59
    %p63 = pneg %p57
    %p64 = scmp.eq.s32.totalorder %s8, 3
    %p65 = por %p63, %p64
    %p66 = scmp.ne.s32.totalorder %s58, %s61
    %p67 = scmp.eq.s32.totalorder %s8, 0
    %p68 = por %p66, %p67
    %p69 = scmp.ne.s32.totalorder %s58, %s61
    %p70 = scmp.eq.s32.totalorder %s13, 3
    %p71 = por %p69, %p70
    %p72 = scmp.ne.s32.totalorder %s61, %s62
    %p73 = scmp.eq.s32.totalorder %s13, 0
    %p74 = por %p72, %p73
    %p75 = scmp.ne.s32.totalorder %s61, %s62
    %p76 = scmp.eq.s32.totalorder %s14, 3
    %p77 = por %p75, %p76
    %p79 = scmp.ne.s32.totalorder %s62, %s78
    %p80 = scmp.eq.s32.totalorder %s14, 0
    %p81 = por %p79, %p80
    %s82 = ssub.s32 %s15, %s27
    %p83 = scmp.eq.s32.totalorder %s82, 0
    %s85 = sadd.s32 %s84, 1
    %s86 = scalar_select %p83, %s84, %s85
    %p89 = pneg %p83
    %p90 = scmp.eq.s32.totalorder %s8, 3
    %p91 = por %p89, %p90
    %p92 = scmp.ne.s32.totalorder %s84, %s87
    %p93 = scmp.eq.s32.totalorder %s8, 0
    %p94 = por %p92, %p93
    %p95 = scmp.ne.s32.totalorder %s84, %s87
    %p96 = scmp.eq.s32.totalorder %s13, 3
    %p97 = por %p95, %p96
    %p98 = scmp.ne.s32.totalorder %s87, %s88
    %p99 = scmp.eq.s32.totalorder %s13, 0
    %p100 = por %p98, %p99
    %p101 = scmp.ne.s32.totalorder %s87, %s88
    %p102 = scmp.eq.s32.totalorder %s14, 3
    %p103 = por %p101, %p102
    %p105 = scmp.ne.s32.totalorder %s88, %s104
    %p106 = scmp.eq.s32.totalorder %s14, 0
    %p107 = por %p105, %p106
    %p108 = scmp.le.s32.totalorder 1, %s8
    %p109 = scmp.lt.s32.totalorder %s8, 5
    %p110 = pnand %p108, %p109
    %p111 = pneg %p110
    // Predicated region
    $region9: #{_lambda_.17} parent=5 // pred_check
      _
    $region10: #{_lambda_.17} parent=5 // pred_check_branch
      %113 = sbr.rel (%p110) target = $region12
    $region11: #{_lambda_.17} parent=5 // pred_region
      %s114 = ssub.s32 %s8, 1
    $region12: #{_lambda_.17} parent=5 // pred_fallthru
      _
    %p115 = scmp.lt.s32.totalorder %s8, 4
    // Predicated region
    $region13: #{_lambda_.17} parent=5 // pred_check
      %p116 = pneg %p115
    $region14: #{_lambda_.17} parent=5 // pred_check_branch
      %118 = sbr.rel (%p116) target = $region16
    $region15: #{_lambda_.17} parent=5 // pred_region
      // Predicated region
      $region17: #{_lambda_.17} parent=15 // pred_check
        %p119 = pneg %p40
      $region18: #{_lambda_.17} parent=15 // pred_check_branch
        %121 = sbr.rel (%p119) target = $region20
      $region19: #{_lambda_.17} parent=15 // pred_region
        %p122 = scmp.lt.s32.totalorder %s15, 3
        %s123 = scalar_select %p122, %s15, 3
        %s124 = smul.addr %s123, 2
        %s125 = smul.addr %s124, 4
        %s126 = scalar_lea.vmem %s0, %s125
      $region20: #{_lambda_.17} parent=15 // pred_fallthru
        _
      // Predicated region
      $region21: #{_lambda_.17} parent=15 // pred_check
        %p127 = pneg %p68
      $region22: #{_lambda_.17} parent=15 // pred_check_branch
        %129 = sbr.rel (%p127) target = $region24
      $region23: #{_lambda_.17} parent=15 // pred_region
        %p130 = scmp.lt.s32.totalorder %s15, 3
        %s131 = scalar_select %p130, %s15, 3
        %p132 = scmp.lt.s32.totalorder %s16, 0
        %s133 = scalar_select %p132, %s16, 0
        %s134 = smul.addr %s133, 2
        %s135 = smul.addr %s131, 2
        %s136 = sadd.s32 %s134, %s135
        %s137 = smul.addr %s136, 4
        %s138 = scalar_lea.vmem %s1, %s137
      $region24: #{_lambda_.17} parent=15 // pred_fallthru
        _
    $region16: #{_lambda_.17} parent=5 // pred_fallthru
      _
    %p139 = scmp.le.s32.totalorder 1, %s8
    %p140 = scmp.lt.s32.totalorder %s8, 5
    %p141 = pnand %p139, %p140
    %p142 = pneg %p141
    // Predicated region
    $region25: #{_lambda_.17} parent=5 // pred_check
      _
    $region26: #{_lambda_.17} parent=5 // pred_check_branch
      %144 = sbr.rel (%p141) target = $region28
    $region27: #{_lambda_.17} parent=5 // pred_region
      %s145 = ssub.s32 %s8, 1
      %p146 = scmp.lt.s32.totalorder %s17, 3
      %s147 = scalar_select %p146, %s17, 3
      %s148 = smul.addr %s147, 2
      %s149 = smul.addr %s148, 4
      %s150 = scalar_lea.vmem %s0, %s149
      %p151 = pneg %p46
      %p152 = pneg %p43
      %p153 = scmp.lt.s32.totalorder %s17, 3
      %s154 = scalar_select %p153, %s17, 3
      %p155 = scmp.lt.s32.totalorder %s18, 0
      %s156 = scalar_select %p155, %s18, 0
      %s157 = smul.addr %s156, 2
      %s158 = smul.addr %s154, 2
      %s159 = sadd.s32 %s157, %s158
      %s160 = smul.addr %s159, 4
      %s161 = scalar_lea.vmem %s1, %s160
      %p162 = pneg %p74
      %p163 = pneg %p71
      %p164 = pneg %p100
      %p165 = pneg %p97
      %p166 = scmp.lt.s32.totalorder %s17, 3
      %s167 = scalar_select %p166, %s17, 3
      %s168 = smul.addr %s167, 4
      %s169 = scalar_lea.vmem %s2, %s168
      %p170 = scmp.lt.s32.totalorder %s17, 3
      %s171 = scalar_select %p170, %s17, 3
      %s172 = smul.addr %s171, 2
      %s173 = smul.addr %s172, 4
      %s174 = scalar_lea.vmem %s0, %s173
      %p175 = scmp.lt.s32.totalorder %s17, 3
      %s176 = scalar_select %p175, %s17, 3
      %p177 = scmp.lt.s32.totalorder %s18, 0
      %s178 = scalar_select %p177, %s18, 0
      %s179 = smul.addr %s178, 2
      %s180 = smul.addr %s176, 2
      %s181 = sadd.s32 %s179, %s180
      %s182 = smul.addr %s181, 4
      %s183 = scalar_lea.vmem %s1, %s182
      %p184 = scmp.lt.s32.totalorder %s17, 3
      %s185 = scalar_select %p184, %s17, 3
      %s186 = smul.addr %s185, 4
      %s187 = scalar_lea.vmem %s2, %s186
      %p189 = scmp.eq.s32.totalorder %s18, 0
      // Predicated region
      $region29: #{_lambda_.17} parent=27 // pred_check
        %p190 = pneg %p189
      $region30: #{_lambda_.17} parent=27 // pred_check_branch
        %192 = sbr.rel (%p190) target = $region32
      $region31: #{_lambda_.17} parent=27 // pred_region
        %vm193 = vcmask 4096
        %194 = vst.msk [vmem:[#allocation2] sm:$0x1f] %vm193, -1e+30
        %195 = vst.msk [vmem:[#allocation2 + $0x8] sm:$0x1f] %vm193, -1e+30
        %196 = vst.msk [vmem:[#allocation2 + $0x10] sm:$0x1f] %vm193, -1e+30
        %197 = vst.msk [vmem:[#allocation2 + $0x18] sm:$0x1f] %vm193, -1e+30
        %198 = vst.msk [vmem:[#allocation3] sm:$0x1f] %vm193, 0.0
        %199 = vst.msk [vmem:[#allocation3 + $0x8] sm:$0x1f] %vm193, 0.0
        %200 = vst.msk [vmem:[#allocation3 + $0x10] sm:$0x1f] %vm193, 0.0
        %201 = vst.msk [vmem:[#allocation3 + $0x18] sm:$0x1f] %vm193, 0.0
        %vm202 = vcmask 126976
        %203 = vst.msk [vmem:[#allocation4] sm:$0x1f] %vm202, 0.0
        %204 = vst.msk [vmem:[#allocation4 + $0x8] sm:$0x1f] %vm202, 0.0
        %205 = vst.msk [vmem:[#allocation4 + $0x10] sm:$0x1f] %vm202, 0.0
        %206 = vst.msk [vmem:[#allocation4 + $0x18] sm:$0x1f] %vm202, 0.0
      $region32: #{_lambda_.17} parent=27 // pred_fallthru
        _
      %v207 = vld [vmem:[%s174] sm:$0x7]
      %v208 = vld [vmem:[%s183] sm:$0x7]
      %v209 = vld [vmem:[%s183 + $0x4] sm:$0x7]
      %v211 = vunpack.c.l.b16 %v208
      %v212 = vpack.c.b16 %v211, %v211
      %213 = vrot.lane.b32.xlu0 %v212, 64
      %v214 = vpop.permute.xlu0 %213
      %vm215 = vcmask 130048
      %v217 = vsel %vm215, %v207, 0
      %v220 = vsel %vm215, %v214, 0
      %222 = vmatprep.subr.bf16.mxu0 0
      %223 = vmatpush1.bf16.xpose.msra.mxu0 0
      %224 = vmatprep.subr.bf16.mxu0 0
      %225 = vmatpush1.bf16.xpose.msra.mxu0 0
      %226 = vmatprep.subr.bf16.mxu0 0
      %227 = vmatpush1.bf16.xpose.msra.mxu0 0
      %228 = vmatprep.subr.bf16.mxu0 0
      %229 = vmatpush1.bf16.xpose.msra.mxu0 0
      %230 = vmatprep.subr.bf16.mxu0 0
      %231 = vmatpush1.bf16.xpose.msra.mxu0 0
      %232 = vmatprep.subr.bf16.mxu0 0
      %233 = vmatpush1.bf16.xpose.msra.mxu0 0
      %234 = vmatprep.subr.bf16.mxu0 0
      %235 = vmatpush1.bf16.xpose.msra.mxu0 0
      %236 = vmatprep.subr.bf16.mxu0 0
      %237 = vmatpush1.bf16.xpose.msra.mxu0 %v220
      %238 = vmatprep.subr.bf16.mxu0 0
      %239 = vmatpush2.bf16.xpose.msra.mxu0 0
      %240 = vmatprep.subr.bf16.mxu0 0
      %241 = vmatpush2.bf16.xpose.msra.mxu0 0
      %242 = vmatprep.subr.bf16.mxu0 0
      %243 = vmatpush2.bf16.xpose.msra.mxu0 0
      %244 = vmatprep.subr.bf16.mxu0 0
      %245 = vmatpush2.bf16.xpose.msra.mxu0 0
      %246 = vmatprep.subr.bf16.mxu0 0
      %247 = vmatpush2.bf16.xpose.msra.mxu0 0
      %248 = vmatprep.subr.bf16.mxu0 0
      %249 = vmatpush2.bf16.xpose.msra.mxu0 0
      %250 = vmatprep.subr.bf16.mxu0 0
      %251 = vmatpush2.bf16.xpose.msra.mxu0 0
      %252 = vmatprep.subr.bf16.mxu0 0
      %253 = vmatpush2.bf16.xpose.msra.mxu0 0
      %254 = vmatprep.mubr.bf16.mxu0 0
      %255 = vmatmul.mubr.bf16.gmra.mxu0 %v217
      %v256 = vpop.f32.mrf.mxu0
      %v257 = vadd.f32 0.0, %v256
      %v258 = vpop.f32.mrf.mxu0
      %v259 = vpop.f32.mrf.mxu0
      %v260 = vpop.f32.mrf.mxu0
      %261 = vdwg.mxu0
      %v262 = vld [vmem:[#allocation2] sm:$0x1f]
      %vm263 = vcmask 36864
      %v264 = vsel %vm263, %v257, -inf
      %265 = vmax.xlane.f32.xlu0 %v264
      %v266 = vpop.xlane.xlu0 %265
      %v267 = vmax.f32 %v262, %v266
      %v268 = vsub.f32 %v262, %v267
      %v269 = vmul.f32 %v268, 1.442695
      %v270 = vpow.pop %v269
      %272 = vset.pattern.permute.xlu0 0
      %273 = vperm.xlu0 %272, %v267
      %v274 = vpop.permute.xlu0 %273
      %v276 = vsub.f32 %v257, %v274
      %v277 = vmul.f32 %v276, 1.442695
      %v278 = vpow.pop %v277
      %v279 = vld [vmem:[#allocation3] sm:$0x1f]
      %v280 = vmul.f32 %v270, %v279
      %v281 = vsel %vm263, %v278, 0.0
      %282 = vadd.xlane.f32.xlu0 %v281
      %v283 = vpop.xlane.xlu0 %282
      %v284 = vadd.f32 %v280, %v283
      %vm285 = vcmask 4096
      %286 = vst.msk [vmem:[#allocation3] sm:$0x1f] %vm285, %v284
      %v287 = vpack.c.bf16 %v278, %v278
      %vm288 = vcmask 39936
      %v290 = vsel %vm288, %v287, 0
      %vm292 = vcmask 1041408
      %vm293 = vcmask 1042432
      %v294 = vsel %vm292, 4294967295, 65535
      %v295 = vsel %vm293, %v294, 0
      %v297 = vand.u32 %v209, %v295
      %299 = vmatprep.subr.bf16.mxu0 0
      %300 = vmatpush1.bf16.msra.mxu0 0
      %301 = vmatprep.subr.bf16.mxu0 0
      %302 = vmatpush1.bf16.msra.mxu0 0
      %303 = vmatprep.subr.bf16.mxu0 0
      %304 = vmatpush1.bf16.msra.mxu0 0
      %305 = vmatprep.subr.bf16.mxu0 0
      %306 = vmatpush1.bf16.msra.mxu0 0
      %307 = vmatprep.subr.bf16.mxu0 0
      %308 = vmatpush1.bf16.msra.mxu0 0
      %309 = vmatprep.subr.bf16.mxu0 0
      %310 = vmatpush1.bf16.msra.mxu0 0
      %311 = vmatprep.subr.bf16.mxu0 0
      %312 = vmatpush1.bf16.msra.mxu0 0
      %313 = vmatprep.subr.bf16.mxu0 0
      %314 = vmatpush1.bf16.msra.mxu0 %v297
      %315 = vmatprep.subr.bf16.mxu0 0
      %316 = vmatpush2.bf16.msra.mxu0 0
      %317 = vmatprep.subr.bf16.mxu0 0
      %318 = vmatpush2.bf16.msra.mxu0 0
      %319 = vmatprep.subr.bf16.mxu0 0
      %320 = vmatpush2.bf16.msra.mxu0 0
      %321 = vmatprep.subr.bf16.mxu0 0
      %322 = vmatpush2.bf16.msra.mxu0 0
      %323 = vmatprep.subr.bf16.mxu0 0
      %324 = vmatpush2.bf16.msra.mxu0 0
      %325 = vmatprep.subr.bf16.mxu0 0
      %326 = vmatpush2.bf16.msra.mxu0 0
      %327 = vmatprep.subr.bf16.mxu0 0
      %328 = vmatpush2.bf16.msra.mxu0 0
      %329 = vmatprep.subr.bf16.mxu0 0
      %330 = vmatpush2.bf16.msra.mxu0 0
      %331 = vmatprep.mubr.bf16.mxu0 0
      %332 = vmatmul.mubr.bf16.gmra.mxu0 %v290
      %v333 = vpop.f32.mrf.mxu0
      %v334 = vadd.f32 0.0, %v333
      %v335 = vpop.f32.mrf.mxu0
      %v336 = vpop.f32.mrf.mxu0
      %v337 = vpop.f32.mrf.mxu0
      %338 = vdwg.mxu0
      %v339 = vld [vmem:[#allocation4] sm:$0x1f]
      %341 = vset.pattern.permute.xlu0 0
      %342 = vperm.xlu0 %341, %v270
      %v343 = vpop.permute.xlu0 %342
      %v345 = vmul.f32 %v343, %v339
      %v346 = vadd.f32 %v345, %v334
      %vm347 = vcmask 126976
      %348 = vst.msk [vmem:[#allocation4] sm:$0x1f] %vm347, %v346
      %349 = vst.msk [vmem:[#allocation2] sm:$0x1f] %vm285, %v267
      %v350 = vld [vmem:[%s174] sm:$0x7]
      %v351 = vld [vmem:[%s183] sm:$0x7]
      %v352 = vld [vmem:[%s183 + $0x4] sm:$0x7]
      %v354 = vunpack.c.l.b16 %v350
      %v355 = vpack.c.b16 %v354, %v354
      %356 = vrot.lane.b32.xlu0 %v355, 112
      %v357 = vpop.permute.xlu0 %356
      %v359 = vunpack.c.l.b16 %v351
      %v360 = vpack.c.b16 %v359, %v359
      %361 = vrot.lane.b32.xlu0 %v360, 48
      %v362 = vpop.permute.xlu0 %361
      %v364 = vsel %vm215, %v357, 0
      %v367 = vsel %vm215, %v362, 0
      %369 = vmatprep.subr.bf16.mxu0 0
      %370 = vmatpush1.bf16.xpose.msra.mxu0 0
      %371 = vmatprep.subr.bf16.mxu0 0
      %372 = vmatpush1.bf16.xpose.msra.mxu0 0
      %373 = vmatprep.subr.bf16.mxu0 0
      %374 = vmatpush1.bf16.xpose.msra.mxu0 0
      %375 = vmatprep.subr.bf16.mxu0 0
      %376 = vmatpush1.bf16.xpose.msra.mxu0 0
      %377 = vmatprep.subr.bf16.mxu0 0
      %378 = vmatpush1.bf16.xpose.msra.mxu0 0
      %379 = vmatprep.subr.bf16.mxu0 0
      %380 = vmatpush1.bf16.xpose.msra.mxu0 0
      %381 = vmatprep.subr.bf16.mxu0 0
      %382 = vmatpush1.bf16.xpose.msra.mxu0 0
      %383 = vmatprep.subr.bf16.mxu0 0
      %384 = vmatpush1.bf16.xpose.msra.mxu0 %v367
      %385 = vmatprep.subr.bf16.mxu0 0
      %386 = vmatpush2.bf16.xpose.msra.mxu0 0
      %387 = vmatprep.subr.bf16.mxu0 0
      %388 = vmatpush2.bf16.xpose.msra.mxu0 0
      %389 = vmatprep.subr.bf16.mxu0 0
      %390 = vmatpush2.bf16.xpose.msra.mxu0 0
      %391 = vmatprep.subr.bf16.mxu0 0
      %392 = vmatpush2.bf16.xpose.msra.mxu0 0
      %393 = vmatprep.subr.bf16.mxu0 0
      %394 = vmatpush2.bf16.xpose.msra.mxu0 0
      %395 = vmatprep.subr.bf16.mxu0 0
      %396 = vmatpush2.bf16.xpose.msra.mxu0 0
      %397 = vmatprep.subr.bf16.mxu0 0
      %398 = vmatpush2.bf16.xpose.msra.mxu0 0
      %399 = vmatprep.subr.bf16.mxu0 0
      %400 = vmatpush2.bf16.xpose.msra.mxu0 0
      %401 = vmatprep.mubr.bf16.mxu0 0
      %402 = vmatmul.mubr.bf16.gmra.mxu0 %v364
      %v403 = vpop.f32.mrf.mxu0
      %v404 = vadd.f32 0.0, %v403
      %v405 = vpop.f32.mrf.mxu0
      %v406 = vpop.f32.mrf.mxu0
      %v407 = vpop.f32.mrf.mxu0
      %408 = vdwg.mxu0
      %s409 = scalar_lea.vmem [#allocation2], 8
      %v410 = vld [vmem:[%s409] sm:$0x1f]
      %v411 = vsel %vm263, %v404, -inf
      %412 = vmax.xlane.f32.xlu0 %v411
      %v413 = vpop.xlane.xlu0 %412
      %v414 = vmax.f32 %v410, %v413
      %v415 = vsub.f32 %v410, %v414
      %v416 = vmul.f32 %v415, 1.442695
      %v417 = vpow.pop %v416
      %419 = vset.pattern.permute.xlu0 0
      %420 = vperm.xlu0 %419, %v414
      %v421 = vpop.permute.xlu0 %420
      %v423 = vsub.f32 %v404, %v421
      %v424 = vmul.f32 %v423, 1.442695
      %v425 = vpow.pop %v424
      %s426 = scalar_lea.vmem [#allocation3], 8
      %v427 = vld [vmem:[%s426] sm:$0x1f]
      %v428 = vmul.f32 %v417, %v427
      %v429 = vsel %vm263, %v425, 0.0
      %430 = vadd.xlane.f32.xlu0 %v429
      %v431 = vpop.xlane.xlu0 %430
      %v432 = vadd.f32 %v428, %v431
      %433 = vst.msk [vmem:[%s426] sm:$0x1f] %vm285, %v432
      %v434 = vpack.c.bf16 %v425, %v425
      %v436 = vunpack.c.l.b16 %v352
      %v437 = vpack.c.b16 %v436, %v436
      %438 = vrot.lane.b32.xlu0 %v437, 112
      %v439 = vpop.permute.xlu0 %438
      %v441 = vsel %vm288, %v434, 0
      %v444 = vand.u32 %v439, %v295
      %446 = vmatprep.subr.bf16.mxu0 0
      %447 = vmatpush1.bf16.msra.mxu0 0
      %448 = vmatprep.subr.bf16.mxu0 0
      %449 = vmatpush1.bf16.msra.mxu0 0
      %450 = vmatprep.subr.bf16.mxu0 0
      %451 = vmatpush1.bf16.msra.mxu0 0
      %452 = vmatprep.subr.bf16.mxu0 0
      %453 = vmatpush1.bf16.msra.mxu0 0
      %454 = vmatprep.subr.bf16.mxu0 0
      %455 = vmatpush1.bf16.msra.mxu0 0
      %456 = vmatprep.subr.bf16.mxu0 0
      %457 = vmatpush1.bf16.msra.mxu0 0
      %458 = vmatprep.subr.bf16.mxu0 0
      %459 = vmatpush1.bf16.msra.mxu0 0
      %460 = vmatprep.subr.bf16.mxu0 0
      %461 = vmatpush1.bf16.msra.mxu0 %v444
      %462 = vmatprep.subr.bf16.mxu0 0
      %463 = vmatpush2.bf16.msra.mxu0 0
      %464 = vmatprep.subr.bf16.mxu0 0
      %465 = vmatpush2.bf16.msra.mxu0 0
      %466 = vmatprep.subr.bf16.mxu0 0
      %467 = vmatpush2.bf16.msra.mxu0 0
      %468 = vmatprep.subr.bf16.mxu0 0
      %469 = vmatpush2.bf16.msra.mxu0 0
      %470 = vmatprep.subr.bf16.mxu0 0
      %471 = vmatpush2.bf16.msra.mxu0 0
      %472 = vmatprep.subr.bf16.mxu0 0
      %473 = vmatpush2.bf16.msra.mxu0 0
      %474 = vmatprep.subr.bf16.mxu0 0
      %475 = vmatpush2.bf16.msra.mxu0 0
      %476 = vmatprep.subr.bf16.mxu0 0
      %477 = vmatpush2.bf16.msra.mxu0 0
      %478 = vmatprep.mubr.bf16.mxu0 0
      %479 = vmatmul.mubr.bf16.gmra.mxu0 %v441
      %v480 = vpop.f32.mrf.mxu0
      %v481 = vadd.f32 0.0, %v480
      %v482 = vpop.f32.mrf.mxu0
      %v483 = vpop.f32.mrf.mxu0
      %v484 = vpop.f32.mrf.mxu0
      %485 = vdwg.mxu0
      %s486 = scalar_lea.vmem [#allocation4], 8
      %v487 = vld [vmem:[%s486] sm:$0x1f]
      %489 = vset.pattern.permute.xlu0 0
      %490 = vperm.xlu0 %489, %v417
      %v491 = vpop.permute.xlu0 %490
      %v493 = vmul.f32 %v491, %v487
      %v494 = vadd.f32 %v493, %v481
      %495 = vst.msk [vmem:[%s486] sm:$0x1f] %vm347, %v494
      %496 = vst.msk [vmem:[%s409] sm:$0x1f] %vm285, %v414
      %v497 = vld [vmem:[%s174] sm:$0x7]
      %v498 = vld [vmem:[%s183] sm:$0x7]
      %v499 = vld [vmem:[%s183 + $0x4] sm:$0x7]
      %v501 = vunpack.c.l.b16 %v497
      %v502 = vpack.c.b16 %v501, %v501
      %503 = vrot.lane.b32.xlu0 %v502, 96
      %v504 = vpop.permute.xlu0 %503
      %v506 = vunpack.c.l.b16 %v498
      %v507 = vpack.c.b16 %v506, %v506
      %508 = vrot.lane.b32.xlu0 %v507, 32
      %v509 = vpop.permute.xlu0 %508
      %v511 = vsel %vm215, %v504, 0
      %v514 = vsel %vm215, %v509, 0
      %516 = vmatprep.subr.bf16.mxu0 0
      %517 = vmatpush1.bf16.xpose.msra.mxu0 0
      %518 = vmatprep.subr.bf16.mxu0 0
      %519 = vmatpush1.bf16.xpose.msra.mxu0 0
      %520 = vmatprep.subr.bf16.mxu0 0
      %521 = vmatpush1.bf16.xpose.msra.mxu0 0
      %522 = vmatprep.subr.bf16.mxu0 0
      %523 = vmatpush1.bf16.xpose.msra.mxu0 0
      %524 = vmatprep.subr.bf16.mxu0 0
      %525 = vmatpush1.bf16.xpose.msra.mxu0 0
      %526 = vmatprep.subr.bf16.mxu0 0
      %527 = vmatpush1.bf16.xpose.msra.mxu0 0
      %528 = vmatprep.subr.bf16.mxu0 0
      %529 = vmatpush1.bf16.xpose.msra.mxu0 0
      %530 = vmatprep.subr.bf16.mxu0 0
      %531 = vmatpush1.bf16.xpose.msra.mxu0 %v514
      %532 = vmatprep.subr.bf16.mxu0 0
      %533 = vmatpush2.bf16.xpose.msra.mxu0 0
      %534 = vmatprep.subr.bf16.mxu0 0
      %535 = vmatpush2.bf16.xpose.msra.mxu0 0
      %536 = vmatprep.subr.bf16.mxu0 0
      %537 = vmatpush2.bf16.xpose.msra.mxu0 0
      %538 = vmatprep.subr.bf16.mxu0 0
      %539 = vmatpush2.bf16.xpose.msra.mxu0 0
      %540 = vmatprep.subr.bf16.mxu0 0
      %541 = vmatpush2.bf16.xpose.msra.mxu0 0
      %542 = vmatprep.subr.bf16.mxu0 0
      %543 = vmatpush2.bf16.xpose.msra.mxu0 0
      %544 = vmatprep.subr.bf16.mxu0 0
      %545 = vmatpush2.bf16.xpose.msra.mxu0 0
      %546 = vmatprep.subr.bf16.mxu0 0
      %547 = vmatpush2.bf16.xpose.msra.mxu0 0
      %548 = vmatprep.mubr.bf16.mxu0 0
      %549 = vmatmul.mubr.bf16.gmra.mxu0 %v511
      %v550 = vpop.f32.mrf.mxu0
      %v551 = vadd.f32 0.0, %v550
      %v552 = vpop.f32.mrf.mxu0
      %v553 = vpop.f32.mrf.mxu0
      %v554 = vpop.f32.mrf.mxu0
      %555 = vdwg.mxu0
      %s556 = scalar_lea.vmem [#allocation2], 16
      %v557 = vld [vmem:[%s556] sm:$0x1f]
      %v558 = vsel %vm263, %v551, -inf
      %559 = vmax.xlane.f32.xlu0 %v558
      %v560 = vpop.xlane.xlu0 %559
      %v561 = vmax.f32 %v557, %v560
      %v562 = vsub.f32 %v557, %v561
      %v563 = vmul.f32 %v562, 1.442695
      %v564 = vpow.pop %v563
      %566 = vset.pattern.permute.xlu0 0
      %567 = vperm.xlu0 %566, %v561
      %v568 = vpop.permute.xlu0 %567
      %v570 = vsub.f32 %v551, %v568
      %v571 = vmul.f32 %v570, 1.442695
      %v572 = vpow.pop %v571
      %s573 = scalar_lea.vmem [#allocation3], 16
      %v574 = vld [vmem:[%s573] sm:$0x1f]
      %v575 = vmul.f32 %v564, %v574
      %v576 = vsel %vm263, %v572, 0.0
      %577 = vadd.xlane.f32.xlu0 %v576
      %v578 = vpop.xlane.xlu0 %577
      %v579 = vadd.f32 %v575, %v578
      %580 = vst.msk [vmem:[%s573] sm:$0x1f] %vm285, %v579
      %v581 = vpack.c.bf16 %v572, %v572
      %v583 = vunpack.c.l.b16 %v499
      %v584 = vpack.c.b16 %v583, %v583
      %585 = vrot.lane.b32.xlu0 %v584, 96
      %v586 = vpop.permute.xlu0 %585
      %v588 = vsel %vm288, %v581, 0
      %v591 = vand.u32 %v586, %v295
      %593 = vmatprep.subr.bf16.mxu0 0
      %594 = vmatpush1.bf16.msra.mxu0 0
      %595 = vmatprep.subr.bf16.mxu0 0
      %596 = vmatpush1.bf16.msra.mxu0 0
      %597 = vmatprep.subr.bf16.mxu0 0
      %598 = vmatpush1.bf16.msra.mxu0 0
      %599 = vmatprep.subr.bf16.mxu0 0
      %600 = vmatpush1.bf16.msra.mxu0 0
      %601 = vmatprep.subr.bf16.mxu0 0
      %602 = vmatpush1.bf16.msra.mxu0 0
      %603 = vmatprep.subr.bf16.mxu0 0
      %604 = vmatpush1.bf16.msra.mxu0 0
      %605 = vmatprep.subr.bf16.mxu0 0
      %606 = vmatpush1.bf16.msra.mxu0 0
      %607 = vmatprep.subr.bf16.mxu0 0
      %608 = vmatpush1.bf16.msra.mxu0 %v591
      %609 = vmatprep.subr.bf16.mxu0 0
      %610 = vmatpush2.bf16.msra.mxu0 0
      %611 = vmatprep.subr.bf16.mxu0 0
      %612 = vmatpush2.bf16.msra.mxu0 0
      %613 = vmatprep.subr.bf16.mxu0 0
      %614 = vmatpush2.bf16.msra.mxu0 0
      %615 = vmatprep.subr.bf16.mxu0 0
      %616 = vmatpush2.bf16.msra.mxu0 0
      %617 = vmatprep.subr.bf16.mxu0 0
      %618 = vmatpush2.bf16.msra.mxu0 0
      %619 = vmatprep.subr.bf16.mxu0 0
      %620 = vmatpush2.bf16.msra.mxu0 0
      %621 = vmatprep.subr.bf16.mxu0 0
      %622 = vmatpush2.bf16.msra.mxu0 0
      %623 = vmatprep.subr.bf16.mxu0 0
      %624 = vmatpush2.bf16.msra.mxu0 0
      %625 = vmatprep.mubr.bf16.mxu0 0
      %626 = vmatmul.mubr.bf16.gmra.mxu0 %v588
      %v627 = vpop.f32.mrf.mxu0
      %v628 = vadd.f32 0.0, %v627
      %v629 = vpop.f32.mrf.mxu0
      %v630 = vpop.f32.mrf.mxu0
      %v631 = vpop.f32.mrf.mxu0
      %632 = vdwg.mxu0
      %s633 = scalar_lea.vmem [#allocation4], 16
      %v634 = vld [vmem:[%s633] sm:$0x1f]
      %636 = vset.pattern.permute.xlu0 0
      %637 = vperm.xlu0 %636, %v564
      %v638 = vpop.permute.xlu0 %637
      %v640 = vmul.f32 %v638, %v634
      %v641 = vadd.f32 %v640, %v628
      %642 = vst.msk [vmem:[%s633] sm:$0x1f] %vm347, %v641
      %643 = vst.msk [vmem:[%s556] sm:$0x1f] %vm285, %v561
      %v644 = vld [vmem:[%s174] sm:$0x7]
      %v645 = vld [vmem:[%s183] sm:$0x7]
      %v646 = vld [vmem:[%s183 + $0x4] sm:$0x7]
      %v648 = vunpack.c.l.b16 %v644
      %v649 = vpack.c.b16 %v648, %v648
      %650 = vrot.lane.b32.xlu0 %v649, 80
      %v651 = vpop.permute.xlu0 %650
      %v653 = vunpack.c.l.b16 %v645
      %v654 = vpack.c.b16 %v653, %v653
      %655 = vrot.lane.b32.xlu0 %v654, 16
      %v656 = vpop.permute.xlu0 %655
      %v658 = vsel %vm215, %v651, 0
      %v661 = vsel %vm215, %v656, 0
      %663 = vmatprep.subr.bf16.mxu0 0
      %664 = vmatpush1.bf16.xpose.msra.mxu0 0
      %665 = vmatprep.subr.bf16.mxu0 0
      %666 = vmatpush1.bf16.xpose.msra.mxu0 0
      %667 = vmatprep.subr.bf16.mxu0 0
      %668 = vmatpush1.bf16.xpose.msra.mxu0 0
      %669 = vmatprep.subr.bf16.mxu0 0
      %670 = vmatpush1.bf16.xpose.msra.mxu0 0
      %671 = vmatprep.subr.bf16.mxu0 0
      %672 = vmatpush1.bf16.xpose.msra.mxu0 0
      %673 = vmatprep.subr.bf16.mxu0 0
      %674 = vmatpush1.bf16.xpose.msra.mxu0 0
      %675 = vmatprep.subr.bf16.mxu0 0
      %676 = vmatpush1.bf16.xpose.msra.mxu0 0
      %677 = vmatprep.subr.bf16.mxu0 0
      %678 = vmatpush1.bf16.xpose.msra.mxu0 %v661
      %679 = vmatprep.subr.bf16.mxu0 0
      %680 = vmatpush2.bf16.xpose.msra.mxu0 0
      %681 = vmatprep.subr.bf16.mxu0 0
      %682 = vmatpush2.bf16.xpose.msra.mxu0 0
      %683 = vmatprep.subr.bf16.mxu0 0
      %684 = vmatpush2.bf16.xpose.msra.mxu0 0
      %685 = vmatprep.subr.bf16.mxu0 0
      %686 = vmatpush2.bf16.xpose.msra.mxu0 0
      %687 = vmatprep.subr.bf16.mxu0 0
      %688 = vmatpush2.bf16.xpose.msra.mxu0 0
      %689 = vmatprep.subr.bf16.mxu0 0
      %690 = vmatpush2.bf16.xpose.msra.mxu0 0
      %691 = vmatprep.subr.bf16.mxu0 0
      %692 = vmatpush2.bf16.xpose.msra.mxu0 0
      %693 = vmatprep.subr.bf16.mxu0 0
      %694 = vmatpush2.bf16.xpose.msra.mxu0 0
      %695 = vmatprep.mubr.bf16.mxu0 0
      %696 = vmatmul.mubr.bf16.gmra.mxu0 %v658
      %v697 = vpop.f32.mrf.mxu0
      %v698 = vadd.f32 0.0, %v697
      %v699 = vpop.f32.mrf.mxu0
      %v700 = vpop.f32.mrf.mxu0
      %v701 = vpop.f32.mrf.mxu0
      %702 = vdwg.mxu0
      %s703 = scalar_lea.vmem [#allocation2], 24
      %v704 = vld [vmem:[%s703] sm:$0x1f]
      %v705 = vsel %vm263, %v698, -inf
      %706 = vmax.xlane.f32.xlu0 %v705
      %v707 = vpop.xlane.xlu0 %706
      %v708 = vmax.f32 %v704, %v707
      %v709 = vsub.f32 %v704, %v708
      %v710 = vmul.f32 %v709, 1.442695
      %v711 = vpow.pop %v710
      %713 = vset.pattern.permute.xlu0 0
      %714 = vperm.xlu0 %713, %v708
      %v715 = vpop.permute.xlu0 %714
      %v717 = vsub.f32 %v698, %v715
      %v718 = vmul.f32 %v717, 1.442695
      %v719 = vpow.pop %v718
      %s720 = scalar_lea.vmem [#allocation3], 24
      %v721 = vld [vmem:[%s720] sm:$0x1f]
      %v722 = vmul.f32 %v711, %v721
      %v723 = vsel %vm263, %v719, 0.0
      %724 = vadd.xlane.f32.xlu0 %v723
      %v725 = vpop.xlane.xlu0 %724
      %v726 = vadd.f32 %v722, %v725
      %727 = vst.msk [vmem:[%s720] sm:$0x1f] %vm285, %v726
      %v728 = vpack.c.bf16 %v719, %v719
      %v730 = vunpack.c.l.b16 %v646
      %v731 = vpack.c.b16 %v730, %v730
      %732 = vrot.lane.b32.xlu0 %v731, 80
      %v733 = vpop.permute.xlu0 %732
      %v735 = vsel %vm288, %v728, 0
      %v738 = vand.u32 %v733, %v295
      %740 = vmatprep.subr.bf16.mxu0 0
      %741 = vmatpush1.bf16.msra.mxu0 0
      %742 = vmatprep.subr.bf16.mxu0 0
      %743 = vmatpush1.bf16.msra.mxu0 0
      %744 = vmatprep.subr.bf16.mxu0 0
      %745 = vmatpush1.bf16.msra.mxu0 0
      %746 = vmatprep.subr.bf16.mxu0 0
      %747 = vmatpush1.bf16.msra.mxu0 0
      %748 = vmatprep.subr.bf16.mxu0 0
      %749 = vmatpush1.bf16.msra.mxu0 0
      %750 = vmatprep.subr.bf16.mxu0 0
      %751 = vmatpush1.bf16.msra.mxu0 0
      %752 = vmatprep.subr.bf16.mxu0 0
      %753 = vmatpush1.bf16.msra.mxu0 0
      %754 = vmatprep.subr.bf16.mxu0 0
      %755 = vmatpush1.bf16.msra.mxu0 %v738
      %756 = vmatprep.subr.bf16.mxu0 0
      %757 = vmatpush2.bf16.msra.mxu0 0
      %758 = vmatprep.subr.bf16.mxu0 0
      %759 = vmatpush2.bf16.msra.mxu0 0
      %760 = vmatprep.subr.bf16.mxu0 0
      %761 = vmatpush2.bf16.msra.mxu0 0
      %762 = vmatprep.subr.bf16.mxu0 0
      %763 = vmatpush2.bf16.msra.mxu0 0
      %764 = vmatprep.subr.bf16.mxu0 0
      %765 = vmatpush2.bf16.msra.mxu0 0
      %766 = vmatprep.subr.bf16.mxu0 0
      %767 = vmatpush2.bf16.msra.mxu0 0
      %768 = vmatprep.subr.bf16.mxu0 0
      %769 = vmatpush2.bf16.msra.mxu0 0
      %770 = vmatprep.subr.bf16.mxu0 0
      %771 = vmatpush2.bf16.msra.mxu0 0
      %772 = vmatprep.mubr.bf16.mxu0 0
      %773 = vmatmul.mubr.bf16.gmra.mxu0 %v735
      %v774 = vpop.f32.mrf.mxu0
      %v775 = vadd.f32 0.0, %v774
      %v776 = vpop.f32.mrf.mxu0
      %v777 = vpop.f32.mrf.mxu0
      %v778 = vpop.f32.mrf.mxu0
      %779 = vdwg.mxu0
      %s780 = scalar_lea.vmem [#allocation4], 24
      %v781 = vld [vmem:[%s780] sm:$0x1f]
      %783 = vset.pattern.permute.xlu0 0
      %784 = vperm.xlu0 %783, %v711
      %v785 = vpop.permute.xlu0 %784
      %v787 = vmul.f32 %v785, %v781
      %v788 = vadd.f32 %v787, %v775
      %789 = vst.msk [vmem:[%s780] sm:$0x1f] %vm347, %v788
      %790 = vst.msk [vmem:[%s703] sm:$0x1f] %vm285, %v708
      // Predicated region
      $region33: #{_lambda_.17} parent=27 // pred_check
        %p791 = pneg %p189
      $region34: #{_lambda_.17} parent=27 // pred_check_branch
        %793 = sbr.rel (%p791) target = $region36
      $region35: #{_lambda_.17} parent=27 // pred_region
        %v794 = vld [vmem:[#allocation3] sm:$0x1f]
        %v795 = vld [vmem:[#allocation3 + $0x8] sm:$0x1f]
        %v796 = vld [vmem:[#allocation3 + $0x10] sm:$0x1f]
        %v797 = vld [vmem:[#allocation3 + $0x18] sm:$0x1f]
        %v798 = vrcp.pop %v794
        %v799 = vrcp.pop %v795
        %v800 = vrcp.pop %v796
        %v801 = vrcp.pop %v797
        %v802 = vld [vmem:[#allocation4] sm:$0x1f]
        %804 = vset.pattern.permute.xlu0 0
        %805 = vperm.xlu0 %804, %v798
        %v806 = vpop.permute.xlu0 %805
        %v808 = vmul.f32 %v802, %v806
        %v809 = vld [vmem:[%s486] sm:$0x1f]
        %811 = vset.pattern.permute.xlu0 0
        %812 = vperm.xlu0 %811, %v799
        %v813 = vpop.permute.xlu0 %812
        %v815 = vmul.f32 %v809, %v813
        %v816 = vld [vmem:[%s633] sm:$0x1f]
        %818 = vset.pattern.permute.xlu0 0
        %819 = vperm.xlu0 %818, %v800
        %v820 = vpop.permute.xlu0 %819
        %v822 = vmul.f32 %v816, %v820
        %v823 = vld [vmem:[%s780] sm:$0x1f]
        %825 = vset.pattern.permute.xlu0 0
        %826 = vperm.xlu0 %825, %v801
        %v827 = vpop.permute.xlu0 %826
        %v829 = vmul.f32 %v823, %v827
        %831 = vrot.lane.b32.xlu0 %v815, 16
        %v832 = vpop.permute.xlu0 %831
        %835 = vrot.lane.b32.xlu0 %v822, 32
        %v836 = vpop.permute.xlu0 %835
        %839 = vrot.lane.b32.xlu0 %v829, 48
        %v840 = vpop.permute.xlu0 %839
        %v842 = vsel %vm215, %v808, %v832
        %vm843 = vcmask 261120
        %v844 = vsel %vm843, %v842, %v836
        %vm845 = vcmask 392192
        %v846 = vsel %vm845, %v844, %v840
        %v847 = vpack.c.bf16 %v846, %v846
        %vm848 = vcmask 518144
        %vm849 = vsmask.f32 2304
        %vm850 = vmand %vm848, %vm849
        %v851 = vld [vmem:[%s187] sm:$0x7]
        %v852 = vsel %vm850, %v847, %v851
        %853 = vst [vmem:[%s187] sm:$0x7] %v852
      $region36: #{_lambda_.17} parent=27 // pred_fallthru
        _
      %p854 = scmp.lt.s32.totalorder %s17, 3
      %s855 = scalar_select %p854, %s17, 3
      %s856 = smul.addr %s855, 4
      %s857 = scalar_lea.vmem %s2, %s856
      // Predicated region
      $region37: #{_lambda_.17} parent=27 // pred_check
        %p858 = pneg %p97
      $region38: #{_lambda_.17} parent=27 // pred_check_branch
        %860 = sbr.rel (%p858) target = $region40
      $region39: #{_lambda_.17} parent=27 // pred_region
        _
      $region40: #{_lambda_.17} parent=27 // pred_fallthru
        _
    $region28: #{_lambda_.17} parent=5 // pred_fallthru
      _
    %p861 = scmp.le.s32.totalorder 2, %s8
    // Predicated region
    $region41: #{_lambda_.17} parent=5 // pred_check
      %p862 = pneg %p861
    $region42: #{_lambda_.17} parent=5 // pred_check_branch
      %864 = sbr.rel (%p862) target = $region44
    $region43: #{_lambda_.17} parent=5 // pred_region
      %s865 = ssub.s32 %s8, 2
      // Predicated region
      $region45: #{_lambda_.17} parent=43 // pred_check
        %p866 = pneg %p103
      $region46: #{_lambda_.17} parent=43 // pred_check_branch
        %868 = sbr.rel (%p866) target = $region48
      $region47: #{_lambda_.17} parent=43 // pred_region
        %p869 = scmp.lt.s32.totalorder %s19, 3
        %s870 = scalar_select %p869, %s19, 3
        %s871 = smul.addr %s870, 4
        %s872 = scalar_lea.vmem %s2, %s871
      $region48: #{_lambda_.17} parent=43 // pred_fallthru
        _
    $region44: #{_lambda_.17} parent=5 // pred_fallthru
      _
  $region6: #{_lambda_.17} parent=0 // loop_footer
    %s12 = sadd.s32 1, %s8
  $region7: #{_lambda_.17} parent=0 // loop_footer_branch
    %7 = sbr.rel target = $region3
  $region8: #{_lambda_.17} parent=0 // loop_exit
    _

// kernel: _lambda_.19
$region0: #{_lambda_.19}
  #allocation0 [shape = 'u32[]', space=smem, size = 0x4, offset = 0x4, fixed_abs, tag = 'smem constant byte address 0x4 - core index']
  #allocation1 [shape = 'u32[144,128]{1,0:T(1,128)}', space=vmem, size = 0x12000, scoped, tag = 'internal scratch']
  %s0 = inlined_call_operand.vmem [shape: f32[20,64], index: 0, kind: input, shape index: {}]
  %s1 = inlined_call_operand.vmem [shape: f32[1,64], index: 1, kind: input, shape index: {}]
  %s2 = inlined_call_operand.vmem [shape: f32[1,64], index: 2, kind: input, shape index: {}]
  %s3 = inlined_call_operand.vmem [shape: bf16[64,256], index: 3, kind: input, shape index: {}]
  %s4 = inlined_call_operand.vmem [shape: f32[1,256], index: 4, kind: input, shape index: {}]
  %s5 = inlined_call_operand.vmem [shape: bf16[20,256], index: 5, kind: output, shape index: {}]
  %s6 = sld [smem:[#allocation0]]
  $region30: #{_lambda_.19} parent=0
    _
  %s8 = ssub.s32 1, %s6
  %s9 = scalar_select 0, %s8, %s6
  // Predicated region
  $region2: #{_lambda_.19} parent=0 // pred_check
    _
  $region3: #{_lambda_.19} parent=0 // pred_check_branch
    %11 = sbr.rel (0) target = $region5
  $region4: #{_lambda_.19} parent=0 // pred_region
    _
  $region5: #{_lambda_.19} parent=0 // pred_fallthru
    _
  // Predicated region
  $region6: #{_lambda_.19} parent=0 // pred_check
    _
  $region7: #{_lambda_.19} parent=0 // pred_check_branch
    %13 = sbr.rel (0) target = $region9
  $region8: #{_lambda_.19} parent=0 // pred_region
    _
  $region9: #{_lambda_.19} parent=0 // pred_fallthru
    _
  // Predicated region
  $region10: #{_lambda_.19} parent=0 // pred_check
    _
  $region11: #{_lambda_.19} parent=0 // pred_check_branch
    %15 = sbr.rel (0) target = $region13
  $region12: #{_lambda_.19} parent=0 // pred_region
    _
  $region13: #{_lambda_.19} parent=0 // pred_fallthru
    _
  // Predicated region
  $region14: #{_lambda_.19} parent=0 // pred_check
    _
  $region15: #{_lambda_.19} parent=0 // pred_check_branch
    %17 = sbr.rel (0) target = $region17
  $region16: #{_lambda_.19} parent=0 // pred_region
    _
  $region17: #{_lambda_.19} parent=0 // pred_fallthru
    _
  // Predicated region
  $region18: #{_lambda_.19} parent=0 // pred_check
    _
  $region19: #{_lambda_.19} parent=0 // pred_check_branch
    %19 = sbr.rel (0) target = $region21
  $region20: #{_lambda_.19} parent=0 // pred_region
    _
  $region21: #{_lambda_.19} parent=0 // pred_fallthru
    _
  %v21 = vld [vmem:[%s0] sm:$0xff]
  %v22 = vld [vmem:[%s0 + $0x8] sm:$0xff]
  %v23 = vld [vmem:[%s0 + $0x10] sm:$0xf]
  %vm24 = vcmask 523264
  %v25 = vsel %vm24, %v21, 0.0
  %26 = vadd.xlane.f32.xlu0 %v25
  %v27 = vpop.xlane.xlu0 %26
  %v28 = vsel %vm24, %v22, 0.0
  %29 = vadd.xlane.f32.xlu0 %v28
  %v30 = vpop.xlane.xlu0 %29
  %vm31 = vcmask 519168
  %v32 = vsel %vm31, %v23, 0.0
  %33 = vadd.xlane.f32.xlu0 %v32
  %v34 = vpop.xlane.xlu0 %33
  %v35 = vrcp.pop 64.0
  %v36 = vmul.f32 %v27, %v35
  %v37 = vmul.f32 %v30, %v35
  %v38 = vmul.f32 %v34, %v35
  %v39 = vsub.f32 %v21, %v36
  %v40 = vsub.f32 %v22, %v37
  %v41 = vsub.f32 %v23, %v38
  %v42 = vmul.f32 %v39, %v39
  %v43 = vmul.f32 %v40, %v40
  %v44 = vmul.f32 %v41, %v41
  %v45 = vsel %vm24, %v42, 0.0
  %46 = vadd.xlane.f32.xlu0 %v45
  %v47 = vpop.xlane.xlu0 %46
  %v48 = vsel %vm24, %v43, 0.0
  %49 = vadd.xlane.f32.xlu0 %v48
  %v50 = vpop.xlane.xlu0 %49
  %v51 = vsel %vm31, %v44, 0.0
  %52 = vadd.xlane.f32.xlu0 %v51
  %v53 = vpop.xlane.xlu0 %52
  %v54 = vmul.f32 %v47, %v35
  %v55 = vmul.f32 %v50, %v35
  %v56 = vmul.f32 %v53, %v35
  %v57 = vadd.f32 %v54, 1e-05
  %v58 = vadd.f32 %v55, 1e-05
  %v59 = vadd.f32 %v56, 1e-05
  %v60 = vrsqrt.pop %v57
  %v61 = vrsqrt.pop %v58
  %v62 = vrsqrt.pop %v59
  %v63 = vmul.f32 %v39, %v60
  %v64 = vmul.f32 %v40, %v61
  %v65 = vmul.f32 %v41, %v62
  %v66 = vld [vmem:[%s1] sm:$0x1]
  %v68 = vlaneseq
  %v69 = vshrl.u32 %v68, 7
  %v70 = vsub.s32 0, %v69
  %v71 = vrot.slane %v66, %v70
  %v73 = vmul.f32 %v63, %v71
  %v74 = vmul.f32 %v64, %v71
  %v75 = vmul.f32 %v65, %v71
  %v76 = vld [vmem:[%s2] sm:$0x1]
  %v78 = vlaneseq
  %v79 = vshrl.u32 %v78, 7
  %v80 = vsub.s32 0, %v79
  %v81 = vrot.slane %v76, %v80
  %v83 = vadd.f32 %v73, %v81
  %v84 = vadd.f32 %v74, %v81
  %v85 = vadd.f32 %v75, %v81
  %v86 = vpack.c.bf16 %v84, %v83
  %v87 = vpack.c.bf16 %v85, %v85
  %v88 = vld [vmem:[%s3] sm:$0xff]
  %v89 = vld [vmem:[%s3 + $0x8] sm:$0xff]
  %v90 = vld [vmem:[%s3 + $0x10] sm:$0xff]
  %v91 = vld [vmem:[%s3 + $0x18] sm:$0xff]
  %v92 = vld [vmem:[%s3 + $0x20] sm:$0xff]
  %v93 = vld [vmem:[%s3 + $0x28] sm:$0xff]
  %v94 = vld [vmem:[%s3 + $0x30] sm:$0xff]
  %v95 = vld [vmem:[%s3 + $0x38] sm:$0xff]
  %v96 = vld [vmem:[%s4] sm:$0x3]
  %v98 = vlaneseq
  %v99 = vshrl.u32 %v98, 7
  %v100 = vsub.s32 0, %v99
  %v101 = vrot.slane %v96, %v100
  %v102 = vlaneseq
  %v103 = vshrl.u32 %v102, 7
  %v104 = vsub.s32 1, %v103
  %v105 = vrot.slane %v96, %v104
  %v116 = vunpack.c.l.b16 %v88
  %v117 = vunpack.c.h.b16 %v88
  %v118 = vunpack.c.l.b16 %v89
  %v119 = vunpack.c.h.b16 %v89
  %v120 = vunpack.c.l.b16 %v90
  %v121 = vunpack.c.h.b16 %v90
  %v122 = vunpack.c.l.b16 %v91
  %v123 = vunpack.c.h.b16 %v91
  %v124 = vunpack.c.l.b16 %v92
  %v125 = vunpack.c.h.b16 %v92
  %v126 = vunpack.c.l.b16 %v93
  %v127 = vunpack.c.h.b16 %v93
  %v128 = vunpack.c.l.b16 %v94
  %v129 = vunpack.c.h.b16 %v94
  %v130 = vunpack.c.l.b16 %v95
  %v131 = vunpack.c.h.b16 %v95
  %v132 = vpack.c.b16 %v118, %v116
  %v133 = vpack.c.b16 %v119, %v117
  %v134 = vpack.c.b16 %v122, %v120
  %v135 = vpack.c.b16 %v123, %v121
  %v136 = vpack.c.b16 %v126, %v124
  %v137 = vpack.c.b16 %v127, %v125
  %v138 = vpack.c.b16 %v130, %v128
  %v139 = vpack.c.b16 %v131, %v129
  %v149 = vsel %vm24, %v86, 0
  %v152 = vsel %vm24, %v87, 0
  %154 = vmatprep.subr.bf16.mxu0 0
  %155 = vmatpush1.bf16.msra.mxu0 0
  %156 = vmatprep.subr.bf16.mxu0 0
  %157 = vmatpush1.bf16.msra.mxu0 0
  %158 = vmatprep.subr.bf16.mxu0 0
  %159 = vmatpush1.bf16.msra.mxu0 0
  %160 = vmatprep.subr.bf16.mxu0 0
  %161 = vmatpush1.bf16.msra.mxu0 0
  %162 = vmatprep.subr.bf16.mxu0 %v139
  %163 = vmatpush1.bf16.msra.mxu0 %v138
  %164 = vmatprep.subr.bf16.mxu0 %v137
  %165 = vmatpush1.bf16.msra.mxu0 %v136
  %166 = vmatprep.subr.bf16.mxu0 %v135
  %167 = vmatpush1.bf16.msra.mxu0 %v134
  %168 = vmatprep.subr.bf16.mxu0 %v133
  %169 = vmatpush1.bf16.msra.mxu0 %v132
  %170 = vmatprep.subr.bf16.mxu0 0
  %171 = vmatpush2.bf16.msra.mxu0 0
  %172 = vmatprep.subr.bf16.mxu0 0
  %173 = vmatpush2.bf16.msra.mxu0 0
  %174 = vmatprep.subr.bf16.mxu0 0
  %175 = vmatpush2.bf16.msra.mxu0 0
  %176 = vmatprep.subr.bf16.mxu0 0
  %177 = vmatpush2.bf16.msra.mxu0 0
  %178 = vmatprep.subr.bf16.mxu0 0
  %179 = vmatpush2.bf16.msra.mxu0 0
  %180 = vmatprep.subr.bf16.mxu0 0
  %181 = vmatpush2.bf16.msra.mxu0 0
  %182 = vmatprep.subr.bf16.mxu0 0
  %183 = vmatpush2.bf16.msra.mxu0 0
  %184 = vmatprep.subr.bf16.mxu0 0
  %185 = vmatpush2.bf16.msra.mxu0 0
  %186 = vmatprep.mubr.bf16.mxu0 0
  %187 = vmatmul.mubr.bf16.gmra.mxu0 %v149
  %v188 = vpop.f32.mrf.mxu0
  %v189 = vadd.f32 %v101, %v188
  %v190 = vpop.f32.mrf.mxu0
  %v191 = vadd.f32 %v105, %v190
  %v192 = vpop.f32.mrf.mxu0
  %v193 = vadd.f32 %v101, %v192
  %v194 = vpop.f32.mrf.mxu0
  %v195 = vadd.f32 %v105, %v194
  %196 = vmatprep.mubr.bf16.mxu0 0
  %197 = vmatmul.mubr.bf16.gmra.mxu0 %v152
  %v198 = vpop.f32.mrf.mxu0
  %v199 = vadd.f32 %v101, %v198
  %v200 = vpop.f32.mrf.mxu0
  %v201 = vadd.f32 %v105, %v200
  %v202 = vpop.f32.mrf.mxu0
  %v203 = vpop.f32.mrf.mxu0
  %204 = vdwg.mxu0
  %v205 = vmul.f32 %v189, 1.702
  %v206 = vmul.f32 %v191, 1.702
  %v207 = vmul.f32 %v193, 1.702
  %v208 = vmul.f32 %v195, 1.702
  %v209 = vmul.f32 %v199, 1.702
  %v210 = vmul.f32 %v201, 1.702
  %v211 = vxor.u32 %v205, 2147483648
  %v212 = vxor.u32 %v206, 2147483648
  %v213 = vxor.u32 %v207, 2147483648
  %v214 = vxor.u32 %v208, 2147483648
  %v215 = vxor.u32 %v209, 2147483648
  %v216 = vxor.u32 %v210, 2147483648
  %v217 = vmul.f32 %v211, 1.442695
  %v218 = vpow.pop %v217
  %v219 = vmul.f32 %v212, 1.442695
  %v220 = vpow.pop %v219
  %v221 = vmul.f32 %v213, 1.442695
  %v222 = vpow.pop %v221
  %v223 = vmul.f32 %v214, 1.442695
  %v224 = vpow.pop %v223
  %v225 = vmul.f32 %v215, 1.442695
  %v226 = vpow.pop %v225
  %v227 = vmul.f32 %v216, 1.442695
  %v228 = vpow.pop %v227
  %v229 = vadd.f32 %v218, 1.0
  %v230 = vadd.f32 %v220, 1.0
  %v231 = vadd.f32 %v222, 1.0
  %v232 = vadd.f32 %v224, 1.0
  %v233 = vadd.f32 %v226, 1.0
  %v234 = vadd.f32 %v228, 1.0
  %v235 = vrcp.pop %v229
  %v236 = vmul.f32 1.0, %v235
  %v237 = vrcp.pop %v230
  %v238 = vmul.f32 1.0, %v237
  %v239 = vrcp.pop %v231
  %v240 = vmul.f32 1.0, %v239
  %v241 = vrcp.pop %v232
  %v242 = vmul.f32 1.0, %v241
  %v243 = vrcp.pop %v233
  %v244 = vmul.f32 1.0, %v243
  %v245 = vrcp.pop %v234
  %v246 = vmul.f32 1.0, %v245
  %v247 = vmul.f32 %v189, %v236
  %v248 = vmul.f32 %v191, %v238
  %v249 = vmul.f32 %v193, %v240
  %v250 = vmul.f32 %v195, %v242
  %v251 = vmul.f32 %v199, %v244
  %v252 = vmul.f32 %v201, %v246
  %v253 = vpack.c.bf16 %v249, %v247
  %v254 = vpack.c.bf16 %v250, %v248
  %v255 = vpack.c.bf16 %v251, %v251
  %v256 = vpack.c.bf16 %v252, %v252
  %v261 = vunpack.c.l.b16 %v253
  %v262 = vunpack.c.l.b16 %v254
  %v263 = vunpack.c.h.b16 %v253
  %v264 = vunpack.c.h.b16 %v254
  %v265 = vunpack.c.l.b16 %v255
  %v266 = vunpack.c.l.b16 %v256
  %v267 = vpack.c.b16 %v262, %v261
  %v268 = vpack.c.b16 %v264, %v263
  %v269 = vpack.c.b16 %v266, %v265
  %273 = vst [vmem:[%s5] sm:$0xff] %v267
  %274 = vst [vmem:[%s5 + $0x8] sm:$0xff] %v268
  %275 = vst [vmem:[%s5 + $0x10] sm:$0x33] %v269
  // Predicated region
  $region22: #{_lambda_.19} parent=0 // pred_check
    _
  $region23: #{_lambda_.19} parent=0 // pred_check_branch
    %277 = sbr.rel (0) target = $region25
  $region24: #{_lambda_.19} parent=0 // pred_region
    _
  $region25: #{_lambda_.19} parent=0 // pred_fallthru
    _
  // Predicated region
  $region26: #{_lambda_.19} parent=0 // pred_check
    _
  $region27: #{_lambda_.19} parent=0 // pred_check_branch
    %279 = sbr.rel (0) target = $region29
  $region28: #{_lambda_.19} parent=0 // pred_region
    _
  $region29: #{_lambda_.19} parent=0 // pred_fallthru
    _

// kernel: _lambda_.20
$region0: #{_lambda_.20}
  #allocation0 [shape = 'u32[]', space=smem, size = 0x4, offset = 0x4, fixed_abs, tag = 'smem constant byte address 0x4 - core index']
  #allocation1 [shape = 'u32[144,128]{1,0:T(1,128)}', space=vmem, size = 0x12000, scoped, tag = 'internal scratch']
  #allocation2 [shape = 'f32[20,64]{1,0:T(8,128)}', space=vmem, size = 0x3000, scoped, tag = 'scratch operand']
  %s0 = inlined_call_operand.vmem [shape: bf16[20,256], index: 0, kind: input, shape index: {}]
  %s1 = inlined_call_operand.vmem [shape: bf16[256,64], index: 1, kind: input, shape index: {}]
  %s2 = inlined_call_operand.vmem [shape: f32[1,64], index: 2, kind: input, shape index: {}]
  %s3 = inlined_call_operand.vmem [shape: f32[20,64], index: 3, kind: input, shape index: {}]
  %s4 = inlined_call_operand.vmem [shape: f32[20,64], index: 4, kind: output, shape index: {}]
  %s5 = sld [smem:[#allocation0]]
  $region34: #{_lambda_.20} parent=0
    _
  %s7 = ssub.s32 1, %s5
  %s8 = scalar_select 0, %s7, %s5
  // Predicated region
  $region2: #{_lambda_.20} parent=0 // pred_check
    _
  $region3: #{_lambda_.20} parent=0 // pred_check_branch
    %10 = sbr.rel (0) target = $region5
  $region4: #{_lambda_.20} parent=0 // pred_region
    _
  $region5: #{_lambda_.20} parent=0 // pred_fallthru
    _
  // Predicated region
  $region6: #{_lambda_.20} parent=0 // pred_check
    _
  $region7: #{_lambda_.20} parent=0 // pred_check_branch
    %12 = sbr.rel (0) target = $region9
  $region8: #{_lambda_.20} parent=0 // pred_region
    _
  $region9: #{_lambda_.20} parent=0 // pred_fallthru
    _
  // Predicated region
  $region10: #{_lambda_.20} parent=0 // pred_check
    _
  $region11: #{_lambda_.20} parent=0 // pred_check_branch
    %14 = sbr.rel (0) target = $region13
  $region12: #{_lambda_.20} parent=0 // pred_region
    _
  $region13: #{_lambda_.20} parent=0 // pred_fallthru
    _
  // Predicated region
  $region14: #{_lambda_.20} parent=0 // pred_check
    _
  $region15: #{_lambda_.20} parent=0 // pred_check_branch
    %16 = sbr.rel (0) target = $region17
  $region16: #{_lambda_.20} parent=0 // pred_region
    _
  $region17: #{_lambda_.20} parent=0 // pred_fallthru
    _
  %p18 = scmp.eq.s32.totalorder 0, 0
  // Predicated region
  $region18: #{_lambda_.20} parent=0 // pred_check
    %p19 = pneg %p18
  $region19: #{_lambda_.20} parent=0 // pred_check_branch
    %21 = sbr.rel (%p19) target = $region21
  $region20: #{_lambda_.20} parent=0 // pred_region
    %vm22 = vcmask 523264
    %23 = vst.msk [vmem:[#allocation2] sm:$0xff] %vm22, 0.0
    %24 = vst.msk [vmem:[#allocation2 + $0x8] sm:$0xff] %vm22, 0.0
    %vm25 = vcmask 519168
    %26 = vst.msk [vmem:[#allocation2 + $0x10] sm:$0xf] %vm25, 0.0
  $region21: #{_lambda_.20} parent=0 // pred_fallthru
    _
  %v27 = vld [vmem:[#allocation2] sm:$0xff]
  %v28 = vld [vmem:[#allocation2 + $0x8] sm:$0xff]
  %v29 = vld [vmem:[#allocation2 + $0x10] sm:$0xf]
  %v30 = vld [vmem:[%s0] sm:$0xff]
  %v31 = vld [vmem:[%s0 + $0x8] sm:$0xff]
  %v32 = vld [vmem:[%s0 + $0x10] sm:$0x33]
  %v33 = vld [vmem:[%s1] sm:$0xf]
  %v34 = vld [vmem:[%s1 + $0x4] sm:$0xf]
  %v35 = vld [vmem:[%s1 + $0x8] sm:$0xf]
  %v36 = vld [vmem:[%s1 + $0xc] sm:$0xf]
  %v37 = vld [vmem:[%s1 + $0x10] sm:$0xf]
  %v38 = vld [vmem:[%s1 + $0x14] sm:$0xf]
  %v39 = vld [vmem:[%s1 + $0x18] sm:$0xf]
  %v40 = vld [vmem:[%s1 + $0x1c] sm:$0xf]
  %v41 = vld [vmem:[%s1 + $0x20] sm:$0xf]
  %v42 = vld [vmem:[%s1 + $0x24] sm:$0xf]
  %v43 = vld [vmem:[%s1 + $0x28] sm:$0xf]
  %v44 = vld [vmem:[%s1 + $0x2c] sm:$0xf]
  %v45 = vld [vmem:[%s1 + $0x30] sm:$0xf]
  %v46 = vld [vmem:[%s1 + $0x34] sm:$0xf]
  %v47 = vld [vmem:[%s1 + $0x38] sm:$0xf]
  %v48 = vld [vmem:[%s1 + $0x3c] sm:$0xf]
  %v49 = vld [vmem:[%s1 + $0x40] sm:$0xf]
  %v50 = vld [vmem:[%s1 + $0x44] sm:$0xf]
  %v51 = vld [vmem:[%s1 + $0x48] sm:$0xf]
  %v52 = vld [vmem:[%s1 + $0x4c] sm:$0xf]
  %v53 = vld [vmem:[%s1 + $0x50] sm:$0xf]
  %v54 = vld [vmem:[%s1 + $0x54] sm:$0xf]
  %v55 = vld [vmem:[%s1 + $0x58] sm:$0xf]
  %v56 = vld [vmem:[%s1 + $0x5c] sm:$0xf]
  %v57 = vld [vmem:[%s1 + $0x60] sm:$0xf]
  %v58 = vld [vmem:[%s1 + $0x64] sm:$0xf]
  %v59 = vld [vmem:[%s1 + $0x68] sm:$0xf]
  %v60 = vld [vmem:[%s1 + $0x6c] sm:$0xf]
  %v61 = vld [vmem:[%s1 + $0x70] sm:$0xf]
  %v62 = vld [vmem:[%s1 + $0x74] sm:$0xf]
  %v63 = vld [vmem:[%s1 + $0x78] sm:$0xf]
  %v64 = vld [vmem:[%s1 + $0x7c] sm:$0xf]
  %v68 = vunpack.c.l.b16 %v30
  %v69 = vunpack.c.h.b16 %v30
  %v70 = vunpack.c.l.b16 %v31
  %v71 = vunpack.c.h.b16 %v31
  %v72 = vunpack.c.l.b16 %v32
  %v73 = vunpack.c.h.b16 %v32
  %v74 = vpack.c.b16 %v70, %v68
  %v75 = vpack.c.b16 %v71, %v69
  %v76 = vpack.c.b16 %v72, %v72
  %v77 = vpack.c.b16 %v73, %v73
  %v114 = vunpack.c.l.b16 %v33
  %v115 = vunpack.c.l.b16 %v34
  %v116 = vunpack.c.l.b16 %v35
  %v117 = vunpack.c.l.b16 %v36
  %v118 = vunpack.c.l.b16 %v37
  %v119 = vunpack.c.l.b16 %v38
  %v120 = vunpack.c.l.b16 %v39
  %v121 = vunpack.c.l.b16 %v40
  %v122 = vunpack.c.l.b16 %v41
  %v123 = vunpack.c.l.b16 %v42
  %v124 = vunpack.c.l.b16 %v43
  %v125 = vunpack.c.l.b16 %v44
  %v126 = vunpack.c.l.b16 %v45
  %v127 = vunpack.c.l.b16 %v46
  %v128 = vunpack.c.l.b16 %v47
  %v129 = vunpack.c.l.b16 %v48
  %v130 = vunpack.c.l.b16 %v49
  %v131 = vunpack.c.l.b16 %v50
  %v132 = vunpack.c.l.b16 %v51
  %v133 = vunpack.c.l.b16 %v52
  %v134 = vunpack.c.l.b16 %v53
  %v135 = vunpack.c.l.b16 %v54
  %v136 = vunpack.c.l.b16 %v55
  %v137 = vunpack.c.l.b16 %v56
  %v138 = vunpack.c.l.b16 %v57
  %v139 = vunpack.c.l.b16 %v58
  %v140 = vunpack.c.l.b16 %v59
  %v141 = vunpack.c.l.b16 %v60
  %v142 = vunpack.c.l.b16 %v61
  %v143 = vunpack.c.l.b16 %v62
  %v144 = vunpack.c.l.b16 %v63
  %v145 = vunpack.c.l.b16 %v64
  %v146 = vpack.c.b16 %v115, %v114
  %v147 = vpack.c.b16 %v117, %v116
  %v148 = vpack.c.b16 %v119, %v118
  %v149 = vpack.c.b16 %v121, %v120
  %v150 = vpack.c.b16 %v123, %v122
  %v151 = vpack.c.b16 %v125, %v124
  %v152 = vpack.c.b16 %v127, %v126
  %v153 = vpack.c.b16 %v129, %v128
  %v154 = vpack.c.b16 %v131, %v130
  %v155 = vpack.c.b16 %v133, %v132
  %v156 = vpack.c.b16 %v135, %v134
  %v157 = vpack.c.b16 %v137, %v136
  %v158 = vpack.c.b16 %v139, %v138
  %v159 = vpack.c.b16 %v141, %v140
  %v160 = vpack.c.b16 %v143, %v142
  %v161 = vpack.c.b16 %v145, %v144
  %178 = vmatprep.subr.bf16.mxu0 0
  %179 = vmatpush1.bf16.msra.mxu0 %v153
  %180 = vmatprep.subr.bf16.mxu0 0
  %181 = vmatpush1.bf16.msra.mxu0 %v152
  %182 = vmatprep.subr.bf16.mxu0 0
  %183 = vmatpush1.bf16.msra.mxu0 %v151
  %184 = vmatprep.subr.bf16.mxu0 0
  %185 = vmatpush1.bf16.msra.mxu0 %v150
  %186 = vmatprep.subr.bf16.mxu0 0
  %187 = vmatpush1.bf16.msra.mxu0 %v149
  %188 = vmatprep.subr.bf16.mxu0 0
  %189 = vmatpush1.bf16.msra.mxu0 %v148
  %190 = vmatprep.subr.bf16.mxu0 0
  %191 = vmatpush1.bf16.msra.mxu0 %v147
  %192 = vmatprep.subr.bf16.mxu0 0
  %193 = vmatpush1.bf16.msra.mxu0 %v146
  %194 = vmatprep.subr.bf16.mxu0 0
  %195 = vmatpush2.bf16.msra.mxu0 %v161
  %196 = vmatprep.subr.bf16.mxu0 0
  %197 = vmatpush2.bf16.msra.mxu0 %v160
  %198 = vmatprep.subr.bf16.mxu0 0
  %199 = vmatpush2.bf16.msra.mxu0 %v159
  %200 = vmatprep.subr.bf16.mxu0 0
  %201 = vmatpush2.bf16.msra.mxu0 %v158
  %202 = vmatprep.subr.bf16.mxu0 0
  %203 = vmatpush2.bf16.msra.mxu0 %v157
  %204 = vmatprep.subr.bf16.mxu0 0
  %205 = vmatpush2.bf16.msra.mxu0 %v156
  %206 = vmatprep.subr.bf16.mxu0 0
  %207 = vmatpush2.bf16.msra.mxu0 %v155
  %208 = vmatprep.subr.bf16.mxu0 0
  %209 = vmatpush2.bf16.msra.mxu0 %v154
  %210 = vmatprep.mubr.bf16.mxu0 %v75
  %211 = vmatmul.mubr.bf16.gmra.mxu0 %v74
  %v212 = vpop.f32.mrf.mxu0
  %v213 = vadd.f32 0.0, %v212
  %v214 = vpop.f32.mrf.mxu0
  %v215 = vpop.f32.mrf.mxu0
  %v216 = vadd.f32 0.0, %v215
  %v217 = vpop.f32.mrf.mxu0
  %218 = vmatprep.mubr.bf16.mxu0 %v77
  %219 = vmatmul.mubr.bf16.gmra.mxu0 %v76
  %v220 = vpop.f32.mrf.mxu0
  %v221 = vadd.f32 0.0, %v220
  %v222 = vpop.f32.mrf.mxu0
  %v223 = vpop.f32.mrf.mxu0
  %v224 = vpop.f32.mrf.mxu0
  %225 = vdwg.mxu0
  %v226 = vadd.f32 %v27, %v213
  %v227 = vadd.f32 %v28, %v216
  %v228 = vadd.f32 %v29, %v221
  %vm229 = vcmask 523264
  %230 = vst.msk [vmem:[#allocation2] sm:$0xff] %vm229, %v226
  %231 = vst.msk [vmem:[#allocation2 + $0x8] sm:$0xff] %vm229, %v227
  %vm232 = vcmask 519168
  %233 = vst.msk [vmem:[#allocation2 + $0x10] sm:$0xf] %vm232, %v228
  // Predicated region
  $region22: #{_lambda_.20} parent=0 // pred_check
    %p234 = pneg %p18
  $region23: #{_lambda_.20} parent=0 // pred_check_branch
    %236 = sbr.rel (%p234) target = $region25
  $region24: #{_lambda_.20} parent=0 // pred_region
    %v237 = vld [vmem:[#allocation2] sm:$0xff]
    %v238 = vld [vmem:[#allocation2 + $0x8] sm:$0xff]
    %v239 = vld [vmem:[#allocation2 + $0x10] sm:$0xf]
    %v240 = vld [vmem:[%s2] sm:$0x1]
    %v242 = vlaneseq
    %v243 = vshrl.u32 %v242, 7
    %v244 = vsub.s32 0, %v243
    %v245 = vrot.slane %v240, %v244
    %v247 = vadd.f32 %v237, %v245
    %v248 = vadd.f32 %v238, %v245
    %v249 = vadd.f32 %v239, %v245
    %v250 = vld [vmem:[%s3] sm:$0xff]
    %v251 = vld [vmem:[%s3 + $0x8] sm:$0xff]
    %v252 = vld [vmem:[%s3 + $0x10] sm:$0xf]
    %v253 = vadd.f32 %v247, %v250
    %v254 = vadd.f32 %v248, %v251
    %v255 = vadd.f32 %v249, %v252
    %256 = vst.msk [vmem:[%s4] sm:$0xff] %vm229, %v253
    %257 = vst.msk [vmem:[%s4 + $0x8] sm:$0xff] %vm229, %v254
    %258 = vst.msk [vmem:[%s4 + $0x10] sm:$0xf] %vm232, %v255
  $region25: #{_lambda_.20} parent=0 // pred_fallthru
    _
  // Predicated region
  $region26: #{_lambda_.20} parent=0 // pred_check
    _
  $region27: #{_lambda_.20} parent=0 // pred_check_branch
    %260 = sbr.rel (0) target = $region29
  $region28: #{_lambda_.20} parent=0 // pred_region
    _
  $region29: #{_lambda_.20} parent=0 // pred_fallthru
    _
  // Predicated region
  $region30: #{_lambda_.20} parent=0 // pred_check
    _
  $region31: #{_lambda_.20} parent=0 // pred_check_branch
    %262 = sbr.rel (0) target = $region33
  $region32: #{_lambda_.20} parent=0 // pred_region
    _
  $region33: #{_lambda_.20} parent=0 // pred_fallthru
    _

// kernel: _lambda_.21
$region0: #{_lambda_.21}
  #allocation0 [shape = 'u32[]', space=smem, size = 0x4, offset = 0x4, fixed_abs, tag = 'smem constant byte address 0x4 - core index']
  #allocation1 [shape = 'u32[144,128]{1,0:T(1,128)}', space=vmem, size = 0x12000, scoped, tag = 'internal scratch']
  #allocation2 [shape = 'f32[16,128]{1,0:T(8,128)}', space=vmem, size = 0x2000, scoped, tag = 'scratch operand']
  %s0 = inlined_call_operand.vmem [shape: f32[16,64], index: 0, kind: input, shape index: {}]
  %s1 = inlined_call_operand.vmem [shape: bf16[64,128], index: 1, kind: input, shape index: {}]
  %s2 = inlined_call_operand.vmem [shape: f32[1,128], index: 2, kind: input, shape index: {}]
  %s3 = inlined_call_operand.vmem [shape: bf16[16,128], index: 3, kind: output, shape index: {}]
  %s4 = sld [smem:[#allocation0]]
  $region30: #{_lambda_.21} parent=0
    _
  %s6 = ssub.s32 1, %s4
  %s7 = scalar_select 0, %s6, %s4
  // Predicated region
  $region2: #{_lambda_.21} parent=0 // pred_check
    _
  $region3: #{_lambda_.21} parent=0 // pred_check_branch
    %9 = sbr.rel (0) target = $region5
  $region4: #{_lambda_.21} parent=0 // pred_region
    _
  $region5: #{_lambda_.21} parent=0 // pred_fallthru
    _
  // Predicated region
  $region6: #{_lambda_.21} parent=0 // pred_check
    _
  $region7: #{_lambda_.21} parent=0 // pred_check_branch
    %11 = sbr.rel (0) target = $region9
  $region8: #{_lambda_.21} parent=0 // pred_region
    _
  $region9: #{_lambda_.21} parent=0 // pred_fallthru
    _
  // Predicated region
  $region10: #{_lambda_.21} parent=0 // pred_check
    _
  $region11: #{_lambda_.21} parent=0 // pred_check_branch
    %13 = sbr.rel (0) target = $region13
  $region12: #{_lambda_.21} parent=0 // pred_region
    _
  $region13: #{_lambda_.21} parent=0 // pred_fallthru
    _
  %p15 = scmp.eq.s32.totalorder 0, 0
  // Predicated region
  $region14: #{_lambda_.21} parent=0 // pred_check
    %p16 = pneg %p15
  $region15: #{_lambda_.21} parent=0 // pred_check_branch
    %18 = sbr.rel (%p16) target = $region17
  $region16: #{_lambda_.21} parent=0 // pred_region
    %19 = vst [vmem:[#allocation2] sm:$0xff] 0.0
    %20 = vst [vmem:[#allocation2 + $0x8] sm:$0xff] 0.0
  $region17: #{_lambda_.21} parent=0 // pred_fallthru
    _
  %v21 = vld [vmem:[#allocation2] sm:$0xff]
  %v22 = vld [vmem:[#allocation2 + $0x8] sm:$0xff]
  %v23 = vld [vmem:[%s0] sm:$0xff]
  %v24 = vld [vmem:[%s0 + $0x8] sm:$0xff]
  %v25 = vpack.c.bf16 %v24, %v23
  %v26 = vld [vmem:[%s1] sm:$0xf]
  %v27 = vld [vmem:[%s1 + $0x4] sm:$0xf]
  %v28 = vld [vmem:[%s1 + $0x8] sm:$0xf]
  %v29 = vld [vmem:[%s1 + $0xc] sm:$0xf]
  %v30 = vld [vmem:[%s1 + $0x10] sm:$0xf]
  %v31 = vld [vmem:[%s1 + $0x14] sm:$0xf]
  %v32 = vld [vmem:[%s1 + $0x18] sm:$0xf]
  %v33 = vld [vmem:[%s1 + $0x1c] sm:$0xf]
  %v42 = vunpack.c.l.b16 %v26
  %v43 = vunpack.c.l.b16 %v27
  %v44 = vunpack.c.l.b16 %v28
  %v45 = vunpack.c.l.b16 %v29
  %v46 = vunpack.c.l.b16 %v30
  %v47 = vunpack.c.l.b16 %v31
  %v48 = vunpack.c.l.b16 %v32
  %v49 = vunpack.c.l.b16 %v33
  %v50 = vpack.c.b16 %v43, %v42
  %v51 = vpack.c.b16 %v45, %v44
  %v52 = vpack.c.b16 %v47, %v46
  %v53 = vpack.c.b16 %v49, %v48
  %vm58 = vcmask 523264
  %v60 = vsel %vm58, %v25, 0
  %62 = vmatprep.subr.bf16.mxu0 0
  %63 = vmatpush1.bf16.msra.mxu0 0
  %64 = vmatprep.subr.bf16.mxu0 0
  %65 = vmatpush1.bf16.msra.mxu0 0
  %66 = vmatprep.subr.bf16.mxu0 0
  %67 = vmatpush1.bf16.msra.mxu0 0
  %68 = vmatprep.subr.bf16.mxu0 0
  %69 = vmatpush1.bf16.msra.mxu0 0
  %70 = vmatprep.subr.bf16.mxu0 0
  %71 = vmatpush1.bf16.msra.mxu0 %v53
  %72 = vmatprep.subr.bf16.mxu0 0
  %73 = vmatpush1.bf16.msra.mxu0 %v52
  %74 = vmatprep.subr.bf16.mxu0 0
  %75 = vmatpush1.bf16.msra.mxu0 %v51
  %76 = vmatprep.subr.bf16.mxu0 0
  %77 = vmatpush1.bf16.msra.mxu0 %v50
  %78 = vmatprep.subr.bf16.mxu0 0
  %79 = vmatpush2.bf16.msra.mxu0 0
  %80 = vmatprep.subr.bf16.mxu0 0
  %81 = vmatpush2.bf16.msra.mxu0 0
  %82 = vmatprep.subr.bf16.mxu0 0
  %83 = vmatpush2.bf16.msra.mxu0 0
  %84 = vmatprep.subr.bf16.mxu0 0
  %85 = vmatpush2.bf16.msra.mxu0 0
  %86 = vmatprep.subr.bf16.mxu0 0
  %87 = vmatpush2.bf16.msra.mxu0 0
  %88 = vmatprep.subr.bf16.mxu0 0
  %89 = vmatpush2.bf16.msra.mxu0 0
  %90 = vmatprep.subr.bf16.mxu0 0
  %91 = vmatpush2.bf16.msra.mxu0 0
  %92 = vmatprep.subr.bf16.mxu0 0
  %93 = vmatpush2.bf16.msra.mxu0 0
  %94 = vmatprep.mubr.bf16.mxu0 0
  %95 = vmatmul.mubr.bf16.gmra.mxu0 %v60
  %v96 = vpop.f32.mrf.mxu0
  %v97 = vadd.f32 0.0, %v96
  %v98 = vpop.f32.mrf.mxu0
  %v99 = vpop.f32.mrf.mxu0
  %v100 = vadd.f32 0.0, %v99
  %v101 = vpop.f32.mrf.mxu0
  %102 = vdwg.mxu0
  %v103 = vadd.f32 %v21, %v97
  %v104 = vadd.f32 %v22, %v100
  %105 = vst [vmem:[#allocation2] sm:$0xff] %v103
  %106 = vst [vmem:[#allocation2 + $0x8] sm:$0xff] %v104
  // Predicated region
  $region18: #{_lambda_.21} parent=0 // pred_check
    %p107 = pneg %p15
  $region19: #{_lambda_.21} parent=0 // pred_check_branch
    %109 = sbr.rel (%p107) target = $region21
  $region20: #{_lambda_.21} parent=0 // pred_region
    %v110 = vld [vmem:[#allocation2] sm:$0xff]
    %v111 = vld [vmem:[#allocation2 + $0x8] sm:$0xff]
    %v112 = vld [vmem:[%s2] sm:$0x1]
    %v114 = vlaneseq
    %v115 = vshrl.u32 %v114, 7
    %v116 = vsub.s32 0, %v115
    %v117 = vrot.slane %v112, %v116
    %v119 = vadd.f32 %v110, %v117
    %v120 = vadd.f32 %v111, %v117
    %v121 = vpack.c.bf16 %v120, %v119
    %v123 = vunpack.c.l.b16 %v121
    %v124 = vunpack.c.h.b16 %v121
    %v125 = vpack.c.b16 %v123, %v123
    %v126 = vpack.c.b16 %v124, %v124
    %129 = vst [vmem:[%s3] sm:$0xf] %v125
    %130 = vst [vmem:[%s3 + $0x4] sm:$0xf] %v126
  $region21: #{_lambda_.21} parent=0 // pred_fallthru
    _
  // Predicated region
  $region22: #{_lambda_.21} parent=0 // pred_check
    _
  $region23: #{_lambda_.21} parent=0 // pred_check_branch
    %132 = sbr.rel (0) target = $region25
  $region24: #{_lambda_.21} parent=0 // pred_region
    _
  $region25: #{_lambda_.21} parent=0 // pred_fallthru
    _
  // Predicated region
  $region26: #{_lambda_.21} parent=0 // pred_check
    _
  $region27: #{_lambda_.21} parent=0 // pred_check_branch
    %134 = sbr.rel (0) target = $region29
  $region28: #{_lambda_.21} parent=0 // pred_region
    _
  $region29: #{_lambda_.21} parent=0 // pred_fallthru
    _

// kernel: _lambda_.22
$region0: #{_lambda_.22}
  #allocation0 [shape = 'u32[]', space=smem, size = 0x4, offset = 0x4, fixed_abs, tag = 'smem constant byte address 0x4 - core index']
  #allocation1 [shape = 'u32[144,128]{1,0:T(1,128)}', space=vmem, size = 0x12000, scoped, tag = 'internal scratch']
  #allocation2 [shape = 'f32[16,64]{1,0:T(8,128)}', space=vmem, size = 0x2000, scoped, tag = 'scratch operand']
  %s0 = inlined_call_operand.vmem [shape: f32[16,128], index: 0, kind: input, shape index: {}]
  %s1 = inlined_call_operand.vmem [shape: bf16[128,64], index: 1, kind: input, shape index: {}]
  %s2 = inlined_call_operand.vmem [shape: f32[1,64], index: 2, kind: input, shape index: {}]
  %s3 = inlined_call_operand.vmem [shape: f32[16,64], index: 3, kind: input, shape index: {}]
  %s4 = inlined_call_operand.vmem [shape: f32[16,64], index: 4, kind: output, shape index: {}]
  %s5 = sld [smem:[#allocation0]]
  $region34: #{_lambda_.22} parent=0
    _
  %s7 = ssub.s32 1, %s5
  %s8 = scalar_select 0, %s7, %s5
  // Predicated region
  $region2: #{_lambda_.22} parent=0 // pred_check
    _
  $region3: #{_lambda_.22} parent=0 // pred_check_branch
    %10 = sbr.rel (0) target = $region5
  $region4: #{_lambda_.22} parent=0 // pred_region
    _
  $region5: #{_lambda_.22} parent=0 // pred_fallthru
    _
  // Predicated region
  $region6: #{_lambda_.22} parent=0 // pred_check
    _
  $region7: #{_lambda_.22} parent=0 // pred_check_branch
    %12 = sbr.rel (0) target = $region9
  $region8: #{_lambda_.22} parent=0 // pred_region
    _
  $region9: #{_lambda_.22} parent=0 // pred_fallthru
    _
  // Predicated region
  $region10: #{_lambda_.22} parent=0 // pred_check
    _
  $region11: #{_lambda_.22} parent=0 // pred_check_branch
    %14 = sbr.rel (0) target = $region13
  $region12: #{_lambda_.22} parent=0 // pred_region
    _
  $region13: #{_lambda_.22} parent=0 // pred_fallthru
    _
  // Predicated region
  $region14: #{_lambda_.22} parent=0 // pred_check
    _
  $region15: #{_lambda_.22} parent=0 // pred_check_branch
    %16 = sbr.rel (0) target = $region17
  $region16: #{_lambda_.22} parent=0 // pred_region
    _
  $region17: #{_lambda_.22} parent=0 // pred_fallthru
    _
  %p18 = scmp.eq.s32.totalorder 0, 0
  // Predicated region
  $region18: #{_lambda_.22} parent=0 // pred_check
    %p19 = pneg %p18
  $region19: #{_lambda_.22} parent=0 // pred_check_branch
    %21 = sbr.rel (%p19) target = $region21
  $region20: #{_lambda_.22} parent=0 // pred_region
    %vm22 = vcmask 523264
    %23 = vst.msk [vmem:[#allocation2] sm:$0xff] %vm22, 0.0
    %24 = vst.msk [vmem:[#allocation2 + $0x8] sm:$0xff] %vm22, 0.0
  $region21: #{_lambda_.22} parent=0 // pred_fallthru
    _
  %v25 = vld [vmem:[#allocation2] sm:$0xff]
  %v26 = vld [vmem:[#allocation2 + $0x8] sm:$0xff]
  %v27 = vld [vmem:[%s0] sm:$0xff]
  %v28 = vld [vmem:[%s0 + $0x8] sm:$0xff]
  %v29 = vpack.c.bf16 %v28, %v27
  %v30 = vld [vmem:[%s1] sm:$0xf]
  %v31 = vld [vmem:[%s1 + $0x4] sm:$0xf]
  %v32 = vld [vmem:[%s1 + $0x8] sm:$0xf]
  %v33 = vld [vmem:[%s1 + $0xc] sm:$0xf]
  %v34 = vld [vmem:[%s1 + $0x10] sm:$0xf]
  %v35 = vld [vmem:[%s1 + $0x14] sm:$0xf]
  %v36 = vld [vmem:[%s1 + $0x18] sm:$0xf]
  %v37 = vld [vmem:[%s1 + $0x1c] sm:$0xf]
  %v38 = vld [vmem:[%s1 + $0x20] sm:$0xf]
  %v39 = vld [vmem:[%s1 + $0x24] sm:$0xf]
  %v40 = vld [vmem:[%s1 + $0x28] sm:$0xf]
  %v41 = vld [vmem:[%s1 + $0x2c] sm:$0xf]
  %v42 = vld [vmem:[%s1 + $0x30] sm:$0xf]
  %v43 = vld [vmem:[%s1 + $0x34] sm:$0xf]
  %v44 = vld [vmem:[%s1 + $0x38] sm:$0xf]
  %v45 = vld [vmem:[%s1 + $0x3c] sm:$0xf]
  %v62 = vunpack.c.l.b16 %v30
  %v63 = vunpack.c.l.b16 %v31
  %v64 = vunpack.c.l.b16 %v32
  %v65 = vunpack.c.l.b16 %v33
  %v66 = vunpack.c.l.b16 %v34
  %v67 = vunpack.c.l.b16 %v35
  %v68 = vunpack.c.l.b16 %v36
  %v69 = vunpack.c.l.b16 %v37
  %v70 = vunpack.c.l.b16 %v38
  %v71 = vunpack.c.l.b16 %v39
  %v72 = vunpack.c.l.b16 %v40
  %v73 = vunpack.c.l.b16 %v41
  %v74 = vunpack.c.l.b16 %v42
  %v75 = vunpack.c.l.b16 %v43
  %v76 = vunpack.c.l.b16 %v44
  %v77 = vunpack.c.l.b16 %v45
  %v78 = vpack.c.b16 %v63, %v62
  %v79 = vpack.c.b16 %v65, %v64
  %v80 = vpack.c.b16 %v67, %v66
  %v81 = vpack.c.b16 %v69, %v68
  %v82 = vpack.c.b16 %v71, %v70
  %v83 = vpack.c.b16 %v73, %v72
  %v84 = vpack.c.b16 %v75, %v74
  %v85 = vpack.c.b16 %v77, %v76
  %94 = vmatprep.subr.bf16.mxu0 0
  %95 = vmatpush1.bf16.msra.mxu0 %v85
  %96 = vmatprep.subr.bf16.mxu0 0
  %97 = vmatpush1.bf16.msra.mxu0 %v84
  %98 = vmatprep.subr.bf16.mxu0 0
  %99 = vmatpush1.bf16.msra.mxu0 %v83
  %100 = vmatprep.subr.bf16.mxu0 0
  %101 = vmatpush1.bf16.msra.mxu0 %v82
  %102 = vmatprep.subr.bf16.mxu0 0
  %103 = vmatpush1.bf16.msra.mxu0 %v81
  %104 = vmatprep.subr.bf16.mxu0 0
  %105 = vmatpush1.bf16.msra.mxu0 %v80
  %106 = vmatprep.subr.bf16.mxu0 0
  %107 = vmatpush1.bf16.msra.mxu0 %v79
  %108 = vmatprep.subr.bf16.mxu0 0
  %109 = vmatpush1.bf16.msra.mxu0 %v78
  %110 = vmatprep.subr.bf16.mxu0 0
  %111 = vmatpush2.bf16.msra.mxu0 0
  %112 = vmatprep.subr.bf16.mxu0 0
  %113 = vmatpush2.bf16.msra.mxu0 0
  %114 = vmatprep.subr.bf16.mxu0 0
  %115 = vmatpush2.bf16.msra.mxu0 0
  %116 = vmatprep.subr.bf16.mxu0 0
  %117 = vmatpush2.bf16.msra.mxu0 0
  %118 = vmatprep.subr.bf16.mxu0 0
  %119 = vmatpush2.bf16.msra.mxu0 0
  %120 = vmatprep.subr.bf16.mxu0 0
  %121 = vmatpush2.bf16.msra.mxu0 0
  %122 = vmatprep.subr.bf16.mxu0 0
  %123 = vmatpush2.bf16.msra.mxu0 0
  %124 = vmatprep.subr.bf16.mxu0 0
  %125 = vmatpush2.bf16.msra.mxu0 0
  %126 = vmatprep.mubr.bf16.mxu0 0
  %127 = vmatmul.mubr.bf16.gmra.mxu0 %v29
  %v128 = vpop.f32.mrf.mxu0
  %v129 = vadd.f32 0.0, %v128
  %v130 = vpop.f32.mrf.mxu0
  %v131 = vpop.f32.mrf.mxu0
  %v132 = vadd.f32 0.0, %v131
  %v133 = vpop.f32.mrf.mxu0
  %134 = vdwg.mxu0
  %v135 = vadd.f32 %v25, %v129
  %v136 = vadd.f32 %v26, %v132
  %vm137 = vcmask 523264
  %138 = vst.msk [vmem:[#allocation2] sm:$0xff] %vm137, %v135
  %139 = vst.msk [vmem:[#allocation2 + $0x8] sm:$0xff] %vm137, %v136
  // Predicated region
  $region22: #{_lambda_.22} parent=0 // pred_check
    %p140 = pneg %p18
  $region23: #{_lambda_.22} parent=0 // pred_check_branch
    %142 = sbr.rel (%p140) target = $region25
  $region24: #{_lambda_.22} parent=0 // pred_region
    %v143 = vld [vmem:[#allocation2] sm:$0xff]
    %v144 = vld [vmem:[#allocation2 + $0x8] sm:$0xff]
    %v145 = vld [vmem:[%s2] sm:$0x1]
    %v147 = vlaneseq
    %v148 = vshrl.u32 %v147, 7
    %v149 = vsub.s32 0, %v148
    %v150 = vrot.slane %v145, %v149
    %v152 = vadd.f32 %v143, %v150
    %v153 = vadd.f32 %v144, %v150
    %v154 = vld [vmem:[%s3] sm:$0xff]
    %v155 = vld [vmem:[%s3 + $0x8] sm:$0xff]
    %v156 = vadd.f32 %v152, %v154
    %v157 = vadd.f32 %v153, %v155
    %158 = vst.msk [vmem:[%s4] sm:$0xff] %vm137, %v156
    %159 = vst.msk [vmem:[%s4 + $0x8] sm:$0xff] %vm137, %v157
  $region25: #{_lambda_.22} parent=0 // pred_fallthru
    _
  // Predicated region
  $region26: #{_lambda_.22} parent=0 // pred_check
    _
  $region27: #{_lambda_.22} parent=0 // pred_check_branch
    %161 = sbr.rel (0) target = $region29
  $region28: #{_lambda_.22} parent=0 // pred_region
    _
  $region29: #{_lambda_.22} parent=0 // pred_fallthru
    _
  // Predicated region
  $region30: #{_lambda_.22} parent=0 // pred_check
    _
  $region31: #{_lambda_.22} parent=0 // pred_check_branch
    %163 = sbr.rel (0) target = $region33
  $region32: #{_lambda_.22} parent=0 // pred_region
    _
  $region33: #{_lambda_.22} parent=0 // pred_fallthru
    _

</llo_original>
